<compile_context>
chip_gen: v5e
topology: v5e:2x2
jax: 0.10.0
libtpu: 0.0.40
codegen_flags: <defaults>
</compile_context>

<pallas_src>
import functools

import jax
import jax.numpy as jnp
from jax.experimental import pallas as pl
from jax.experimental.pallas import tpu as pltpu

EPS = 1e-5  # nn.LayerNorm default eps


# ----------------------------- in-kernel math helpers -----------------------------

def _layer_norm(x, gamma, beta):
    # One-pass statistics: a single pair of lane reductions (sum, sum-of-squares).
    n = x.shape[-1]
    inv_n = 1.0 / n
    s = jnp.sum(x, axis=-1, keepdims=True)
    sq = jnp.sum(x * x, axis=-1, keepdims=True)
    mu = s * inv_n
    var = sq * inv_n - mu * mu
    return (x - mu) * jax.lax.rsqrt(var + EPS) * gamma + beta


def _erf(x):
    # Abramowitz & Stegun 7.1.26 rational approximation (|err| < 1.5e-7).
    p = 0.3275911
    a1, a2, a3, a4, a5 = 0.254829592, -0.284496736, 1.421413741, -1.453152027, 1.061405429
    s = jnp.where(x >= 0.0, 1.0, -1.0)
    z = jnp.abs(x)
    t = 1.0 / (1.0 + p * z)
    poly = ((((a5 * t + a4) * t + a3) * t + a2) * t + a1) * t
    return s * (1.0 - poly * jnp.exp(-z * z))


def _gelu_exact(x):
    return 0.5 * x * (1.0 + _erf(x * 0.7071067811865476))


def _sigmoid(x):
    # Explicit exp-based form (EUP exp + divide) — guaranteed Mosaic lowering.
    return 1.0 / (1.0 + jnp.exp(-x))


# ----------------------------------- fused kernel ----------------------------------

def fused_encoder_kernel(n_heads, n_layers,
                         x_ref, pw_ref, pb_ref, pg_ref, pbeta_ref, cls_ref,
                         wqkv_ref, bqkv_ref, wo_ref, bo_ref,
                         ln1g_ref, ln1b_ref, ln2g_ref, ln2b_ref,
                         w1_ref, b1_ref, w2_ref, b2_ref,
                         o_ref):
    B = x_ref.shape[0]
    D = pw_ref.shape[1]
    hd = D // n_heads
    scale = 1.0 / (hd ** 0.5)

    # ---- input_projection: Linear -> LayerNorm -> (Dropout = identity) ----
    h = jnp.dot(x_ref[...], pw_ref[...], preferred_element_type=jnp.float32) + pb_ref[...]
    h = _layer_norm(h, pg_ref[...], pbeta_ref[...])

    # ---- flat token stream (2B, D): rows [0:B] = CLS, rows [B:2B] = data token ----
    cls = jnp.broadcast_to(cls_ref[...], (B, D))
    t = jnp.concatenate([cls, h], axis=0)                      # (2B, D)

    # ---- n_layers x nn.TransformerEncoderLayer (norm_first=True, gelu) ----
    for l in range(n_layers):                                  # static unroll over layers
        # --- pre-norm multi-head self-attention:  t = t + Wo(attn) + bo ---
        xn = _layer_norm(t, ln1g_ref[l], ln1b_ref[l])
        qkv = jnp.dot(xn, wqkv_ref[l],
                      preferred_element_type=jnp.float32) + bqkv_ref[l]   # (2B, 3D)
        q, k, v = qkv[:, 0:D], qkv[:, D:2 * D], qkv[:, 2 * D:3 * D]
        qc, qd = q[0:B, :], q[B:2 * B, :]
        kc, kd = k[0:B, :], k[B:2 * B, :]
        vc, vd = v[0:B, :], v[B:2 * B, :]

        outs_c = []
        outs_d = []
        for hh in range(n_heads):                              # static unroll; VPU/XLU only
            sl = slice(hh * hd, (hh + 1) * hd)
            qc_h, qd_h = qc[:, sl], qd[:, sl]
            kc_h, kd_h = kc[:, sl], kd[:, sl]
            vc_h, vd_h = vc[:, sl], vd[:, sl]
            s_cc = jnp.sum(qc_h * kc_h, axis=-1, keepdims=True) * scale   # (B, 1)
            s_cd = jnp.sum(qc_h * kd_h, axis=-1, keepdims=True) * scale
            s_dc = jnp.sum(qd_h * kc_h, axis=-1, keepdims=True) * scale
            s_dd = jnp.sum(qd_h * kd_h, axis=-1, keepdims=True) * scale
            # softmax over 2 keys == sigmoid of the logit difference (exact)
            a_c = _sigmoid(s_cc - s_cd)                        # P(key=CLS | query=CLS)
            a_d = _sigmoid(s_dc - s_dd)                        # P(key=CLS | query=data)
            outs_c.append(a_c * vc_h + (1.0 - a_c) * vd_h)     # (B, hd)
            outs_d.append(a_d * vc_h + (1.0 - a_d) * vd_h)
        attn = jnp.concatenate(
            [jnp.concatenate(outs_c, axis=-1),
             jnp.concatenate(outs_d, axis=-1)], axis=0)        # (2B, D)
        t = t + jnp.dot(attn, wo_ref[l],
                        preferred_element_type=jnp.float32) + bo_ref[l]

        # --- pre-norm feed-forward:  t = t + W2(gelu(W1(LN2(t)))) ---
        xn = _layer_norm(t, ln2g_ref[l], ln2b_ref[l])
        h1 = jnp.dot(xn, w1_ref[l], preferred_element_type=jnp.float32) + b1_ref[l]
        h1 = _gelu_exact(h1)
        t = t + jnp.dot(h1, w2_ref[l], preferred_element_type=jnp.float32) + b2_ref[l]

    # single full lane-dense store; (B, 2, D) view is produced in the wrapper
    o_ref[...] = t


# ------------------------------------ wrappers --------------------------------------

def _vmem_spec():
    return pl.BlockSpec(memory_space=pltpu.MemorySpace.VMEM)


@functools.partial(jax.jit, static_argnames=('n_heads', 'n_layers'))
def modality_specific_encoder(x, packed, *, n_heads, n_layers):
    """ModalitySpecificEncoder.forward, use_cls_token=True, eval mode."""
    B = x.shape[0]
    D = packed['proj_w'].shape[1]
    out2d = pl.pallas_call(
        functools.partial(fused_encoder_kernel, n_heads, n_layers),
        out_shape=jax.ShapeDtypeStruct((2 * B, D), jnp.float32),
        in_specs=[_vmem_spec() for _ in range(18)],
        out_specs=_vmem_spec(),
        compiler_params=pltpu.CompilerParams(vmem_limit_bytes=32 * 1024 * 1024),
    )(x,
      packed['proj_w'], packed['proj_b'], packed['ln_g'], packed['ln_b'], packed['cls'],
      packed['wqkv'], packed['bqkv'], packed['wo'], packed['bo'],
      packed['ln1_g'], packed['ln1_b'], packed['ln2_g'], packed['ln2_b'],
      packed['w1'], packed['b1'], packed['w2'], packed['b2'])
    # rows [0:B] = CLS, rows [B:2B] = data token  ->  (B, 2, D) with seq 0 = CLS
    return jnp.transpose(out2d.reshape(2, B, D), (1, 0, 2))


def pack_params(params):
    """Stack per-layer weights along a leading layer axis; fuse Wq/Wk/Wv."""
    packed = {k: params[k] for k in ('proj_w', 'proj_b', 'ln_g', 'ln_b', 'cls')}
    layers = params['layers']
    packed['wqkv'] = jnp.stack(
        [jnp.concatenate([lp['wq'], lp['wk'], lp['wv']], axis=1) for lp in layers])
    packed['bqkv'] = jnp.stack(
        [jnp.concatenate([lp['bq'], lp['bk'], lp['bv']], axis=1) for lp in layers])
    for name in ('wo', 'bo', 'ln1_g', 'ln1_b', 'ln2_g', 'ln2_b', 'w1', 'b1', 'w2', 'b2'):
        packed[name] = jnp.stack([lp[name] for lp in layers])
    return packed


# ------------------------------ params & pure-JAX reference -------------------------

def init_params(key, input_dim, d_model, n_heads, n_layers):
    del n_heads
    n_keys = 6 + n_layers * 12
    keys = iter(jax.random.split(key, n_keys))

    def w(shape, scale=0.02):
        return (scale * jax.random.normal(next(keys), shape)).astype(jnp.float32)

    params = {
        'proj_w': w((input_dim, d_model)),
        'proj_b': w((1, d_model)),
        'ln_g': jnp.ones((1, d_model), jnp.float32),
        'ln_b': jnp.zeros((1, d_model), jnp.float32),
        'cls': w((1, d_model), scale=1.0),       # torch.randn(1, 1, d_model)
        'layers': [],
    }
    ff = 4 * d_model
    for _ in range(n_layers):
        lp = {
            'wq': w((d_model, d_model)), 'bq': w((1, d_model)),
            'wk': w((d_model, d_model)), 'bk': w((1, d_model)),
            'wv': w((d_model, d_model)), 'bv': w((1, d_model)),
            'wo': w((d_model, d_model)), 'bo': w((1, d_model)),
            'ln1_g': jnp.ones((1, d_model), jnp.float32),
            'ln1_b': jnp.zeros((1, d_model), jnp.float32),
            'ln2_g': jnp.ones((1, d_model), jnp.float32),
            'ln2_b': jnp.zeros((1, d_model), jnp.float32),
            'w1': w((d_model, ff)), 'b1': w((1, ff)),
            'w2': w((ff, d_model)), 'b2': w((1, d_model)),
        }
        params['layers'].append(lp)
    return params


def _ln_ref(x, g, b):
    mu = x.mean(-1, keepdims=True)
    var = ((x - mu) ** 2).mean(-1, keepdims=True)
    return (x - mu) / jnp.sqrt(var + EPS) * g + b


def reference_forward(x, params, n_heads):
    h = _ln_ref(x @ params['proj_w'] + params['proj_b'], params['ln_g'], params['ln_b'])
    B, D = h.shape
    hd = D // n_heads
    t = jnp.concatenate([jnp.broadcast_to(params['cls'][None], (B, 1, D)),
                         h[:, None, :]], axis=1)
    S = t.shape[1]
    for lp in params['layers']:
        xn = _ln_ref(t, lp['ln1_g'], lp['ln1_b'])
        q = (xn @ lp['wq'] + lp['bq']).reshape(B, S, n_heads, hd).transpose(0, 2, 1, 3)
        k = (xn @ lp['wk'] + lp['bk']).reshape(B, S, n_heads, hd).transpose(0, 2, 1, 3)
        v = (xn @ lp['wv'] + lp['bv']).reshape(B, S, n_heads, hd).transpose(0, 2, 1, 3)
        a = jax.nn.softmax(q @ k.transpose(0, 1, 3, 2) / jnp.sqrt(hd), axis=-1)
        o = (a @ v).transpose(0, 2, 1, 3).reshape(B, S, D)
        t = t + (o @ lp['wo'] + lp['bo'])
        xn = _ln_ref(t, lp['ln2_g'], lp['ln2_b'])
        t = t + (jax.nn.gelu(xn @ lp['w1'] + lp['b1'], approximate=False) @ lp['w2'] + lp['b2'])
    return t


# -------------------------------------- main ----------------------------------------

if __name__ == "__main__":
    B, input_dim, d_model, n_heads, n_layers = 2, 32, 128, 4, 2

    key = jax.random.PRNGKey(0)
    kx, kp = jax.random.split(key)
    x = jax.random.normal(kx, (B, input_dim), dtype=jnp.float32)
    params = init_params(kp, input_dim, d_model, n_heads, n_layers)
    packed = pack_params(params)   # done once, outside the jitted forward

    out = modality_specific_encoder(x, packed, n_heads=n_heads, n_layers=n_layers)
    out = jax.block_until_ready(out)

    ref = reference_forward(x, params, n_heads)
    assert out.shape == (B, 2, d_model), out.shape
    max_err = float(jnp.max(jnp.abs(out - ref)))
    assert jnp.allclose(out, ref, atol=1e-3, rtol=1e-3), max_err

    print("KERNEL_OK")
</pallas_src>

<mosaic_0001>
module attributes {stable_mosaic.version = 11 : i64} {
  func.func @fused_encoder_kernel(%arg0: memref<2x32xf32, #tpu.memory_space<vmem>>, %arg1: memref<32x128xf32, #tpu.memory_space<vmem>>, %arg2: memref<1x128xf32, #tpu.memory_space<vmem>>, %arg3: memref<1x128xf32, #tpu.memory_space<vmem>>, %arg4: memref<1x128xf32, #tpu.memory_space<vmem>>, %arg5: memref<1x128xf32, #tpu.memory_space<vmem>>, %arg6: memref<2x128x384xf32, #tpu.memory_space<vmem>>, %arg7: memref<2x1x384xf32, #tpu.memory_space<vmem>>, %arg8: memref<2x128x128xf32, #tpu.memory_space<vmem>>, %arg9: memref<2x1x128xf32, #tpu.memory_space<vmem>>, %arg10: memref<2x1x128xf32, #tpu.memory_space<vmem>>, %arg11: memref<2x1x128xf32, #tpu.memory_space<vmem>>, %arg12: memref<2x1x128xf32, #tpu.memory_space<vmem>>, %arg13: memref<2x1x128xf32, #tpu.memory_space<vmem>>, %arg14: memref<2x128x512xf32, #tpu.memory_space<vmem>>, %arg15: memref<2x1x512xf32, #tpu.memory_space<vmem>>, %arg16: memref<2x512x128xf32, #tpu.memory_space<vmem>>, %arg17: memref<2x1x128xf32, #tpu.memory_space<vmem>>, %arg18: memref<4x128xf32, #tpu.memory_space<vmem>>) attributes {dimension_semantics = [], scalar_prefetch = 0 : i64, scratch_operands = 0 : i64, tpu.core_type = #tpu.core_type<tc>} {
    %c0 = arith.constant 0 : index
    %c0_0 = arith.constant 0 : index
    %0 = vector.load %arg0[%c0, %c0_0] : memref<2x32xf32, #tpu.memory_space<vmem>>, vector<2x32xf32>
    %c0_1 = arith.constant 0 : index
    %c0_2 = arith.constant 0 : index
    %1 = vector.load %arg1[%c0_1, %c0_2] : memref<32x128xf32, #tpu.memory_space<vmem>>, vector<32x128xf32>
    %cst = arith.constant dense<0.000000e+00> : vector<2x128xf32>
    %2 = tpu.matmul %0, %1, %cst {dimension_numbers = #tpu.dot_dimension_numbers<[1], [0], [0], [1], [0, 0, 1, 1], [], []>} : vector<2x32xf32>, vector<32x128xf32>, vector<2x128xf32> -> vector<2x128xf32>
    %c0_3 = arith.constant 0 : index
    %c0_4 = arith.constant 0 : index
    %3 = vector.load %arg2[%c0_3, %c0_4] : memref<1x128xf32, #tpu.memory_space<vmem>>, vector<1x128xf32>
    %4 = vector.broadcast %3 : vector<1x128xf32> to vector<2x128xf32>
    %5 = arith.addf %2, %4 : vector<2x128xf32>
    %c0_5 = arith.constant 0 : index
    %c0_6 = arith.constant 0 : index
    %6 = vector.load %arg3[%c0_5, %c0_6] : memref<1x128xf32, #tpu.memory_space<vmem>>, vector<1x128xf32>
    %c0_7 = arith.constant 0 : index
    %c0_8 = arith.constant 0 : index
    %7 = vector.load %arg4[%c0_7, %c0_8] : memref<1x128xf32, #tpu.memory_space<vmem>>, vector<1x128xf32>
    %cst_9 = arith.constant dense<0.000000e+00> : vector<2xf32>
    %8 = vector.multi_reduction <add>, %5, %cst_9 [1] : vector<2x128xf32> to vector<2xf32>
    %9 = vector.shape_cast %8 : vector<2xf32> to vector<2x1xf32>
    %10 = arith.mulf %5, %5 : vector<2x128xf32>
    %cst_10 = arith.constant dense<0.000000e+00> : vector<2xf32>
    %11 = vector.multi_reduction <add>, %10, %cst_10 [1] : vector<2x128xf32> to vector<2xf32>
    %12 = vector.shape_cast %11 : vector<2xf32> to vector<2x1xf32>
    %cst_11 = arith.constant 7.812500e-03 : f32
    %13 = vector.broadcast %cst_11 : f32 to vector<2x1xf32>
    %14 = arith.mulf %9, %13 : vector<2x1xf32>
    %cst_12 = arith.constant 7.812500e-03 : f32
    %15 = vector.broadcast %cst_12 : f32 to vector<2x1xf32>
    %16 = arith.mulf %12, %15 : vector<2x1xf32>
    %17 = arith.mulf %14, %14 : vector<2x1xf32>
    %18 = arith.subf %16, %17 : vector<2x1xf32>
    %19 = vector.broadcast %14 : vector<2x1xf32> to vector<2x128xf32>
    %20 = arith.subf %5, %19 : vector<2x128xf32>
    %cst_13 = arith.constant 9.99999974E-6 : f32
    %21 = vector.broadcast %cst_13 : f32 to vector<2x1xf32>
    %22 = arith.addf %18, %21 : vector<2x1xf32>
    %23 = math.rsqrt %22 : vector<2x1xf32>
    %24 = vector.broadcast %23 : vector<2x1xf32> to vector<2x128xf32>
    %25 = arith.mulf %20, %24 : vector<2x128xf32>
    %26 = vector.broadcast %6 : vector<1x128xf32> to vector<2x128xf32>
    %27 = arith.mulf %25, %26 : vector<2x128xf32>
    %28 = vector.broadcast %7 : vector<1x128xf32> to vector<2x128xf32>
    %29 = arith.addf %27, %28 : vector<2x128xf32>
    %c0_14 = arith.constant 0 : index
    %c0_15 = arith.constant 0 : index
    %30 = vector.load %arg5[%c0_14, %c0_15] : memref<1x128xf32, #tpu.memory_space<vmem>>, vector<1x128xf32>
    %31 = vector.shape_cast %30 : vector<1x128xf32> to vector<1x128xf32>
    %32 = vector.broadcast %31 : vector<1x128xf32> to vector<2x128xf32>
    %33 = tpu.concatenate %32, %29 in 0 : vector<2x128xf32>, vector<2x128xf32> -> vector<4x128xf32>
    %c0_16 = arith.constant 0 : index
    %c0_17 = arith.constant 0 : index
    %c0_18 = arith.constant 0 : index
    %34 = vector.load %arg10[%c0_16, %c0_17, %c0_18] : memref<2x1x128xf32, #tpu.memory_space<vmem>>, vector<1x1x128xf32>
    %35 = vector.shape_cast %34 : vector<1x1x128xf32> to vector<1x128xf32>
    %c0_19 = arith.constant 0 : index
    %c0_20 = arith.constant 0 : index
    %c0_21 = arith.constant 0 : index
    %36 = vector.load %arg11[%c0_19, %c0_20, %c0_21] : memref<2x1x128xf32, #tpu.memory_space<vmem>>, vector<1x1x128xf32>
    %37 = vector.shape_cast %36 : vector<1x1x128xf32> to vector<1x128xf32>
    %cst_22 = arith.constant dense<0.000000e+00> : vector<4xf32>
    %38 = vector.multi_reduction <add>, %33, %cst_22 [1] : vector<4x128xf32> to vector<4xf32>
    %39 = vector.shape_cast %38 : vector<4xf32> to vector<4x1xf32>
    %40 = arith.mulf %33, %33 : vector<4x128xf32>
    %cst_23 = arith.constant dense<0.000000e+00> : vector<4xf32>
    %41 = vector.multi_reduction <add>, %40, %cst_23 [1] : vector<4x128xf32> to vector<4xf32>
    %42 = vector.shape_cast %41 : vector<4xf32> to vector<4x1xf32>
    %cst_24 = arith.constant 7.812500e-03 : f32
    %43 = vector.broadcast %cst_24 : f32 to vector<4x1xf32>
    %44 = arith.mulf %39, %43 : vector<4x1xf32>
    %cst_25 = arith.constant 7.812500e-03 : f32
    %45 = vector.broadcast %cst_25 : f32 to vector<4x1xf32>
    %46 = arith.mulf %42, %45 : vector<4x1xf32>
    %47 = arith.mulf %44, %44 : vector<4x1xf32>
    %48 = arith.subf %46, %47 : vector<4x1xf32>
    %49 = vector.broadcast %44 : vector<4x1xf32> to vector<4x128xf32>
    %50 = arith.subf %33, %49 : vector<4x128xf32>
    %cst_26 = arith.constant 9.99999974E-6 : f32
    %51 = vector.broadcast %cst_26 : f32 to vector<4x1xf32>
    %52 = arith.addf %48, %51 : vector<4x1xf32>
    %53 = math.rsqrt %52 : vector<4x1xf32>
    %54 = vector.broadcast %53 : vector<4x1xf32> to vector<4x128xf32>
    %55 = arith.mulf %50, %54 : vector<4x128xf32>
    %56 = vector.broadcast %35 : vector<1x128xf32> to vector<4x128xf32>
    %57 = arith.mulf %55, %56 : vector<4x128xf32>
    %58 = vector.broadcast %37 : vector<1x128xf32> to vector<4x128xf32>
    %59 = arith.addf %57, %58 : vector<4x128xf32>
    %c0_27 = arith.constant 0 : index
    %c0_28 = arith.constant 0 : index
    %c0_29 = arith.constant 0 : index
    %60 = vector.load %arg6[%c0_27, %c0_28, %c0_29] : memref<2x128x384xf32, #tpu.memory_space<vmem>>, vector<1x128x384xf32>
    %61 = vector.shape_cast %60 : vector<1x128x384xf32> to vector<128x384xf32>
    %cst_30 = arith.constant dense<0.000000e+00> : vector<4x384xf32>
    %62 = tpu.matmul %59, %61, %cst_30 {dimension_numbers = #tpu.dot_dimension_numbers<[1], [0], [0], [1], [0, 0, 1, 1], [], []>} : vector<4x128xf32>, vector<128x384xf32>, vector<4x384xf32> -> vector<4x384xf32>
    %c0_31 = arith.constant 0 : index
    %c0_32 = arith.constant 0 : index
    %c0_33 = arith.constant 0 : index
    %63 = vector.load %arg7[%c0_31, %c0_32, %c0_33] : memref<2x1x384xf32, #tpu.memory_space<vmem>>, vector<1x1x384xf32>
    %64 = vector.shape_cast %63 : vector<1x1x384xf32> to vector<1x384xf32>
    %65 = vector.broadcast %64 : vector<1x384xf32> to vector<4x384xf32>
    %66 = arith.addf %62, %65 : vector<4x384xf32>
    %67 = vector.extract_strided_slice %66 {offsets = [0, 0], sizes = [4, 128], strides = [1, 1]} : vector<4x384xf32> to vector<4x128xf32>
    %68 = vector.extract_strided_slice %66 {offsets = [0, 128], sizes = [4, 128], strides = [1, 1]} : vector<4x384xf32> to vector<4x128xf32>
    %69 = vector.extract_strided_slice %66 {offsets = [0, 256], sizes = [4, 128], strides = [1, 1]} : vector<4x384xf32> to vector<4x128xf32>
    %70 = vector.extract_strided_slice %67 {offsets = [0, 0], sizes = [2, 128], strides = [1, 1]} : vector<4x128xf32> to vector<2x128xf32>
    %71 = vector.extract_strided_slice %67 {offsets = [2, 0], sizes = [2, 128], strides = [1, 1]} : vector<4x128xf32> to vector<2x128xf32>
    %72 = vector.extract_strided_slice %68 {offsets = [0, 0], sizes = [2, 128], strides = [1, 1]} : vector<4x128xf32> to vector<2x128xf32>
    %73 = vector.extract_strided_slice %68 {offsets = [2, 0], sizes = [2, 128], strides = [1, 1]} : vector<4x128xf32> to vector<2x128xf32>
    %74 = vector.extract_strided_slice %69 {offsets = [0, 0], sizes = [2, 128], strides = [1, 1]} : vector<4x128xf32> to vector<2x128xf32>
    %75 = vector.extract_strided_slice %69 {offsets = [2, 0], sizes = [2, 128], strides = [1, 1]} : vector<4x128xf32> to vector<2x128xf32>
    %76 = vector.extract_strided_slice %70 {offsets = [0, 0], sizes = [2, 32], strides = [1, 1]} : vector<2x128xf32> to vector<2x32xf32>
    %77 = vector.extract_strided_slice %71 {offsets = [0, 0], sizes = [2, 32], strides = [1, 1]} : vector<2x128xf32> to vector<2x32xf32>
    %78 = vector.extract_strided_slice %72 {offsets = [0, 0], sizes = [2, 32], strides = [1, 1]} : vector<2x128xf32> to vector<2x32xf32>
    %79 = vector.extract_strided_slice %73 {offsets = [0, 0], sizes = [2, 32], strides = [1, 1]} : vector<2x128xf32> to vector<2x32xf32>
    %80 = vector.extract_strided_slice %74 {offsets = [0, 0], sizes = [2, 32], strides = [1, 1]} : vector<2x128xf32> to vector<2x32xf32>
    %81 = vector.extract_strided_slice %75 {offsets = [0, 0], sizes = [2, 32], strides = [1, 1]} : vector<2x128xf32> to vector<2x32xf32>
    %82 = arith.mulf %76, %78 : vector<2x32xf32>
    %cst_34 = arith.constant dense<0.000000e+00> : vector<2xf32>
    %83 = vector.multi_reduction <add>, %82, %cst_34 [1] : vector<2x32xf32> to vector<2xf32>
    %84 = vector.shape_cast %83 : vector<2xf32> to vector<2x1xf32>
    %cst_35 = arith.constant 0.176776692 : f32
    %85 = vector.broadcast %cst_35 : f32 to vector<2x1xf32>
    %86 = arith.mulf %84, %85 : vector<2x1xf32>
    %87 = arith.mulf %76, %79 : vector<2x32xf32>
    %cst_36 = arith.constant dense<0.000000e+00> : vector<2xf32>
    %88 = vector.multi_reduction <add>, %87, %cst_36 [1] : vector<2x32xf32> to vector<2xf32>
    %89 = vector.shape_cast %88 : vector<2xf32> to vector<2x1xf32>
    %cst_37 = arith.constant 0.176776692 : f32
    %90 = vector.broadcast %cst_37 : f32 to vector<2x1xf32>
    %91 = arith.mulf %89, %90 : vector<2x1xf32>
    %92 = arith.mulf %77, %78 : vector<2x32xf32>
    %cst_38 = arith.constant dense<0.000000e+00> : vector<2xf32>
    %93 = vector.multi_reduction <add>, %92, %cst_38 [1] : vector<2x32xf32> to vector<2xf32>
    %94 = vector.shape_cast %93 : vector<2xf32> to vector<2x1xf32>
    %cst_39 = arith.constant 0.176776692 : f32
    %95 = vector.broadcast %cst_39 : f32 to vector<2x1xf32>
    %96 = arith.mulf %94, %95 : vector<2x1xf32>
    %97 = arith.mulf %77, %79 : vector<2x32xf32>
    %cst_40 = arith.constant dense<0.000000e+00> : vector<2xf32>
    %98 = vector.multi_reduction <add>, %97, %cst_40 [1] : vector<2x32xf32> to vector<2xf32>
    %99 = vector.shape_cast %98 : vector<2xf32> to vector<2x1xf32>
    %cst_41 = arith.constant 0.176776692 : f32
    %100 = vector.broadcast %cst_41 : f32 to vector<2x1xf32>
    %101 = arith.mulf %99, %100 : vector<2x1xf32>
    %102 = arith.subf %86, %91 : vector<2x1xf32>
    %cst_42 = arith.constant 0.000000e+00 : f32
    %103 = vector.broadcast %cst_42 : f32 to vector<2x1xf32>
    %104 = arith.subf %103, %102 : vector<2x1xf32>
    %105 = math.exp %104 : vector<2x1xf32>
    %cst_43 = arith.constant 1.000000e+00 : f32
    %106 = vector.broadcast %cst_43 : f32 to vector<2x1xf32>
    %107 = arith.addf %106, %105 : vector<2x1xf32>
    %cst_44 = arith.constant 1.000000e+00 : f32
    %108 = vector.broadcast %cst_44 : f32 to vector<2x1xf32>
    %109 = arith.divf %108, %107 : vector<2x1xf32>
    %110 = arith.subf %96, %101 : vector<2x1xf32>
    %cst_45 = arith.constant 0.000000e+00 : f32
    %111 = vector.broadcast %cst_45 : f32 to vector<2x1xf32>
    %112 = arith.subf %111, %110 : vector<2x1xf32>
    %113 = math.exp %112 : vector<2x1xf32>
    %cst_46 = arith.constant 1.000000e+00 : f32
    %114 = vector.broadcast %cst_46 : f32 to vector<2x1xf32>
    %115 = arith.addf %114, %113 : vector<2x1xf32>
    %cst_47 = arith.constant 1.000000e+00 : f32
    %116 = vector.broadcast %cst_47 : f32 to vector<2x1xf32>
    %117 = arith.divf %116, %115 : vector<2x1xf32>
    %118 = vector.broadcast %109 : vector<2x1xf32> to vector<2x32xf32>
    %119 = arith.mulf %118, %80 : vector<2x32xf32>
    %cst_48 = arith.constant 1.000000e+00 : f32
    %120 = vector.broadcast %cst_48 : f32 to vector<2x1xf32>
    %121 = arith.subf %120, %109 : vector<2x1xf32>
    %122 = vector.broadcast %121 : vector<2x1xf32> to vector<2x32xf32>
    %123 = arith.mulf %122, %81 : vector<2x32xf32>
    %124 = arith.addf %119, %123 : vector<2x32xf32>
    %125 = vector.broadcast %117 : vector<2x1xf32> to vector<2x32xf32>
    %126 = arith.mulf %125, %80 : vector<2x32xf32>
    %cst_49 = arith.constant 1.000000e+00 : f32
    %127 = vector.broadcast %cst_49 : f32 to vector<2x1xf32>
    %128 = arith.subf %127, %117 : vector<2x1xf32>
    %129 = vector.broadcast %128 : vector<2x1xf32> to vector<2x32xf32>
    %130 = arith.mulf %129, %81 : vector<2x32xf32>
    %131 = arith.addf %126, %130 : vector<2x32xf32>
    %132 = vector.extract_strided_slice %70 {offsets = [0, 32], sizes = [2, 32], strides = [1, 1]} : vector<2x128xf32> to vector<2x32xf32>
    %133 = vector.extract_strided_slice %71 {offsets = [0, 32], sizes = [2, 32], strides = [1, 1]} : vector<2x128xf32> to vector<2x32xf32>
    %134 = vector.extract_strided_slice %72 {offsets = [0, 32], sizes = [2, 32], strides = [1, 1]} : vector<2x128xf32> to vector<2x32xf32>
    %135 = vector.extract_strided_slice %73 {offsets = [0, 32], sizes = [2, 32], strides = [1, 1]} : vector<2x128xf32> to vector<2x32xf32>
    %136 = vector.extract_strided_slice %74 {offsets = [0, 32], sizes = [2, 32], strides = [1, 1]} : vector<2x128xf32> to vector<2x32xf32>
    %137 = vector.extract_strided_slice %75 {offsets = [0, 32], sizes = [2, 32], strides = [1, 1]} : vector<2x128xf32> to vector<2x32xf32>
    %138 = arith.mulf %132, %134 : vector<2x32xf32>
    %cst_50 = arith.constant dense<0.000000e+00> : vector<2xf32>
    %139 = vector.multi_reduction <add>, %138, %cst_50 [1] : vector<2x32xf32> to vector<2xf32>
    %140 = vector.shape_cast %139 : vector<2xf32> to vector<2x1xf32>
    %cst_51 = arith.constant 0.176776692 : f32
    %141 = vector.broadcast %cst_51 : f32 to vector<2x1xf32>
    %142 = arith.mulf %140, %141 : vector<2x1xf32>
    %143 = arith.mulf %132, %135 : vector<2x32xf32>
    %cst_52 = arith.constant dense<0.000000e+00> : vector<2xf32>
    %144 = vector.multi_reduction <add>, %143, %cst_52 [1] : vector<2x32xf32> to vector<2xf32>
    %145 = vector.shape_cast %144 : vector<2xf32> to vector<2x1xf32>
    %cst_53 = arith.constant 0.176776692 : f32
    %146 = vector.broadcast %cst_53 : f32 to vector<2x1xf32>
    %147 = arith.mulf %145, %146 : vector<2x1xf32>
    %148 = arith.mulf %133, %134 : vector<2x32xf32>
    %cst_54 = arith.constant dense<0.000000e+00> : vector<2xf32>
    %149 = vector.multi_reduction <add>, %148, %cst_54 [1] : vector<2x32xf32> to vector<2xf32>
    %150 = vector.shape_cast %149 : vector<2xf32> to vector<2x1xf32>
    %cst_55 = arith.constant 0.176776692 : f32
    %151 = vector.broadcast %cst_55 : f32 to vector<2x1xf32>
    %152 = arith.mulf %150, %151 : vector<2x1xf32>
    %153 = arith.mulf %133, %135 : vector<2x32xf32>
    %cst_56 = arith.constant dense<0.000000e+00> : vector<2xf32>
    %154 = vector.multi_reduction <add>, %153, %cst_56 [1] : vector<2x32xf32> to vector<2xf32>
    %155 = vector.shape_cast %154 : vector<2xf32> to vector<2x1xf32>
    %cst_57 = arith.constant 0.176776692 : f32
    %156 = vector.broadcast %cst_57 : f32 to vector<2x1xf32>
    %157 = arith.mulf %155, %156 : vector<2x1xf32>
    %158 = arith.subf %142, %147 : vector<2x1xf32>
    %cst_58 = arith.constant 0.000000e+00 : f32
    %159 = vector.broadcast %cst_58 : f32 to vector<2x1xf32>
    %160 = arith.subf %159, %158 : vector<2x1xf32>
    %161 = math.exp %160 : vector<2x1xf32>
    %cst_59 = arith.constant 1.000000e+00 : f32
    %162 = vector.broadcast %cst_59 : f32 to vector<2x1xf32>
    %163 = arith.addf %162, %161 : vector<2x1xf32>
    %cst_60 = arith.constant 1.000000e+00 : f32
    %164 = vector.broadcast %cst_60 : f32 to vector<2x1xf32>
    %165 = arith.divf %164, %163 : vector<2x1xf32>
    %166 = arith.subf %152, %157 : vector<2x1xf32>
    %cst_61 = arith.constant 0.000000e+00 : f32
    %167 = vector.broadcast %cst_61 : f32 to vector<2x1xf32>
    %168 = arith.subf %167, %166 : vector<2x1xf32>
    %169 = math.exp %168 : vector<2x1xf32>
    %cst_62 = arith.constant 1.000000e+00 : f32
    %170 = vector.broadcast %cst_62 : f32 to vector<2x1xf32>
    %171 = arith.addf %170, %169 : vector<2x1xf32>
    %cst_63 = arith.constant 1.000000e+00 : f32
    %172 = vector.broadcast %cst_63 : f32 to vector<2x1xf32>
    %173 = arith.divf %172, %171 : vector<2x1xf32>
    %174 = vector.broadcast %165 : vector<2x1xf32> to vector<2x32xf32>
    %175 = arith.mulf %174, %136 : vector<2x32xf32>
    %cst_64 = arith.constant 1.000000e+00 : f32
    %176 = vector.broadcast %cst_64 : f32 to vector<2x1xf32>
    %177 = arith.subf %176, %165 : vector<2x1xf32>
    %178 = vector.broadcast %177 : vector<2x1xf32> to vector<2x32xf32>
    %179 = arith.mulf %178, %137 : vector<2x32xf32>
    %180 = arith.addf %175, %179 : vector<2x32xf32>
    %181 = vector.broadcast %173 : vector<2x1xf32> to vector<2x32xf32>
    %182 = arith.mulf %181, %136 : vector<2x32xf32>
    %cst_65 = arith.constant 1.000000e+00 : f32
    %183 = vector.broadcast %cst_65 : f32 to vector<2x1xf32>
    %184 = arith.subf %183, %173 : vector<2x1xf32>
    %185 = vector.broadcast %184 : vector<2x1xf32> to vector<2x32xf32>
    %186 = arith.mulf %185, %137 : vector<2x32xf32>
    %187 = arith.addf %182, %186 : vector<2x32xf32>
    %188 = vector.extract_strided_slice %70 {offsets = [0, 64], sizes = [2, 32], strides = [1, 1]} : vector<2x128xf32> to vector<2x32xf32>
    %189 = vector.extract_strided_slice %71 {offsets = [0, 64], sizes = [2, 32], strides = [1, 1]} : vector<2x128xf32> to vector<2x32xf32>
    %190 = vector.extract_strided_slice %72 {offsets = [0, 64], sizes = [2, 32], strides = [1, 1]} : vector<2x128xf32> to vector<2x32xf32>
    %191 = vector.extract_strided_slice %73 {offsets = [0, 64], sizes = [2, 32], strides = [1, 1]} : vector<2x128xf32> to vector<2x32xf32>
    %192 = vector.extract_strided_slice %74 {offsets = [0, 64], sizes = [2, 32], strides = [1, 1]} : vector<2x128xf32> to vector<2x32xf32>
    %193 = vector.extract_strided_slice %75 {offsets = [0, 64], sizes = [2, 32], strides = [1, 1]} : vector<2x128xf32> to vector<2x32xf32>
    %194 = arith.mulf %188, %190 : vector<2x32xf32>
    %cst_66 = arith.constant dense<0.000000e+00> : vector<2xf32>
    %195 = vector.multi_reduction <add>, %194, %cst_66 [1] : vector<2x32xf32> to vector<2xf32>
    %196 = vector.shape_cast %195 : vector<2xf32> to vector<2x1xf32>
    %cst_67 = arith.constant 0.176776692 : f32
    %197 = vector.broadcast %cst_67 : f32 to vector<2x1xf32>
    %198 = arith.mulf %196, %197 : vector<2x1xf32>
    %199 = arith.mulf %188, %191 : vector<2x32xf32>
    %cst_68 = arith.constant dense<0.000000e+00> : vector<2xf32>
    %200 = vector.multi_reduction <add>, %199, %cst_68 [1] : vector<2x32xf32> to vector<2xf32>
    %201 = vector.shape_cast %200 : vector<2xf32> to vector<2x1xf32>
    %cst_69 = arith.constant 0.176776692 : f32
    %202 = vector.broadcast %cst_69 : f32 to vector<2x1xf32>
    %203 = arith.mulf %201, %202 : vector<2x1xf32>
    %204 = arith.mulf %189, %190 : vector<2x32xf32>
    %cst_70 = arith.constant dense<0.000000e+00> : vector<2xf32>
    %205 = vector.multi_reduction <add>, %204, %cst_70 [1] : vector<2x32xf32> to vector<2xf32>
    %206 = vector.shape_cast %205 : vector<2xf32> to vector<2x1xf32>
    %cst_71 = arith.constant 0.176776692 : f32
    %207 = vector.broadcast %cst_71 : f32 to vector<2x1xf32>
    %208 = arith.mulf %206, %207 : vector<2x1xf32>
    %209 = arith.mulf %189, %191 : vector<2x32xf32>
    %cst_72 = arith.constant dense<0.000000e+00> : vector<2xf32>
    %210 = vector.multi_reduction <add>, %209, %cst_72 [1] : vector<2x32xf32> to vector<2xf32>
    %211 = vector.shape_cast %210 : vector<2xf32> to vector<2x1xf32>
    %cst_73 = arith.constant 0.176776692 : f32
    %212 = vector.broadcast %cst_73 : f32 to vector<2x1xf32>
    %213 = arith.mulf %211, %212 : vector<2x1xf32>
    %214 = arith.subf %198, %203 : vector<2x1xf32>
    %cst_74 = arith.constant 0.000000e+00 : f32
    %215 = vector.broadcast %cst_74 : f32 to vector<2x1xf32>
    %216 = arith.subf %215, %214 : vector<2x1xf32>
    %217 = math.exp %216 : vector<2x1xf32>
    %cst_75 = arith.constant 1.000000e+00 : f32
    %218 = vector.broadcast %cst_75 : f32 to vector<2x1xf32>
    %219 = arith.addf %218, %217 : vector<2x1xf32>
    %cst_76 = arith.constant 1.000000e+00 : f32
    %220 = vector.broadcast %cst_76 : f32 to vector<2x1xf32>
    %221 = arith.divf %220, %219 : vector<2x1xf32>
    %222 = arith.subf %208, %213 : vector<2x1xf32>
    %cst_77 = arith.constant 0.000000e+00 : f32
    %223 = vector.broadcast %cst_77 : f32 to vector<2x1xf32>
    %224 = arith.subf %223, %222 : vector<2x1xf32>
    %225 = math.exp %224 : vector<2x1xf32>
    %cst_78 = arith.constant 1.000000e+00 : f32
    %226 = vector.broadcast %cst_78 : f32 to vector<2x1xf32>
    %227 = arith.addf %226, %225 : vector<2x1xf32>
    %cst_79 = arith.constant 1.000000e+00 : f32
    %228 = vector.broadcast %cst_79 : f32 to vector<2x1xf32>
    %229 = arith.divf %228, %227 : vector<2x1xf32>
    %230 = vector.broadcast %221 : vector<2x1xf32> to vector<2x32xf32>
    %231 = arith.mulf %230, %192 : vector<2x32xf32>
    %cst_80 = arith.constant 1.000000e+00 : f32
    %232 = vector.broadcast %cst_80 : f32 to vector<2x1xf32>
    %233 = arith.subf %232, %221 : vector<2x1xf32>
    %234 = vector.broadcast %233 : vector<2x1xf32> to vector<2x32xf32>
    %235 = arith.mulf %234, %193 : vector<2x32xf32>
    %236 = arith.addf %231, %235 : vector<2x32xf32>
    %237 = vector.broadcast %229 : vector<2x1xf32> to vector<2x32xf32>
    %238 = arith.mulf %237, %192 : vector<2x32xf32>
    %cst_81 = arith.constant 1.000000e+00 : f32
    %239 = vector.broadcast %cst_81 : f32 to vector<2x1xf32>
    %240 = arith.subf %239, %229 : vector<2x1xf32>
    %241 = vector.broadcast %240 : vector<2x1xf32> to vector<2x32xf32>
    %242 = arith.mulf %241, %193 : vector<2x32xf32>
    %243 = arith.addf %238, %242 : vector<2x32xf32>
    %244 = vector.extract_strided_slice %70 {offsets = [0, 96], sizes = [2, 32], strides = [1, 1]} : vector<2x128xf32> to vector<2x32xf32>
    %245 = vector.extract_strided_slice %71 {offsets = [0, 96], sizes = [2, 32], strides = [1, 1]} : vector<2x128xf32> to vector<2x32xf32>
    %246 = vector.extract_strided_slice %72 {offsets = [0, 96], sizes = [2, 32], strides = [1, 1]} : vector<2x128xf32> to vector<2x32xf32>
    %247 = vector.extract_strided_slice %73 {offsets = [0, 96], sizes = [2, 32], strides = [1, 1]} : vector<2x128xf32> to vector<2x32xf32>
    %248 = vector.extract_strided_slice %74 {offsets = [0, 96], sizes = [2, 32], strides = [1, 1]} : vector<2x128xf32> to vector<2x32xf32>
    %249 = vector.extract_strided_slice %75 {offsets = [0, 96], sizes = [2, 32], strides = [1, 1]} : vector<2x128xf32> to vector<2x32xf32>
    %250 = arith.mulf %244, %246 : vector<2x32xf32>
    %cst_82 = arith.constant dense<0.000000e+00> : vector<2xf32>
    %251 = vector.multi_reduction <add>, %250, %cst_82 [1] : vector<2x32xf32> to vector<2xf32>
    %252 = vector.shape_cast %251 : vector<2xf32> to vector<2x1xf32>
    %cst_83 = arith.constant 0.176776692 : f32
    %253 = vector.broadcast %cst_83 : f32 to vector<2x1xf32>
    %254 = arith.mulf %252, %253 : vector<2x1xf32>
    %255 = arith.mulf %244, %247 : vector<2x32xf32>
    %cst_84 = arith.constant dense<0.000000e+00> : vector<2xf32>
    %256 = vector.multi_reduction <add>, %255, %cst_84 [1] : vector<2x32xf32> to vector<2xf32>
    %257 = vector.shape_cast %256 : vector<2xf32> to vector<2x1xf32>
    %cst_85 = arith.constant 0.176776692 : f32
    %258 = vector.broadcast %cst_85 : f32 to vector<2x1xf32>
    %259 = arith.mulf %257, %258 : vector<2x1xf32>
    %260 = arith.mulf %245, %246 : vector<2x32xf32>
    %cst_86 = arith.constant dense<0.000000e+00> : vector<2xf32>
    %261 = vector.multi_reduction <add>, %260, %cst_86 [1] : vector<2x32xf32> to vector<2xf32>
    %262 = vector.shape_cast %261 : vector<2xf32> to vector<2x1xf32>
    %cst_87 = arith.constant 0.176776692 : f32
    %263 = vector.broadcast %cst_87 : f32 to vector<2x1xf32>
    %264 = arith.mulf %262, %263 : vector<2x1xf32>
    %265 = arith.mulf %245, %247 : vector<2x32xf32>
    %cst_88 = arith.constant dense<0.000000e+00> : vector<2xf32>
    %266 = vector.multi_reduction <add>, %265, %cst_88 [1] : vector<2x32xf32> to vector<2xf32>
    %267 = vector.shape_cast %266 : vector<2xf32> to vector<2x1xf32>
    %cst_89 = arith.constant 0.176776692 : f32
    %268 = vector.broadcast %cst_89 : f32 to vector<2x1xf32>
    %269 = arith.mulf %267, %268 : vector<2x1xf32>
    %270 = arith.subf %254, %259 : vector<2x1xf32>
    %cst_90 = arith.constant 0.000000e+00 : f32
    %271 = vector.broadcast %cst_90 : f32 to vector<2x1xf32>
    %272 = arith.subf %271, %270 : vector<2x1xf32>
    %273 = math.exp %272 : vector<2x1xf32>
    %cst_91 = arith.constant 1.000000e+00 : f32
    %274 = vector.broadcast %cst_91 : f32 to vector<2x1xf32>
    %275 = arith.addf %274, %273 : vector<2x1xf32>
    %cst_92 = arith.constant 1.000000e+00 : f32
    %276 = vector.broadcast %cst_92 : f32 to vector<2x1xf32>
    %277 = arith.divf %276, %275 : vector<2x1xf32>
    %278 = arith.subf %264, %269 : vector<2x1xf32>
    %cst_93 = arith.constant 0.000000e+00 : f32
    %279 = vector.broadcast %cst_93 : f32 to vector<2x1xf32>
    %280 = arith.subf %279, %278 : vector<2x1xf32>
    %281 = math.exp %280 : vector<2x1xf32>
    %cst_94 = arith.constant 1.000000e+00 : f32
    %282 = vector.broadcast %cst_94 : f32 to vector<2x1xf32>
    %283 = arith.addf %282, %281 : vector<2x1xf32>
    %cst_95 = arith.constant 1.000000e+00 : f32
    %284 = vector.broadcast %cst_95 : f32 to vector<2x1xf32>
    %285 = arith.divf %284, %283 : vector<2x1xf32>
    %286 = vector.broadcast %277 : vector<2x1xf32> to vector<2x32xf32>
    %287 = arith.mulf %286, %248 : vector<2x32xf32>
    %cst_96 = arith.constant 1.000000e+00 : f32
    %288 = vector.broadcast %cst_96 : f32 to vector<2x1xf32>
    %289 = arith.subf %288, %277 : vector<2x1xf32>
    %290 = vector.broadcast %289 : vector<2x1xf32> to vector<2x32xf32>
    %291 = arith.mulf %290, %249 : vector<2x32xf32>
    %292 = arith.addf %287, %291 : vector<2x32xf32>
    %293 = vector.broadcast %285 : vector<2x1xf32> to vector<2x32xf32>
    %294 = arith.mulf %293, %248 : vector<2x32xf32>
    %cst_97 = arith.constant 1.000000e+00 : f32
    %295 = vector.broadcast %cst_97 : f32 to vector<2x1xf32>
    %296 = arith.subf %295, %285 : vector<2x1xf32>
    %297 = vector.broadcast %296 : vector<2x1xf32> to vector<2x32xf32>
    %298 = arith.mulf %297, %249 : vector<2x32xf32>
    %299 = arith.addf %294, %298 : vector<2x32xf32>
    %300 = tpu.concatenate %124, %180, %236, %292 in 1 : vector<2x32xf32>, vector<2x32xf32>, vector<2x32xf32>, vector<2x32xf32> -> vector<2x128xf32>
    %301 = tpu.concatenate %131, %187, %243, %299 in 1 : vector<2x32xf32>, vector<2x32xf32>, vector<2x32xf32>, vector<2x32xf32> -> vector<2x128xf32>
    %302 = tpu.concatenate %300, %301 in 0 : vector<2x128xf32>, vector<2x128xf32> -> vector<4x128xf32>
    %c0_98 = arith.constant 0 : index
    %c0_99 = arith.constant 0 : index
    %c0_100 = arith.constant 0 : index
    %303 = vector.load %arg8[%c0_98, %c0_99, %c0_100] : memref<2x128x128xf32, #tpu.memory_space<vmem>>, vector<1x128x128xf32>
    %304 = vector.shape_cast %303 : vector<1x128x128xf32> to vector<128x128xf32>
    %cst_101 = arith.constant dense<0.000000e+00> : vector<4x128xf32>
    %305 = tpu.matmul %302, %304, %cst_101 {dimension_numbers = #tpu.dot_dimension_numbers<[1], [0], [0], [1], [0, 0, 1, 1], [], []>} : vector<4x128xf32>, vector<128x128xf32>, vector<4x128xf32> -> vector<4x128xf32>
    %306 = arith.addf %33, %305 : vector<4x128xf32>
    %c0_102 = arith.constant 0 : index
    %c0_103 = arith.constant 0 : index
    %c0_104 = arith.constant 0 : index
    %307 = vector.load %arg9[%c0_102, %c0_103, %c0_104] : memref<2x1x128xf32, #tpu.memory_space<vmem>>, vector<1x1x128xf32>
    %308 = vector.shape_cast %307 : vector<1x1x128xf32> to vector<1x128xf32>
    %309 = vector.broadcast %308 : vector<1x128xf32> to vector<4x128xf32>
    %310 = arith.addf %306, %309 : vector<4x128xf32>
    %c0_105 = arith.constant 0 : index
    %c0_106 = arith.constant 0 : index
    %c0_107 = arith.constant 0 : index
    %311 = vector.load %arg12[%c0_105, %c0_106, %c0_107] : memref<2x1x128xf32, #tpu.memory_space<vmem>>, vector<1x1x128xf32>
    %312 = vector.shape_cast %311 : vector<1x1x128xf32> to vector<1x128xf32>
    %c0_108 = arith.constant 0 : index
    %c0_109 = arith.constant 0 : index
    %c0_110 = arith.constant 0 : index
    %313 = vector.load %arg13[%c0_108, %c0_109, %c0_110] : memref<2x1x128xf32, #tpu.memory_space<vmem>>, vector<1x1x128xf32>
    %314 = vector.shape_cast %313 : vector<1x1x128xf32> to vector<1x128xf32>
    %cst_111 = arith.constant dense<0.000000e+00> : vector<4xf32>
    %315 = vector.multi_reduction <add>, %310, %cst_111 [1] : vector<4x128xf32> to vector<4xf32>
    %316 = vector.shape_cast %315 : vector<4xf32> to vector<4x1xf32>
    %317 = arith.mulf %310, %310 : vector<4x128xf32>
    %cst_112 = arith.constant dense<0.000000e+00> : vector<4xf32>
    %318 = vector.multi_reduction <add>, %317, %cst_112 [1] : vector<4x128xf32> to vector<4xf32>
    %319 = vector.shape_cast %318 : vector<4xf32> to vector<4x1xf32>
    %cst_113 = arith.constant 7.812500e-03 : f32
    %320 = vector.broadcast %cst_113 : f32 to vector<4x1xf32>
    %321 = arith.mulf %316, %320 : vector<4x1xf32>
    %cst_114 = arith.constant 7.812500e-03 : f32
    %322 = vector.broadcast %cst_114 : f32 to vector<4x1xf32>
    %323 = arith.mulf %319, %322 : vector<4x1xf32>
    %324 = arith.mulf %321, %321 : vector<4x1xf32>
    %325 = arith.subf %323, %324 : vector<4x1xf32>
    %326 = vector.broadcast %321 : vector<4x1xf32> to vector<4x128xf32>
    %327 = arith.subf %310, %326 : vector<4x128xf32>
    %cst_115 = arith.constant 9.99999974E-6 : f32
    %328 = vector.broadcast %cst_115 : f32 to vector<4x1xf32>
    %329 = arith.addf %325, %328 : vector<4x1xf32>
    %330 = math.rsqrt %329 : vector<4x1xf32>
    %331 = vector.broadcast %330 : vector<4x1xf32> to vector<4x128xf32>
    %332 = arith.mulf %327, %331 : vector<4x128xf32>
    %333 = vector.broadcast %312 : vector<1x128xf32> to vector<4x128xf32>
    %334 = arith.mulf %332, %333 : vector<4x128xf32>
    %335 = vector.broadcast %314 : vector<1x128xf32> to vector<4x128xf32>
    %336 = arith.addf %334, %335 : vector<4x128xf32>
    %c0_116 = arith.constant 0 : index
    %c0_117 = arith.constant 0 : index
    %c0_118 = arith.constant 0 : index
    %337 = vector.load %arg14[%c0_116, %c0_117, %c0_118] : memref<2x128x512xf32, #tpu.memory_space<vmem>>, vector<1x128x512xf32>
    %338 = vector.shape_cast %337 : vector<1x128x512xf32> to vector<128x512xf32>
    %cst_119 = arith.constant dense<0.000000e+00> : vector<4x512xf32>
    %339 = tpu.matmul %336, %338, %cst_119 {dimension_numbers = #tpu.dot_dimension_numbers<[1], [0], [0], [1], [0, 0, 1, 1], [], []>} : vector<4x128xf32>, vector<128x512xf32>, vector<4x512xf32> -> vector<4x512xf32>
    %c0_120 = arith.constant 0 : index
    %c0_121 = arith.constant 0 : index
    %c0_122 = arith.constant 0 : index
    %340 = vector.load %arg15[%c0_120, %c0_121, %c0_122] : memref<2x1x512xf32, #tpu.memory_space<vmem>>, vector<1x1x512xf32>
    %341 = vector.shape_cast %340 : vector<1x1x512xf32> to vector<1x512xf32>
    %342 = vector.broadcast %341 : vector<1x512xf32> to vector<4x512xf32>
    %343 = arith.addf %339, %342 : vector<4x512xf32>
    %cst_123 = arith.constant 5.000000e-01 : f32
    %344 = vector.broadcast %cst_123 : f32 to vector<4x512xf32>
    %345 = arith.mulf %344, %343 : vector<4x512xf32>
    %cst_124 = arith.constant 0.707106769 : f32
    %346 = vector.broadcast %cst_124 : f32 to vector<4x512xf32>
    %347 = arith.mulf %343, %346 : vector<4x512xf32>
    %cst_125 = arith.constant 0.000000e+00 : f32
    %348 = vector.broadcast %cst_125 : f32 to vector<4x512xf32>
    %349 = arith.cmpf oge, %347, %348 : vector<4x512xf32>
    %cst_126 = arith.constant 1.000000e+00 : f32
    %cst_127 = arith.constant -1.000000e+00 : f32
    %350 = vector.broadcast %cst_126 : f32 to vector<4x512xf32>
    %351 = vector.broadcast %cst_127 : f32 to vector<4x512xf32>
    %352 = arith.select %349, %350, %351 : vector<4x512xi1>, vector<4x512xf32>
    %353 = math.absf %347 : vector<4x512xf32>
    %cst_128 = arith.constant 0.327591091 : f32
    %354 = vector.broadcast %cst_128 : f32 to vector<4x512xf32>
    %355 = arith.mulf %354, %353 : vector<4x512xf32>
    %cst_129 = arith.constant 1.000000e+00 : f32
    %356 = vector.broadcast %cst_129 : f32 to vector<4x512xf32>
    %357 = arith.addf %356, %355 : vector<4x512xf32>
    %cst_130 = arith.constant 1.000000e+00 : f32
    %358 = vector.broadcast %cst_130 : f32 to vector<4x512xf32>
    %359 = arith.divf %358, %357 : vector<4x512xf32>
    %cst_131 = arith.constant 1.06140542 : f32
    %360 = vector.broadcast %cst_131 : f32 to vector<4x512xf32>
    %361 = arith.mulf %360, %359 : vector<4x512xf32>
    %cst_132 = arith.constant -1.45315206 : f32
    %362 = vector.broadcast %cst_132 : f32 to vector<4x512xf32>
    %363 = arith.addf %361, %362 : vector<4x512xf32>
    %364 = arith.mulf %363, %359 : vector<4x512xf32>
    %cst_133 = arith.constant 1.42141378 : f32
    %365 = vector.broadcast %cst_133 : f32 to vector<4x512xf32>
    %366 = arith.addf %364, %365 : vector<4x512xf32>
    %367 = arith.mulf %366, %359 : vector<4x512xf32>
    %cst_134 = arith.constant -0.284496725 : f32
    %368 = vector.broadcast %cst_134 : f32 to vector<4x512xf32>
    %369 = arith.addf %367, %368 : vector<4x512xf32>
    %370 = arith.mulf %369, %359 : vector<4x512xf32>
    %cst_135 = arith.constant 0.254829586 : f32
    %371 = vector.broadcast %cst_135 : f32 to vector<4x512xf32>
    %372 = arith.addf %370, %371 : vector<4x512xf32>
    %373 = arith.mulf %372, %359 : vector<4x512xf32>
    %cst_136 = arith.constant 0.000000e+00 : f32
    %374 = vector.broadcast %cst_136 : f32 to vector<4x512xf32>
    %375 = arith.subf %374, %353 : vector<4x512xf32>
    %376 = arith.mulf %375, %353 : vector<4x512xf32>
    %377 = math.exp %376 : vector<4x512xf32>
    %378 = arith.mulf %373, %377 : vector<4x512xf32>
    %cst_137 = arith.constant 1.000000e+00 : f32
    %379 = vector.broadcast %cst_137 : f32 to vector<4x512xf32>
    %380 = arith.subf %379, %378 : vector<4x512xf32>
    %381 = arith.mulf %352, %380 : vector<4x512xf32>
    %cst_138 = arith.constant 1.000000e+00 : f32
    %382 = vector.broadcast %cst_138 : f32 to vector<4x512xf32>
    %383 = arith.addf %382, %381 : vector<4x512xf32>
    %384 = arith.mulf %345, %383 : vector<4x512xf32>
    %c0_139 = arith.constant 0 : index
    %c0_140 = arith.constant 0 : index
    %c0_141 = arith.constant 0 : index
    %385 = vector.load %arg16[%c0_139, %c0_140, %c0_141] : memref<2x512x128xf32, #tpu.memory_space<vmem>>, vector<1x512x128xf32>
    %386 = vector.shape_cast %385 : vector<1x512x128xf32> to vector<512x128xf32>
    %cst_142 = arith.constant dense<0.000000e+00> : vector<4x128xf32>
    %387 = tpu.matmul %384, %386, %cst_142 {dimension_numbers = #tpu.dot_dimension_numbers<[1], [0], [0], [1], [0, 0, 1, 1], [], []>} : vector<4x512xf32>, vector<512x128xf32>, vector<4x128xf32> -> vector<4x128xf32>
    %388 = arith.addf %310, %387 : vector<4x128xf32>
    %c0_143 = arith.constant 0 : index
    %c0_144 = arith.constant 0 : index
    %c0_145 = arith.constant 0 : index
    %389 = vector.load %arg17[%c0_143, %c0_144, %c0_145] : memref<2x1x128xf32, #tpu.memory_space<vmem>>, vector<1x1x128xf32>
    %390 = vector.shape_cast %389 : vector<1x1x128xf32> to vector<1x128xf32>
    %391 = vector.broadcast %390 : vector<1x128xf32> to vector<4x128xf32>
    %392 = arith.addf %388, %391 : vector<4x128xf32>
    %c1 = arith.constant 1 : index
    %c0_146 = arith.constant 0 : index
    %c0_147 = arith.constant 0 : index
    %393 = vector.load %arg10[%c1, %c0_146, %c0_147] : memref<2x1x128xf32, #tpu.memory_space<vmem>>, vector<1x1x128xf32>
    %394 = vector.shape_cast %393 : vector<1x1x128xf32> to vector<1x128xf32>
    %c1_148 = arith.constant 1 : index
    %c0_149 = arith.constant 0 : index
    %c0_150 = arith.constant 0 : index
    %395 = vector.load %arg11[%c1_148, %c0_149, %c0_150] : memref<2x1x128xf32, #tpu.memory_space<vmem>>, vector<1x1x128xf32>
    %396 = vector.shape_cast %395 : vector<1x1x128xf32> to vector<1x128xf32>
    %cst_151 = arith.constant dense<0.000000e+00> : vector<4xf32>
    %397 = vector.multi_reduction <add>, %392, %cst_151 [1] : vector<4x128xf32> to vector<4xf32>
    %398 = vector.shape_cast %397 : vector<4xf32> to vector<4x1xf32>
    %399 = arith.mulf %392, %392 : vector<4x128xf32>
    %cst_152 = arith.constant dense<0.000000e+00> : vector<4xf32>
    %400 = vector.multi_reduction <add>, %399, %cst_152 [1] : vector<4x128xf32> to vector<4xf32>
    %401 = vector.shape_cast %400 : vector<4xf32> to vector<4x1xf32>
    %cst_153 = arith.constant 7.812500e-03 : f32
    %402 = vector.broadcast %cst_153 : f32 to vector<4x1xf32>
    %403 = arith.mulf %398, %402 : vector<4x1xf32>
    %cst_154 = arith.constant 7.812500e-03 : f32
    %404 = vector.broadcast %cst_154 : f32 to vector<4x1xf32>
    %405 = arith.mulf %401, %404 : vector<4x1xf32>
    %406 = arith.mulf %403, %403 : vector<4x1xf32>
    %407 = arith.subf %405, %406 : vector<4x1xf32>
    %408 = vector.broadcast %403 : vector<4x1xf32> to vector<4x128xf32>
    %409 = arith.subf %392, %408 : vector<4x128xf32>
    %cst_155 = arith.constant 9.99999974E-6 : f32
    %410 = vector.broadcast %cst_155 : f32 to vector<4x1xf32>
    %411 = arith.addf %407, %410 : vector<4x1xf32>
    %412 = math.rsqrt %411 : vector<4x1xf32>
    %413 = vector.broadcast %412 : vector<4x1xf32> to vector<4x128xf32>
    %414 = arith.mulf %409, %413 : vector<4x128xf32>
    %415 = vector.broadcast %394 : vector<1x128xf32> to vector<4x128xf32>
    %416 = arith.mulf %414, %415 : vector<4x128xf32>
    %417 = vector.broadcast %396 : vector<1x128xf32> to vector<4x128xf32>
    %418 = arith.addf %416, %417 : vector<4x128xf32>
    %c1_156 = arith.constant 1 : index
    %c0_157 = arith.constant 0 : index
    %c0_158 = arith.constant 0 : index
    %419 = vector.load %arg6[%c1_156, %c0_157, %c0_158] : memref<2x128x384xf32, #tpu.memory_space<vmem>>, vector<1x128x384xf32>
    %420 = vector.shape_cast %419 : vector<1x128x384xf32> to vector<128x384xf32>
    %cst_159 = arith.constant dense<0.000000e+00> : vector<4x384xf32>
    %421 = tpu.matmul %418, %420, %cst_159 {dimension_numbers = #tpu.dot_dimension_numbers<[1], [0], [0], [1], [0, 0, 1, 1], [], []>} : vector<4x128xf32>, vector<128x384xf32>, vector<4x384xf32> -> vector<4x384xf32>
    %c1_160 = arith.constant 1 : index
    %c0_161 = arith.constant 0 : index
    %c0_162 = arith.constant 0 : index
    %422 = vector.load %arg7[%c1_160, %c0_161, %c0_162] : memref<2x1x384xf32, #tpu.memory_space<vmem>>, vector<1x1x384xf32>
    %423 = vector.shape_cast %422 : vector<1x1x384xf32> to vector<1x384xf32>
    %424 = vector.broadcast %423 : vector<1x384xf32> to vector<4x384xf32>
    %425 = arith.addf %421, %424 : vector<4x384xf32>
    %426 = vector.extract_strided_slice %425 {offsets = [0, 0], sizes = [4, 128], strides = [1, 1]} : vector<4x384xf32> to vector<4x128xf32>
    %427 = vector.extract_strided_slice %425 {offsets = [0, 128], sizes = [4, 128], strides = [1, 1]} : vector<4x384xf32> to vector<4x128xf32>
    %428 = vector.extract_strided_slice %425 {offsets = [0, 256], sizes = [4, 128], strides = [1, 1]} : vector<4x384xf32> to vector<4x128xf32>
    %429 = vector.extract_strided_slice %426 {offsets = [0, 0], sizes = [2, 128], strides = [1, 1]} : vector<4x128xf32> to vector<2x128xf32>
    %430 = vector.extract_strided_slice %426 {offsets = [2, 0], sizes = [2, 128], strides = [1, 1]} : vector<4x128xf32> to vector<2x128xf32>
    %431 = vector.extract_strided_slice %427 {offsets = [0, 0], sizes = [2, 128], strides = [1, 1]} : vector<4x128xf32> to vector<2x128xf32>
    %432 = vector.extract_strided_slice %427 {offsets = [2, 0], sizes = [2, 128], strides = [1, 1]} : vector<4x128xf32> to vector<2x128xf32>
    %433 = vector.extract_strided_slice %428 {offsets = [0, 0], sizes = [2, 128], strides = [1, 1]} : vector<4x128xf32> to vector<2x128xf32>
    %434 = vector.extract_strided_slice %428 {offsets = [2, 0], sizes = [2, 128], strides = [1, 1]} : vector<4x128xf32> to vector<2x128xf32>
    %435 = vector.extract_strided_slice %429 {offsets = [0, 0], sizes = [2, 32], strides = [1, 1]} : vector<2x128xf32> to vector<2x32xf32>
    %436 = vector.extract_strided_slice %430 {offsets = [0, 0], sizes = [2, 32], strides = [1, 1]} : vector<2x128xf32> to vector<2x32xf32>
    %437 = vector.extract_strided_slice %431 {offsets = [0, 0], sizes = [2, 32], strides = [1, 1]} : vector<2x128xf32> to vector<2x32xf32>
    %438 = vector.extract_strided_slice %432 {offsets = [0, 0], sizes = [2, 32], strides = [1, 1]} : vector<2x128xf32> to vector<2x32xf32>
    %439 = vector.extract_strided_slice %433 {offsets = [0, 0], sizes = [2, 32], strides = [1, 1]} : vector<2x128xf32> to vector<2x32xf32>
    %440 = vector.extract_strided_slice %434 {offsets = [0, 0], sizes = [2, 32], strides = [1, 1]} : vector<2x128xf32> to vector<2x32xf32>
    %441 = arith.mulf %435, %437 : vector<2x32xf32>
    %cst_163 = arith.constant dense<0.000000e+00> : vector<2xf32>
    %442 = vector.multi_reduction <add>, %441, %cst_163 [1] : vector<2x32xf32> to vector<2xf32>
    %443 = vector.shape_cast %442 : vector<2xf32> to vector<2x1xf32>
    %cst_164 = arith.constant 0.176776692 : f32
    %444 = vector.broadcast %cst_164 : f32 to vector<2x1xf32>
    %445 = arith.mulf %443, %444 : vector<2x1xf32>
    %446 = arith.mulf %435, %438 : vector<2x32xf32>
    %cst_165 = arith.constant dense<0.000000e+00> : vector<2xf32>
    %447 = vector.multi_reduction <add>, %446, %cst_165 [1] : vector<2x32xf32> to vector<2xf32>
    %448 = vector.shape_cast %447 : vector<2xf32> to vector<2x1xf32>
    %cst_166 = arith.constant 0.176776692 : f32
    %449 = vector.broadcast %cst_166 : f32 to vector<2x1xf32>
    %450 = arith.mulf %448, %449 : vector<2x1xf32>
    %451 = arith.mulf %436, %437 : vector<2x32xf32>
    %cst_167 = arith.constant dense<0.000000e+00> : vector<2xf32>
    %452 = vector.multi_reduction <add>, %451, %cst_167 [1] : vector<2x32xf32> to vector<2xf32>
    %453 = vector.shape_cast %452 : vector<2xf32> to vector<2x1xf32>
    %cst_168 = arith.constant 0.176776692 : f32
    %454 = vector.broadcast %cst_168 : f32 to vector<2x1xf32>
    %455 = arith.mulf %453, %454 : vector<2x1xf32>
    %456 = arith.mulf %436, %438 : vector<2x32xf32>
    %cst_169 = arith.constant dense<0.000000e+00> : vector<2xf32>
    %457 = vector.multi_reduction <add>, %456, %cst_169 [1] : vector<2x32xf32> to vector<2xf32>
    %458 = vector.shape_cast %457 : vector<2xf32> to vector<2x1xf32>
    %cst_170 = arith.constant 0.176776692 : f32
    %459 = vector.broadcast %cst_170 : f32 to vector<2x1xf32>
    %460 = arith.mulf %458, %459 : vector<2x1xf32>
    %461 = arith.subf %445, %450 : vector<2x1xf32>
    %cst_171 = arith.constant 0.000000e+00 : f32
    %462 = vector.broadcast %cst_171 : f32 to vector<2x1xf32>
    %463 = arith.subf %462, %461 : vector<2x1xf32>
    %464 = math.exp %463 : vector<2x1xf32>
    %cst_172 = arith.constant 1.000000e+00 : f32
    %465 = vector.broadcast %cst_172 : f32 to vector<2x1xf32>
    %466 = arith.addf %465, %464 : vector<2x1xf32>
    %cst_173 = arith.constant 1.000000e+00 : f32
    %467 = vector.broadcast %cst_173 : f32 to vector<2x1xf32>
    %468 = arith.divf %467, %466 : vector<2x1xf32>
    %469 = arith.subf %455, %460 : vector<2x1xf32>
    %cst_174 = arith.constant 0.000000e+00 : f32
    %470 = vector.broadcast %cst_174 : f32 to vector<2x1xf32>
    %471 = arith.subf %470, %469 : vector<2x1xf32>
    %472 = math.exp %471 : vector<2x1xf32>
    %cst_175 = arith.constant 1.000000e+00 : f32
    %473 = vector.broadcast %cst_175 : f32 to vector<2x1xf32>
    %474 = arith.addf %473, %472 : vector<2x1xf32>
    %cst_176 = arith.constant 1.000000e+00 : f32
    %475 = vector.broadcast %cst_176 : f32 to vector<2x1xf32>
    %476 = arith.divf %475, %474 : vector<2x1xf32>
    %477 = vector.broadcast %468 : vector<2x1xf32> to vector<2x32xf32>
    %478 = arith.mulf %477, %439 : vector<2x32xf32>
    %cst_177 = arith.constant 1.000000e+00 : f32
    %479 = vector.broadcast %cst_177 : f32 to vector<2x1xf32>
    %480 = arith.subf %479, %468 : vector<2x1xf32>
    %481 = vector.broadcast %480 : vector<2x1xf32> to vector<2x32xf32>
    %482 = arith.mulf %481, %440 : vector<2x32xf32>
    %483 = arith.addf %478, %482 : vector<2x32xf32>
    %484 = vector.broadcast %476 : vector<2x1xf32> to vector<2x32xf32>
    %485 = arith.mulf %484, %439 : vector<2x32xf32>
    %cst_178 = arith.constant 1.000000e+00 : f32
    %486 = vector.broadcast %cst_178 : f32 to vector<2x1xf32>
    %487 = arith.subf %486, %476 : vector<2x1xf32>
    %488 = vector.broadcast %487 : vector<2x1xf32> to vector<2x32xf32>
    %489 = arith.mulf %488, %440 : vector<2x32xf32>
    %490 = arith.addf %485, %489 : vector<2x32xf32>
    %491 = vector.extract_strided_slice %429 {offsets = [0, 32], sizes = [2, 32], strides = [1, 1]} : vector<2x128xf32> to vector<2x32xf32>
    %492 = vector.extract_strided_slice %430 {offsets = [0, 32], sizes = [2, 32], strides = [1, 1]} : vector<2x128xf32> to vector<2x32xf32>
    %493 = vector.extract_strided_slice %431 {offsets = [0, 32], sizes = [2, 32], strides = [1, 1]} : vector<2x128xf32> to vector<2x32xf32>
    %494 = vector.extract_strided_slice %432 {offsets = [0, 32], sizes = [2, 32], strides = [1, 1]} : vector<2x128xf32> to vector<2x32xf32>
    %495 = vector.extract_strided_slice %433 {offsets = [0, 32], sizes = [2, 32], strides = [1, 1]} : vector<2x128xf32> to vector<2x32xf32>
    %496 = vector.extract_strided_slice %434 {offsets = [0, 32], sizes = [2, 32], strides = [1, 1]} : vector<2x128xf32> to vector<2x32xf32>
    %497 = arith.mulf %491, %493 : vector<2x32xf32>
    %cst_179 = arith.constant dense<0.000000e+00> : vector<2xf32>
    %498 = vector.multi_reduction <add>, %497, %cst_179 [1] : vector<2x32xf32> to vector<2xf32>
    %499 = vector.shape_cast %498 : vector<2xf32> to vector<2x1xf32>
    %cst_180 = arith.constant 0.176776692 : f32
    %500 = vector.broadcast %cst_180 : f32 to vector<2x1xf32>
    %501 = arith.mulf %499, %500 : vector<2x1xf32>
    %502 = arith.mulf %491, %494 : vector<2x32xf32>
    %cst_181 = arith.constant dense<0.000000e+00> : vector<2xf32>
    %503 = vector.multi_reduction <add>, %502, %cst_181 [1] : vector<2x32xf32> to vector<2xf32>
    %504 = vector.shape_cast %503 : vector<2xf32> to vector<2x1xf32>
    %cst_182 = arith.constant 0.176776692 : f32
    %505 = vector.broadcast %cst_182 : f32 to vector<2x1xf32>
    %506 = arith.mulf %504, %505 : vector<2x1xf32>
    %507 = arith.mulf %492, %493 : vector<2x32xf32>
    %cst_183 = arith.constant dense<0.000000e+00> : vector<2xf32>
    %508 = vector.multi_reduction <add>, %507, %cst_183 [1] : vector<2x32xf32> to vector<2xf32>
    %509 = vector.shape_cast %508 : vector<2xf32> to vector<2x1xf32>
    %cst_184 = arith.constant 0.176776692 : f32
    %510 = vector.broadcast %cst_184 : f32 to vector<2x1xf32>
    %511 = arith.mulf %509, %510 : vector<2x1xf32>
    %512 = arith.mulf %492, %494 : vector<2x32xf32>
    %cst_185 = arith.constant dense<0.000000e+00> : vector<2xf32>
    %513 = vector.multi_reduction <add>, %512, %cst_185 [1] : vector<2x32xf32> to vector<2xf32>
    %514 = vector.shape_cast %513 : vector<2xf32> to vector<2x1xf32>
    %cst_186 = arith.constant 0.176776692 : f32
    %515 = vector.broadcast %cst_186 : f32 to vector<2x1xf32>
    %516 = arith.mulf %514, %515 : vector<2x1xf32>
    %517 = arith.subf %501, %506 : vector<2x1xf32>
    %cst_187 = arith.constant 0.000000e+00 : f32
    %518 = vector.broadcast %cst_187 : f32 to vector<2x1xf32>
    %519 = arith.subf %518, %517 : vector<2x1xf32>
    %520 = math.exp %519 : vector<2x1xf32>
    %cst_188 = arith.constant 1.000000e+00 : f32
    %521 = vector.broadcast %cst_188 : f32 to vector<2x1xf32>
    %522 = arith.addf %521, %520 : vector<2x1xf32>
    %cst_189 = arith.constant 1.000000e+00 : f32
    %523 = vector.broadcast %cst_189 : f32 to vector<2x1xf32>
    %524 = arith.divf %523, %522 : vector<2x1xf32>
    %525 = arith.subf %511, %516 : vector<2x1xf32>
    %cst_190 = arith.constant 0.000000e+00 : f32
    %526 = vector.broadcast %cst_190 : f32 to vector<2x1xf32>
    %527 = arith.subf %526, %525 : vector<2x1xf32>
    %528 = math.exp %527 : vector<2x1xf32>
    %cst_191 = arith.constant 1.000000e+00 : f32
    %529 = vector.broadcast %cst_191 : f32 to vector<2x1xf32>
    %530 = arith.addf %529, %528 : vector<2x1xf32>
    %cst_192 = arith.constant 1.000000e+00 : f32
    %531 = vector.broadcast %cst_192 : f32 to vector<2x1xf32>
    %532 = arith.divf %531, %530 : vector<2x1xf32>
    %533 = vector.broadcast %524 : vector<2x1xf32> to vector<2x32xf32>
    %534 = arith.mulf %533, %495 : vector<2x32xf32>
    %cst_193 = arith.constant 1.000000e+00 : f32
    %535 = vector.broadcast %cst_193 : f32 to vector<2x1xf32>
    %536 = arith.subf %535, %524 : vector<2x1xf32>
    %537 = vector.broadcast %536 : vector<2x1xf32> to vector<2x32xf32>
    %538 = arith.mulf %537, %496 : vector<2x32xf32>
    %539 = arith.addf %534, %538 : vector<2x32xf32>
    %540 = vector.broadcast %532 : vector<2x1xf32> to vector<2x32xf32>
    %541 = arith.mulf %540, %495 : vector<2x32xf32>
    %cst_194 = arith.constant 1.000000e+00 : f32
    %542 = vector.broadcast %cst_194 : f32 to vector<2x1xf32>
    %543 = arith.subf %542, %532 : vector<2x1xf32>
    %544 = vector.broadcast %543 : vector<2x1xf32> to vector<2x32xf32>
    %545 = arith.mulf %544, %496 : vector<2x32xf32>
    %546 = arith.addf %541, %545 : vector<2x32xf32>
    %547 = vector.extract_strided_slice %429 {offsets = [0, 64], sizes = [2, 32], strides = [1, 1]} : vector<2x128xf32> to vector<2x32xf32>
    %548 = vector.extract_strided_slice %430 {offsets = [0, 64], sizes = [2, 32], strides = [1, 1]} : vector<2x128xf32> to vector<2x32xf32>
    %549 = vector.extract_strided_slice %431 {offsets = [0, 64], sizes = [2, 32], strides = [1, 1]} : vector<2x128xf32> to vector<2x32xf32>
    %550 = vector.extract_strided_slice %432 {offsets = [0, 64], sizes = [2, 32], strides = [1, 1]} : vector<2x128xf32> to vector<2x32xf32>
    %551 = vector.extract_strided_slice %433 {offsets = [0, 64], sizes = [2, 32], strides = [1, 1]} : vector<2x128xf32> to vector<2x32xf32>
    %552 = vector.extract_strided_slice %434 {offsets = [0, 64], sizes = [2, 32], strides = [1, 1]} : vector<2x128xf32> to vector<2x32xf32>
    %553 = arith.mulf %547, %549 : vector<2x32xf32>
    %cst_195 = arith.constant dense<0.000000e+00> : vector<2xf32>
    %554 = vector.multi_reduction <add>, %553, %cst_195 [1] : vector<2x32xf32> to vector<2xf32>
    %555 = vector.shape_cast %554 : vector<2xf32> to vector<2x1xf32>
    %cst_196 = arith.constant 0.176776692 : f32
    %556 = vector.broadcast %cst_196 : f32 to vector<2x1xf32>
    %557 = arith.mulf %555, %556 : vector<2x1xf32>
    %558 = arith.mulf %547, %550 : vector<2x32xf32>
    %cst_197 = arith.constant dense<0.000000e+00> : vector<2xf32>
    %559 = vector.multi_reduction <add>, %558, %cst_197 [1] : vector<2x32xf32> to vector<2xf32>
    %560 = vector.shape_cast %559 : vector<2xf32> to vector<2x1xf32>
    %cst_198 = arith.constant 0.176776692 : f32
    %561 = vector.broadcast %cst_198 : f32 to vector<2x1xf32>
    %562 = arith.mulf %560, %561 : vector<2x1xf32>
    %563 = arith.mulf %548, %549 : vector<2x32xf32>
    %cst_199 = arith.constant dense<0.000000e+00> : vector<2xf32>
    %564 = vector.multi_reduction <add>, %563, %cst_199 [1] : vector<2x32xf32> to vector<2xf32>
    %565 = vector.shape_cast %564 : vector<2xf32> to vector<2x1xf32>
    %cst_200 = arith.constant 0.176776692 : f32
    %566 = vector.broadcast %cst_200 : f32 to vector<2x1xf32>
    %567 = arith.mulf %565, %566 : vector<2x1xf32>
    %568 = arith.mulf %548, %550 : vector<2x32xf32>
    %cst_201 = arith.constant dense<0.000000e+00> : vector<2xf32>
    %569 = vector.multi_reduction <add>, %568, %cst_201 [1] : vector<2x32xf32> to vector<2xf32>
    %570 = vector.shape_cast %569 : vector<2xf32> to vector<2x1xf32>
    %cst_202 = arith.constant 0.176776692 : f32
    %571 = vector.broadcast %cst_202 : f32 to vector<2x1xf32>
    %572 = arith.mulf %570, %571 : vector<2x1xf32>
    %573 = arith.subf %557, %562 : vector<2x1xf32>
    %cst_203 = arith.constant 0.000000e+00 : f32
    %574 = vector.broadcast %cst_203 : f32 to vector<2x1xf32>
    %575 = arith.subf %574, %573 : vector<2x1xf32>
    %576 = math.exp %575 : vector<2x1xf32>
    %cst_204 = arith.constant 1.000000e+00 : f32
    %577 = vector.broadcast %cst_204 : f32 to vector<2x1xf32>
    %578 = arith.addf %577, %576 : vector<2x1xf32>
    %cst_205 = arith.constant 1.000000e+00 : f32
    %579 = vector.broadcast %cst_205 : f32 to vector<2x1xf32>
    %580 = arith.divf %579, %578 : vector<2x1xf32>
    %581 = arith.subf %567, %572 : vector<2x1xf32>
    %cst_206 = arith.constant 0.000000e+00 : f32
    %582 = vector.broadcast %cst_206 : f32 to vector<2x1xf32>
    %583 = arith.subf %582, %581 : vector<2x1xf32>
    %584 = math.exp %583 : vector<2x1xf32>
    %cst_207 = arith.constant 1.000000e+00 : f32
    %585 = vector.broadcast %cst_207 : f32 to vector<2x1xf32>
    %586 = arith.addf %585, %584 : vector<2x1xf32>
    %cst_208 = arith.constant 1.000000e+00 : f32
    %587 = vector.broadcast %cst_208 : f32 to vector<2x1xf32>
    %588 = arith.divf %587, %586 : vector<2x1xf32>
    %589 = vector.broadcast %580 : vector<2x1xf32> to vector<2x32xf32>
    %590 = arith.mulf %589, %551 : vector<2x32xf32>
    %cst_209 = arith.constant 1.000000e+00 : f32
    %591 = vector.broadcast %cst_209 : f32 to vector<2x1xf32>
    %592 = arith.subf %591, %580 : vector<2x1xf32>
    %593 = vector.broadcast %592 : vector<2x1xf32> to vector<2x32xf32>
    %594 = arith.mulf %593, %552 : vector<2x32xf32>
    %595 = arith.addf %590, %594 : vector<2x32xf32>
    %596 = vector.broadcast %588 : vector<2x1xf32> to vector<2x32xf32>
    %597 = arith.mulf %596, %551 : vector<2x32xf32>
    %cst_210 = arith.constant 1.000000e+00 : f32
    %598 = vector.broadcast %cst_210 : f32 to vector<2x1xf32>
    %599 = arith.subf %598, %588 : vector<2x1xf32>
    %600 = vector.broadcast %599 : vector<2x1xf32> to vector<2x32xf32>
    %601 = arith.mulf %600, %552 : vector<2x32xf32>
    %602 = arith.addf %597, %601 : vector<2x32xf32>
    %603 = vector.extract_strided_slice %429 {offsets = [0, 96], sizes = [2, 32], strides = [1, 1]} : vector<2x128xf32> to vector<2x32xf32>
    %604 = vector.extract_strided_slice %430 {offsets = [0, 96], sizes = [2, 32], strides = [1, 1]} : vector<2x128xf32> to vector<2x32xf32>
    %605 = vector.extract_strided_slice %431 {offsets = [0, 96], sizes = [2, 32], strides = [1, 1]} : vector<2x128xf32> to vector<2x32xf32>
    %606 = vector.extract_strided_slice %432 {offsets = [0, 96], sizes = [2, 32], strides = [1, 1]} : vector<2x128xf32> to vector<2x32xf32>
    %607 = vector.extract_strided_slice %433 {offsets = [0, 96], sizes = [2, 32], strides = [1, 1]} : vector<2x128xf32> to vector<2x32xf32>
    %608 = vector.extract_strided_slice %434 {offsets = [0, 96], sizes = [2, 32], strides = [1, 1]} : vector<2x128xf32> to vector<2x32xf32>
    %609 = arith.mulf %603, %605 : vector<2x32xf32>
    %cst_211 = arith.constant dense<0.000000e+00> : vector<2xf32>
    %610 = vector.multi_reduction <add>, %609, %cst_211 [1] : vector<2x32xf32> to vector<2xf32>
    %611 = vector.shape_cast %610 : vector<2xf32> to vector<2x1xf32>
    %cst_212 = arith.constant 0.176776692 : f32
    %612 = vector.broadcast %cst_212 : f32 to vector<2x1xf32>
    %613 = arith.mulf %611, %612 : vector<2x1xf32>
    %614 = arith.mulf %603, %606 : vector<2x32xf32>
    %cst_213 = arith.constant dense<0.000000e+00> : vector<2xf32>
    %615 = vector.multi_reduction <add>, %614, %cst_213 [1] : vector<2x32xf32> to vector<2xf32>
    %616 = vector.shape_cast %615 : vector<2xf32> to vector<2x1xf32>
    %cst_214 = arith.constant 0.176776692 : f32
    %617 = vector.broadcast %cst_214 : f32 to vector<2x1xf32>
    %618 = arith.mulf %616, %617 : vector<2x1xf32>
    %619 = arith.mulf %604, %605 : vector<2x32xf32>
    %cst_215 = arith.constant dense<0.000000e+00> : vector<2xf32>
    %620 = vector.multi_reduction <add>, %619, %cst_215 [1] : vector<2x32xf32> to vector<2xf32>
    %621 = vector.shape_cast %620 : vector<2xf32> to vector<2x1xf32>
    %cst_216 = arith.constant 0.176776692 : f32
    %622 = vector.broadcast %cst_216 : f32 to vector<2x1xf32>
    %623 = arith.mulf %621, %622 : vector<2x1xf32>
    %624 = arith.mulf %604, %606 : vector<2x32xf32>
    %cst_217 = arith.constant dense<0.000000e+00> : vector<2xf32>
    %625 = vector.multi_reduction <add>, %624, %cst_217 [1] : vector<2x32xf32> to vector<2xf32>
    %626 = vector.shape_cast %625 : vector<2xf32> to vector<2x1xf32>
    %cst_218 = arith.constant 0.176776692 : f32
    %627 = vector.broadcast %cst_218 : f32 to vector<2x1xf32>
    %628 = arith.mulf %626, %627 : vector<2x1xf32>
    %629 = arith.subf %613, %618 : vector<2x1xf32>
    %cst_219 = arith.constant 0.000000e+00 : f32
    %630 = vector.broadcast %cst_219 : f32 to vector<2x1xf32>
    %631 = arith.subf %630, %629 : vector<2x1xf32>
    %632 = math.exp %631 : vector<2x1xf32>
    %cst_220 = arith.constant 1.000000e+00 : f32
    %633 = vector.broadcast %cst_220 : f32 to vector<2x1xf32>
    %634 = arith.addf %633, %632 : vector<2x1xf32>
    %cst_221 = arith.constant 1.000000e+00 : f32
    %635 = vector.broadcast %cst_221 : f32 to vector<2x1xf32>
    %636 = arith.divf %635, %634 : vector<2x1xf32>
    %637 = arith.subf %623, %628 : vector<2x1xf32>
    %cst_222 = arith.constant 0.000000e+00 : f32
    %638 = vector.broadcast %cst_222 : f32 to vector<2x1xf32>
    %639 = arith.subf %638, %637 : vector<2x1xf32>
    %640 = math.exp %639 : vector<2x1xf32>
    %cst_223 = arith.constant 1.000000e+00 : f32
    %641 = vector.broadcast %cst_223 : f32 to vector<2x1xf32>
    %642 = arith.addf %641, %640 : vector<2x1xf32>
    %cst_224 = arith.constant 1.000000e+00 : f32
    %643 = vector.broadcast %cst_224 : f32 to vector<2x1xf32>
    %644 = arith.divf %643, %642 : vector<2x1xf32>
    %645 = vector.broadcast %636 : vector<2x1xf32> to vector<2x32xf32>
    %646 = arith.mulf %645, %607 : vector<2x32xf32>
    %cst_225 = arith.constant 1.000000e+00 : f32
    %647 = vector.broadcast %cst_225 : f32 to vector<2x1xf32>
    %648 = arith.subf %647, %636 : vector<2x1xf32>
    %649 = vector.broadcast %648 : vector<2x1xf32> to vector<2x32xf32>
    %650 = arith.mulf %649, %608 : vector<2x32xf32>
    %651 = arith.addf %646, %650 : vector<2x32xf32>
    %652 = vector.broadcast %644 : vector<2x1xf32> to vector<2x32xf32>
    %653 = arith.mulf %652, %607 : vector<2x32xf32>
    %cst_226 = arith.constant 1.000000e+00 : f32
    %654 = vector.broadcast %cst_226 : f32 to vector<2x1xf32>
    %655 = arith.subf %654, %644 : vector<2x1xf32>
    %656 = vector.broadcast %655 : vector<2x1xf32> to vector<2x32xf32>
    %657 = arith.mulf %656, %608 : vector<2x32xf32>
    %658 = arith.addf %653, %657 : vector<2x32xf32>
    %659 = tpu.concatenate %483, %539, %595, %651 in 1 : vector<2x32xf32>, vector<2x32xf32>, vector<2x32xf32>, vector<2x32xf32> -> vector<2x128xf32>
    %660 = tpu.concatenate %490, %546, %602, %658 in 1 : vector<2x32xf32>, vector<2x32xf32>, vector<2x32xf32>, vector<2x32xf32> -> vector<2x128xf32>
    %661 = tpu.concatenate %659, %660 in 0 : vector<2x128xf32>, vector<2x128xf32> -> vector<4x128xf32>
    %c1_227 = arith.constant 1 : index
    %c0_228 = arith.constant 0 : index
    %c0_229 = arith.constant 0 : index
    %662 = vector.load %arg8[%c1_227, %c0_228, %c0_229] : memref<2x128x128xf32, #tpu.memory_space<vmem>>, vector<1x128x128xf32>
    %663 = vector.shape_cast %662 : vector<1x128x128xf32> to vector<128x128xf32>
    %cst_230 = arith.constant dense<0.000000e+00> : vector<4x128xf32>
    %664 = tpu.matmul %661, %663, %cst_230 {dimension_numbers = #tpu.dot_dimension_numbers<[1], [0], [0], [1], [0, 0, 1, 1], [], []>} : vector<4x128xf32>, vector<128x128xf32>, vector<4x128xf32> -> vector<4x128xf32>
    %665 = arith.addf %392, %664 : vector<4x128xf32>
    %c1_231 = arith.constant 1 : index
    %c0_232 = arith.constant 0 : index
    %c0_233 = arith.constant 0 : index
    %666 = vector.load %arg9[%c1_231, %c0_232, %c0_233] : memref<2x1x128xf32, #tpu.memory_space<vmem>>, vector<1x1x128xf32>
    %667 = vector.shape_cast %666 : vector<1x1x128xf32> to vector<1x128xf32>
    %668 = vector.broadcast %667 : vector<1x128xf32> to vector<4x128xf32>
    %669 = arith.addf %665, %668 : vector<4x128xf32>
    %c1_234 = arith.constant 1 : index
    %c0_235 = arith.constant 0 : index
    %c0_236 = arith.constant 0 : index
    %670 = vector.load %arg12[%c1_234, %c0_235, %c0_236] : memref<2x1x128xf32, #tpu.memory_space<vmem>>, vector<1x1x128xf32>
    %671 = vector.shape_cast %670 : vector<1x1x128xf32> to vector<1x128xf32>
    %c1_237 = arith.constant 1 : index
    %c0_238 = arith.constant 0 : index
    %c0_239 = arith.constant 0 : index
    %672 = vector.load %arg13[%c1_237, %c0_238, %c0_239] : memref<2x1x128xf32, #tpu.memory_space<vmem>>, vector<1x1x128xf32>
    %673 = vector.shape_cast %672 : vector<1x1x128xf32> to vector<1x128xf32>
    %cst_240 = arith.constant dense<0.000000e+00> : vector<4xf32>
    %674 = vector.multi_reduction <add>, %669, %cst_240 [1] : vector<4x128xf32> to vector<4xf32>
    %675 = vector.shape_cast %674 : vector<4xf32> to vector<4x1xf32>
    %676 = arith.mulf %669, %669 : vector<4x128xf32>
    %cst_241 = arith.constant dense<0.000000e+00> : vector<4xf32>
    %677 = vector.multi_reduction <add>, %676, %cst_241 [1] : vector<4x128xf32> to vector<4xf32>
    %678 = vector.shape_cast %677 : vector<4xf32> to vector<4x1xf32>
    %cst_242 = arith.constant 7.812500e-03 : f32
    %679 = vector.broadcast %cst_242 : f32 to vector<4x1xf32>
    %680 = arith.mulf %675, %679 : vector<4x1xf32>
    %cst_243 = arith.constant 7.812500e-03 : f32
    %681 = vector.broadcast %cst_243 : f32 to vector<4x1xf32>
    %682 = arith.mulf %678, %681 : vector<4x1xf32>
    %683 = arith.mulf %680, %680 : vector<4x1xf32>
    %684 = arith.subf %682, %683 : vector<4x1xf32>
    %685 = vector.broadcast %680 : vector<4x1xf32> to vector<4x128xf32>
    %686 = arith.subf %669, %685 : vector<4x128xf32>
    %cst_244 = arith.constant 9.99999974E-6 : f32
    %687 = vector.broadcast %cst_244 : f32 to vector<4x1xf32>
    %688 = arith.addf %684, %687 : vector<4x1xf32>
    %689 = math.rsqrt %688 : vector<4x1xf32>
    %690 = vector.broadcast %689 : vector<4x1xf32> to vector<4x128xf32>
    %691 = arith.mulf %686, %690 : vector<4x128xf32>
    %692 = vector.broadcast %671 : vector<1x128xf32> to vector<4x128xf32>
    %693 = arith.mulf %691, %692 : vector<4x128xf32>
    %694 = vector.broadcast %673 : vector<1x128xf32> to vector<4x128xf32>
    %695 = arith.addf %693, %694 : vector<4x128xf32>
    %c1_245 = arith.constant 1 : index
    %c0_246 = arith.constant 0 : index
    %c0_247 = arith.constant 0 : index
    %696 = vector.load %arg14[%c1_245, %c0_246, %c0_247] : memref<2x128x512xf32, #tpu.memory_space<vmem>>, vector<1x128x512xf32>
    %697 = vector.shape_cast %696 : vector<1x128x512xf32> to vector<128x512xf32>
    %cst_248 = arith.constant dense<0.000000e+00> : vector<4x512xf32>
    %698 = tpu.matmul %695, %697, %cst_248 {dimension_numbers = #tpu.dot_dimension_numbers<[1], [0], [0], [1], [0, 0, 1, 1], [], []>} : vector<4x128xf32>, vector<128x512xf32>, vector<4x512xf32> -> vector<4x512xf32>
    %c1_249 = arith.constant 1 : index
    %c0_250 = arith.constant 0 : index
    %c0_251 = arith.constant 0 : index
    %699 = vector.load %arg15[%c1_249, %c0_250, %c0_251] : memref<2x1x512xf32, #tpu.memory_space<vmem>>, vector<1x1x512xf32>
    %700 = vector.shape_cast %699 : vector<1x1x512xf32> to vector<1x512xf32>
    %701 = vector.broadcast %700 : vector<1x512xf32> to vector<4x512xf32>
    %702 = arith.addf %698, %701 : vector<4x512xf32>
    %cst_252 = arith.constant 5.000000e-01 : f32
    %703 = vector.broadcast %cst_252 : f32 to vector<4x512xf32>
    %704 = arith.mulf %703, %702 : vector<4x512xf32>
    %cst_253 = arith.constant 0.707106769 : f32
    %705 = vector.broadcast %cst_253 : f32 to vector<4x512xf32>
    %706 = arith.mulf %702, %705 : vector<4x512xf32>
    %cst_254 = arith.constant 0.000000e+00 : f32
    %707 = vector.broadcast %cst_254 : f32 to vector<4x512xf32>
    %708 = arith.cmpf oge, %706, %707 : vector<4x512xf32>
    %cst_255 = arith.constant 1.000000e+00 : f32
    %cst_256 = arith.constant -1.000000e+00 : f32
    %709 = vector.broadcast %cst_255 : f32 to vector<4x512xf32>
    %710 = vector.broadcast %cst_256 : f32 to vector<4x512xf32>
    %711 = arith.select %708, %709, %710 : vector<4x512xi1>, vector<4x512xf32>
    %712 = math.absf %706 : vector<4x512xf32>
    %cst_257 = arith.constant 0.327591091 : f32
    %713 = vector.broadcast %cst_257 : f32 to vector<4x512xf32>
    %714 = arith.mulf %713, %712 : vector<4x512xf32>
    %cst_258 = arith.constant 1.000000e+00 : f32
    %715 = vector.broadcast %cst_258 : f32 to vector<4x512xf32>
    %716 = arith.addf %715, %714 : vector<4x512xf32>
    %cst_259 = arith.constant 1.000000e+00 : f32
    %717 = vector.broadcast %cst_259 : f32 to vector<4x512xf32>
    %718 = arith.divf %717, %716 : vector<4x512xf32>
    %cst_260 = arith.constant 1.06140542 : f32
    %719 = vector.broadcast %cst_260 : f32 to vector<4x512xf32>
    %720 = arith.mulf %719, %718 : vector<4x512xf32>
    %cst_261 = arith.constant -1.45315206 : f32
    %721 = vector.broadcast %cst_261 : f32 to vector<4x512xf32>
    %722 = arith.addf %720, %721 : vector<4x512xf32>
    %723 = arith.mulf %722, %718 : vector<4x512xf32>
    %cst_262 = arith.constant 1.42141378 : f32
    %724 = vector.broadcast %cst_262 : f32 to vector<4x512xf32>
    %725 = arith.addf %723, %724 : vector<4x512xf32>
    %726 = arith.mulf %725, %718 : vector<4x512xf32>
    %cst_263 = arith.constant -0.284496725 : f32
    %727 = vector.broadcast %cst_263 : f32 to vector<4x512xf32>
    %728 = arith.addf %726, %727 : vector<4x512xf32>
    %729 = arith.mulf %728, %718 : vector<4x512xf32>
    %cst_264 = arith.constant 0.254829586 : f32
    %730 = vector.broadcast %cst_264 : f32 to vector<4x512xf32>
    %731 = arith.addf %729, %730 : vector<4x512xf32>
    %732 = arith.mulf %731, %718 : vector<4x512xf32>
    %cst_265 = arith.constant 0.000000e+00 : f32
    %733 = vector.broadcast %cst_265 : f32 to vector<4x512xf32>
    %734 = arith.subf %733, %712 : vector<4x512xf32>
    %735 = arith.mulf %734, %712 : vector<4x512xf32>
    %736 = math.exp %735 : vector<4x512xf32>
    %737 = arith.mulf %732, %736 : vector<4x512xf32>
    %cst_266 = arith.constant 1.000000e+00 : f32
    %738 = vector.broadcast %cst_266 : f32 to vector<4x512xf32>
    %739 = arith.subf %738, %737 : vector<4x512xf32>
    %740 = arith.mulf %711, %739 : vector<4x512xf32>
    %cst_267 = arith.constant 1.000000e+00 : f32
    %741 = vector.broadcast %cst_267 : f32 to vector<4x512xf32>
    %742 = arith.addf %741, %740 : vector<4x512xf32>
    %743 = arith.mulf %704, %742 : vector<4x512xf32>
    %c1_268 = arith.constant 1 : index
    %c0_269 = arith.constant 0 : index
    %c0_270 = arith.constant 0 : index
    %744 = vector.load %arg16[%c1_268, %c0_269, %c0_270] : memref<2x512x128xf32, #tpu.memory_space<vmem>>, vector<1x512x128xf32>
    %745 = vector.shape_cast %744 : vector<1x512x128xf32> to vector<512x128xf32>
    %cst_271 = arith.constant dense<0.000000e+00> : vector<4x128xf32>
    %746 = tpu.matmul %743, %745, %cst_271 {dimension_numbers = #tpu.dot_dimension_numbers<[1], [0], [0], [1], [0, 0, 1, 1], [], []>} : vector<4x512xf32>, vector<512x128xf32>, vector<4x128xf32> -> vector<4x128xf32>
    %747 = arith.addf %669, %746 : vector<4x128xf32>
    %c1_272 = arith.constant 1 : index
    %c0_273 = arith.constant 0 : index
    %c0_274 = arith.constant 0 : index
    %748 = vector.load %arg17[%c1_272, %c0_273, %c0_274] : memref<2x1x128xf32, #tpu.memory_space<vmem>>, vector<1x1x128xf32>
    %749 = vector.shape_cast %748 : vector<1x1x128xf32> to vector<1x128xf32>
    %750 = vector.broadcast %749 : vector<1x128xf32> to vector<4x128xf32>
    %751 = arith.addf %747, %750 : vector<4x128xf32>
    %c0_275 = arith.constant 0 : index
    %c0_276 = arith.constant 0 : index
    %752 = vector.load %arg18[%c0_275, %c0_276] : memref<4x128xf32, #tpu.memory_space<vmem>>, vector<4x128xf32>
    tpu.vector_store %arg18[%c0_275, %c0_276], %751 {strides = array<i32>} : memref<4x128xf32, #tpu.memory_space<vmem>>, vector<4x128xf32>,
    return
  }
}

</mosaic_0001>

<llo_original>
// kernel: modality_specific_encoder.1
$region0: #{modality_specific_encoder.1}
  #allocation0 [shape = 'u32[]', space=smem, size = 0x4, offset = 0x4, fixed_abs, tag = 'smem constant byte address 0x4 - core index']
  #allocation1 [shape = 'u32[72,128]{1,0:T(1,128)}', space=vmem, size = 0x9000, scoped, tag = 'internal scratch']
  %s0 = inlined_call_operand.hbm [shape: f32[2,32], index: 0, kind: input, shape index: {}]
  %s1 = inlined_call_operand.hbm [shape: f32[32,128], index: 1, kind: input, shape index: {}]
  %s2 = inlined_call_operand.vmem [shape: f32[1,128], index: 2, kind: input, shape index: {}]
  %s3 = inlined_call_operand.vmem [shape: f32[1,128], index: 3, kind: input, shape index: {}]
  %s4 = inlined_call_operand.vmem [shape: f32[1,128], index: 4, kind: input, shape index: {}]
  %s5 = inlined_call_operand.hbm [shape: f32[1,128], index: 5, kind: input, shape index: {}]
  %s6 = inlined_call_operand.hbm [shape: f32[2,128,384], index: 6, kind: input, shape index: {}]
  %s7 = inlined_call_operand.hbm [shape: f32[2,1,384], index: 7, kind: input, shape index: {}]
  %s8 = inlined_call_operand.hbm [shape: f32[2,128,128], index: 8, kind: input, shape index: {}]
  %s9 = inlined_call_operand.vmem [shape: f32[2,1,128], index: 9, kind: input, shape index: {}]
  %s10 = inlined_call_operand.vmem [shape: f32[2,1,128], index: 10, kind: input, shape index: {}]
  %s11 = inlined_call_operand.hbm [shape: f32[2,1,128], index: 11, kind: input, shape index: {}]
  %s12 = inlined_call_operand.vmem [shape: f32[2,1,128], index: 12, kind: input, shape index: {}]
  %s13 = inlined_call_operand.hbm [shape: f32[2,1,128], index: 13, kind: input, shape index: {}]
  %s14 = inlined_call_operand.hbm [shape: f32[2,128,512], index: 14, kind: input, shape index: {}]
  %s15 = inlined_call_operand.hbm [shape: f32[2,1,512], index: 15, kind: input, shape index: {}]
  %s16 = inlined_call_operand.hbm [shape: f32[2,512,128], index: 16, kind: input, shape index: {}]
  %s17 = inlined_call_operand.hbm [shape: f32[2,1,128], index: 17, kind: input, shape index: {}]
  %s18 = inlined_call_operand.vmem [shape: f32[4,128], index: 18, kind: output, shape index: {}]
  %s19 = sld [smem:[#allocation0]]
  $region130: #{modality_specific_encoder.1} parent=0
    _
  %s21 = ssub.s32 1, %s19
  %s22 = scalar_select 0, %s21, %s19
  $region1: #{modality_specific_encoder.1} parent=0
    #allocation2 [shape = 'u8[1024]{0}', space=vmem, size = 0x400, scoped, tag = 'input window, operand 0, single buffered']
    #allocation3 [shape = 's32[1]{0}', space=sflag, size = 0x4, scoped, tag = 'scoped memory for modality_specific_encoder.1']
    #allocation4 [shape = 'u8[16384]{0}', space=vmem, size = 0x4000, scoped, tag = 'input window, operand 1, single buffered']
    #allocation5 [shape = 's32[1]{0}', space=sflag, size = 0x4, scoped, tag = 'scoped memory for modality_specific_encoder.1']
    #allocation6 [shape = 'u8[512]{0}', space=vmem, size = 0x400, scoped, tag = 'input window, operand 5, single buffered']
    #allocation7 [shape = 'u8[393216]{0}', space=vmem, size = 0x60000, scoped, tag = 'input window, operand 6, single buffered']
    #allocation8 [shape = 's32[1]{0}', space=sflag, size = 0x4, scoped, tag = 'scoped memory for modality_specific_encoder.1']
    #allocation9 [shape = 'u8[3072]{0}', space=vmem, size = 0xc00, scoped, tag = 'input window, operand 7, single buffered']
    #allocation10 [shape = 'u8[131072]{0}', space=vmem, size = 0x20000, scoped, tag = 'input window, operand 8, single buffered']
    #allocation11 [shape = 's32[1]{0}', space=sflag, size = 0x4, scoped, tag = 'scoped memory for modality_specific_encoder.1']
    #allocation12 [shape = 'u8[1024]{0}', space=vmem, size = 0x400, scoped, tag = 'input window, operand 11, single buffered']
    #allocation13 [shape = 'u8[1024]{0}', space=vmem, size = 0x400, scoped, tag = 'input window, operand 13, single buffered']
    #allocation14 [shape = 's32[1]{0}', space=sflag, size = 0x4, scoped, tag = 'scoped memory for modality_specific_encoder.1']
    #allocation15 [shape = 'u8[524288]{0}', space=vmem, size = 0x80000, scoped, tag = 'input window, operand 14, single buffered']
    #allocation16 [shape = 'u8[4096]{0}', space=vmem, size = 0x1000, scoped, tag = 'input window, operand 15, single buffered']
    #allocation17 [shape = 's32[1]{0}', space=sflag, size = 0x4, scoped, tag = 'scoped memory for modality_specific_encoder.1']
    #allocation18 [shape = 'u8[524288]{0}', space=vmem, size = 0x80000, scoped, tag = 'input window, operand 16, single buffered']
    #allocation19 [shape = 'u8[1024]{0}', space=vmem, size = 0x400, scoped, tag = 'input window, operand 17, single buffered']
    #allocation20 [shape = 's32[1]{0}', space=sflag, size = 0x4, scoped, tag = 'scoped memory for modality_specific_encoder.1']
    %23 = vsyncpa [#allocation3], 0
    %24 = vsyncpa [#allocation5], 0
    %25 = vsyncpa [#allocation8], 0
    %26 = vsyncpa [#allocation11], 0
    %27 = vsyncpa [#allocation14], 0
    %28 = vsyncpa [#allocation17], 0
    %29 = vsyncpa [#allocation20], 0
    // Predicated region
    $region2: #{modality_specific_encoder.1} parent=1 // pred_check
      _
    $region3: #{modality_specific_encoder.1} parent=1 // pred_check_branch
      %31 = sbr.rel (0) target = $region5
    $region4: #{modality_specific_encoder.1} parent=1 // pred_region
      %33 = vsyncadd [#allocation3], 0
      %s35 = sshll.u32 %s0, 4
      %s36 = int_to_ptr.hbm [resolvable:$true] %s35
      %s37 = sshll.u32 [#allocation2], 4
      %s38 = int_to_ptr.vmem [resolvable:$true] %s37
      %40 = dma.hbm_to_vmem [thread:$0]  %s36, 32, %s38, [#allocation3]
    $region5: #{modality_specific_encoder.1} parent=1 // pred_fallthru
      _
    // Predicated region
    $region6: #{modality_specific_encoder.1} parent=1 // pred_check
      _
    $region7: #{modality_specific_encoder.1} parent=1 // pred_check_branch
      %42 = sbr.rel (0) target = $region9
    $region8: #{modality_specific_encoder.1} parent=1 // pred_region
      %44 = vsyncadd [#allocation5], 0
      %s45 = sshll.u32 %s1, 4
      %s46 = int_to_ptr.hbm [resolvable:$true] %s45
      %s47 = sshll.u32 [#allocation4], 4
      %s48 = int_to_ptr.vmem [resolvable:$true] %s47
      %53 = dma.hbm_to_vmem [thread:$0]  %s46, 512, %s48, [#allocation5], 128, 128, 8
    $region9: #{modality_specific_encoder.1} parent=1 // pred_fallthru
      _
    // Predicated region
    $region10: #{modality_specific_encoder.1} parent=1 // pred_check
      _
    $region11: #{modality_specific_encoder.1} parent=1 // pred_check_branch
      %55 = sbr.rel (0) target = $region13
    $region12: #{modality_specific_encoder.1} parent=1 // pred_region
      _
    $region13: #{modality_specific_encoder.1} parent=1 // pred_fallthru
      _
    // Predicated region
    $region14: #{modality_specific_encoder.1} parent=1 // pred_check
      _
    $region15: #{modality_specific_encoder.1} parent=1 // pred_check_branch
      %57 = sbr.rel (0) target = $region17
    $region16: #{modality_specific_encoder.1} parent=1 // pred_region
      _
    $region17: #{modality_specific_encoder.1} parent=1 // pred_fallthru
      _
    // Predicated region
    $region18: #{modality_specific_encoder.1} parent=1 // pred_check
      _
    $region19: #{modality_specific_encoder.1} parent=1 // pred_check_branch
      %59 = sbr.rel (0) target = $region21
    $region20: #{modality_specific_encoder.1} parent=1 // pred_region
      _
    $region21: #{modality_specific_encoder.1} parent=1 // pred_fallthru
      _
    // Predicated region
    $region22: #{modality_specific_encoder.1} parent=1 // pred_check
      _
    $region23: #{modality_specific_encoder.1} parent=1 // pred_check_branch
      %61 = sbr.rel (0) target = $region25
    $region24: #{modality_specific_encoder.1} parent=1 // pred_region
      %63 = vsyncadd [#allocation5], 0
      %s65 = sshll.u32 %s5, 4
      %s66 = int_to_ptr.hbm [resolvable:$true] %s65
      %s67 = sshll.u32 [#allocation6], 4
      %s68 = int_to_ptr.vmem [resolvable:$true] %s67
      %70 = dma.hbm_to_vmem [thread:$0]  %s66, 16, %s68, [#allocation5]
    $region25: #{modality_specific_encoder.1} parent=1 // pred_fallthru
      _
    // Predicated region
    $region26: #{modality_specific_encoder.1} parent=1 // pred_check
      _
    $region27: #{modality_specific_encoder.1} parent=1 // pred_check_branch
      %72 = sbr.rel (0) target = $region29
    $region28: #{modality_specific_encoder.1} parent=1 // pred_region
      %74 = vsyncadd [#allocation8], 0
      %s75 = sshll.u32 %s6, 4
      %s76 = int_to_ptr.hbm [resolvable:$true] %s75
      %s77 = sshll.u32 [#allocation7], 4
      %s78 = int_to_ptr.vmem [resolvable:$true] %s77
      %83 = dma.hbm_to_vmem [thread:$0]  %s76, 12288, %s78, [#allocation8], 384, 384, 24
    $region29: #{modality_specific_encoder.1} parent=1 // pred_fallthru
      _
    // Predicated region
    $region30: #{modality_specific_encoder.1} parent=1 // pred_check
      _
    $region31: #{modality_specific_encoder.1} parent=1 // pred_check_branch
      %85 = sbr.rel (0) target = $region33
    $region32: #{modality_specific_encoder.1} parent=1 // pred_region
      %87 = vsyncadd [#allocation8], 0
      %s88 = sshll.u32 %s7, 4
      %s89 = int_to_ptr.hbm [resolvable:$true] %s88
      %s90 = sshll.u32 [#allocation9], 4
      %s91 = int_to_ptr.vmem [resolvable:$true] %s90
      %96 = dma.hbm_to_vmem [thread:$0]  %s89, 96, %s91, [#allocation8], 48, 48, 3
    $region33: #{modality_specific_encoder.1} parent=1 // pred_fallthru
      _
    // Predicated region
    $region34: #{modality_specific_encoder.1} parent=1 // pred_check
      _
    $region35: #{modality_specific_encoder.1} parent=1 // pred_check_branch
      %98 = sbr.rel (0) target = $region37
    $region36: #{modality_specific_encoder.1} parent=1 // pred_region
      %100 = vsyncadd [#allocation11], 0
      %s101 = sshll.u32 %s8, 4
      %s102 = int_to_ptr.hbm [resolvable:$true] %s101
      %s103 = sshll.u32 [#allocation10], 4
      %s104 = int_to_ptr.vmem [resolvable:$true] %s103
      %109 = dma.hbm_to_vmem [thread:$0]  %s102, 4096, %s104, [#allocation11], 128, 128, 8
    $region37: #{modality_specific_encoder.1} parent=1 // pred_fallthru
      _
    // Predicated region
    $region38: #{modality_specific_encoder.1} parent=1 // pred_check
      _
    $region39: #{modality_specific_encoder.1} parent=1 // pred_check_branch
      %111 = sbr.rel (0) target = $region41
    $region40: #{modality_specific_encoder.1} parent=1 // pred_region
      _
    $region41: #{modality_specific_encoder.1} parent=1 // pred_fallthru
      _
    // Predicated region
    $region42: #{modality_specific_encoder.1} parent=1 // pred_check
      _
    $region43: #{modality_specific_encoder.1} parent=1 // pred_check_branch
      %113 = sbr.rel (0) target = $region45
    $region44: #{modality_specific_encoder.1} parent=1 // pred_region
      _
    $region45: #{modality_specific_encoder.1} parent=1 // pred_fallthru
      _
    // Predicated region
    $region46: #{modality_specific_encoder.1} parent=1 // pred_check
      _
    $region47: #{modality_specific_encoder.1} parent=1 // pred_check_branch
      %115 = sbr.rel (0) target = $region49
    $region48: #{modality_specific_encoder.1} parent=1 // pred_region
      %117 = vsyncadd [#allocation11], 0
      %s118 = sshll.u32 %s11, 4
      %s119 = int_to_ptr.hbm [resolvable:$true] %s118
      %s120 = sshll.u32 [#allocation12], 4
      %s121 = int_to_ptr.vmem [resolvable:$true] %s120
      %126 = dma.hbm_to_vmem [thread:$0]  %s119, 32, %s121, [#allocation11], 16, 16, 1
    $region49: #{modality_specific_encoder.1} parent=1 // pred_fallthru
      _
    // Predicated region
    $region50: #{modality_specific_encoder.1} parent=1 // pred_check
      _
    $region51: #{modality_specific_encoder.1} parent=1 // pred_check_branch
      %128 = sbr.rel (0) target = $region53
    $region52: #{modality_specific_encoder.1} parent=1 // pred_region
      _
    $region53: #{modality_specific_encoder.1} parent=1 // pred_fallthru
      _
    // Predicated region
    $region54: #{modality_specific_encoder.1} parent=1 // pred_check
      _
    $region55: #{modality_specific_encoder.1} parent=1 // pred_check_branch
      %130 = sbr.rel (0) target = $region57
    $region56: #{modality_specific_encoder.1} parent=1 // pred_region
      %132 = vsyncadd [#allocation14], 0
      %s133 = sshll.u32 %s13, 4
      %s134 = int_to_ptr.hbm [resolvable:$true] %s133
      %s135 = sshll.u32 [#allocation13], 4
      %s136 = int_to_ptr.vmem [resolvable:$true] %s135
      %141 = dma.hbm_to_vmem [thread:$0]  %s134, 32, %s136, [#allocation14], 16, 16, 1
    $region57: #{modality_specific_encoder.1} parent=1 // pred_fallthru
      _
    // Predicated region
    $region58: #{modality_specific_encoder.1} parent=1 // pred_check
      _
    $region59: #{modality_specific_encoder.1} parent=1 // pred_check_branch
      %143 = sbr.rel (0) target = $region61
    $region60: #{modality_specific_encoder.1} parent=1 // pred_region
      %145 = vsyncadd [#allocation14], 0
      %s146 = sshll.u32 %s14, 4
      %s147 = int_to_ptr.hbm [resolvable:$true] %s146
      %s148 = sshll.u32 [#allocation15], 4
      %s149 = int_to_ptr.vmem [resolvable:$true] %s148
      %154 = dma.hbm_to_vmem [thread:$0]  %s147, 16384, %s149, [#allocation14], 512, 512, 32
    $region61: #{modality_specific_encoder.1} parent=1 // pred_fallthru
      _
    // Predicated region
    $region62: #{modality_specific_encoder.1} parent=1 // pred_check
      _
    $region63: #{modality_specific_encoder.1} parent=1 // pred_check_branch
      %156 = sbr.rel (0) target = $region65
    $region64: #{modality_specific_encoder.1} parent=1 // pred_region
      %158 = vsyncadd [#allocation17], 0
      %s159 = sshll.u32 %s15, 4
      %s160 = int_to_ptr.hbm [resolvable:$true] %s159
      %s161 = sshll.u32 [#allocation16], 4
      %s162 = int_to_ptr.vmem [resolvable:$true] %s161
      %167 = dma.hbm_to_vmem [thread:$0]  %s160, 128, %s162, [#allocation17], 64, 64, 4
    $region65: #{modality_specific_encoder.1} parent=1 // pred_fallthru
      _
    // Predicated region
    $region66: #{modality_specific_encoder.1} parent=1 // pred_check
      _
    $region67: #{modality_specific_encoder.1} parent=1 // pred_check_branch
      %169 = sbr.rel (0) target = $region69
    $region68: #{modality_specific_encoder.1} parent=1 // pred_region
      %171 = vsyncadd [#allocation17], 0
      %s172 = sshll.u32 %s16, 4
      %s173 = int_to_ptr.hbm [resolvable:$true] %s172
      %s174 = sshll.u32 [#allocation18], 4
      %s175 = int_to_ptr.vmem [resolvable:$true] %s174
      %180 = dma.hbm_to_vmem [thread:$0]  %s173, 16384, %s175, [#allocation17], 128, 128, 8
    $region69: #{modality_specific_encoder.1} parent=1 // pred_fallthru
      _
    // Predicated region
    $region70: #{modality_specific_encoder.1} parent=1 // pred_check
      _
    $region71: #{modality_specific_encoder.1} parent=1 // pred_check_branch
      %182 = sbr.rel (0) target = $region73
    $region72: #{modality_specific_encoder.1} parent=1 // pred_region
      %184 = vsyncadd [#allocation20], 0
      %s185 = sshll.u32 %s17, 4
      %s186 = int_to_ptr.hbm [resolvable:$true] %s185
      %s187 = sshll.u32 [#allocation19], 4
      %s188 = int_to_ptr.vmem [resolvable:$true] %s187
      %193 = dma.hbm_to_vmem [thread:$0]  %s186, 32, %s188, [#allocation20], 16, 16, 1
    $region73: #{modality_specific_encoder.1} parent=1 // pred_fallthru
      _
    // Predicated region
    $region74: #{modality_specific_encoder.1} parent=1 // pred_check
      _
    $region75: #{modality_specific_encoder.1} parent=1 // pred_check_branch
      %195 = sbr.rel (0) target = $region77
    $region76: #{modality_specific_encoder.1} parent=1 // pred_region
      %197 = dma.done [#allocation3], 32
    $region77: #{modality_specific_encoder.1} parent=1 // pred_fallthru
      _
    // Predicated region
    $region78: #{modality_specific_encoder.1} parent=1 // pred_check
      _
    $region79: #{modality_specific_encoder.1} parent=1 // pred_check_branch
      %199 = sbr.rel (0) target = $region81
    $region80: #{modality_specific_encoder.1} parent=1 // pred_region
      %201 = dma.done [#allocation5], 512
    $region81: #{modality_specific_encoder.1} parent=1 // pred_fallthru
      _
    // Predicated region
    $region82: #{modality_specific_encoder.1} parent=1 // pred_check
      _
    $region83: #{modality_specific_encoder.1} parent=1 // pred_check_branch
      %203 = sbr.rel (0) target = $region85
    $region84: #{modality_specific_encoder.1} parent=1 // pred_region
      %205 = dma.done [#allocation5], 16
    $region85: #{modality_specific_encoder.1} parent=1 // pred_fallthru
      _
    // Predicated region
    $region86: #{modality_specific_encoder.1} parent=1 // pred_check
      _
    $region87: #{modality_specific_encoder.1} parent=1 // pred_check_branch
      %207 = sbr.rel (0) target = $region89
    $region88: #{modality_specific_encoder.1} parent=1 // pred_region
      %209 = dma.done [#allocation8], 12288
    $region89: #{modality_specific_encoder.1} parent=1 // pred_fallthru
      _
    // Predicated region
    $region90: #{modality_specific_encoder.1} parent=1 // pred_check
      _
    $region91: #{modality_specific_encoder.1} parent=1 // pred_check_branch
      %211 = sbr.rel (0) target = $region93
    $region92: #{modality_specific_encoder.1} parent=1 // pred_region
      %213 = dma.done [#allocation8], 96
    $region93: #{modality_specific_encoder.1} parent=1 // pred_fallthru
      _
    // Predicated region
    $region94: #{modality_specific_encoder.1} parent=1 // pred_check
      _
    $region95: #{modality_specific_encoder.1} parent=1 // pred_check_branch
      %215 = sbr.rel (0) target = $region97
    $region96: #{modality_specific_encoder.1} parent=1 // pred_region
      %217 = dma.done [#allocation11], 4096
    $region97: #{modality_specific_encoder.1} parent=1 // pred_fallthru
      _
    // Predicated region
    $region98: #{modality_specific_encoder.1} parent=1 // pred_check
      _
    $region99: #{modality_specific_encoder.1} parent=1 // pred_check_branch
      %219 = sbr.rel (0) target = $region101
    $region100: #{modality_specific_encoder.1} parent=1 // pred_region
      %221 = dma.done [#allocation11], 32
    $region101: #{modality_specific_encoder.1} parent=1 // pred_fallthru
      _
    // Predicated region
    $region102: #{modality_specific_encoder.1} parent=1 // pred_check
      _
    $region103: #{modality_specific_encoder.1} parent=1 // pred_check_branch
      %223 = sbr.rel (0) target = $region105
    $region104: #{modality_specific_encoder.1} parent=1 // pred_region
      %225 = dma.done [#allocation14], 32
    $region105: #{modality_specific_encoder.1} parent=1 // pred_fallthru
      _
    // Predicated region
    $region106: #{modality_specific_encoder.1} parent=1 // pred_check
      _
    $region107: #{modality_specific_encoder.1} parent=1 // pred_check_branch
      %227 = sbr.rel (0) target = $region109
    $region108: #{modality_specific_encoder.1} parent=1 // pred_region
      %229 = dma.done [#allocation14], 16384
    $region109: #{modality_specific_encoder.1} parent=1 // pred_fallthru
      _
    // Predicated region
    $region110: #{modality_specific_encoder.1} parent=1 // pred_check
      _
    $region111: #{modality_specific_encoder.1} parent=1 // pred_check_branch
      %231 = sbr.rel (0) target = $region113
    $region112: #{modality_specific_encoder.1} parent=1 // pred_region
      %233 = dma.done [#allocation17], 128
    $region113: #{modality_specific_encoder.1} parent=1 // pred_fallthru
      _
    // Predicated region
    $region114: #{modality_specific_encoder.1} parent=1 // pred_check
      _
    $region115: #{modality_specific_encoder.1} parent=1 // pred_check_branch
      %235 = sbr.rel (0) target = $region117
    $region116: #{modality_specific_encoder.1} parent=1 // pred_region
      %237 = dma.done [#allocation17], 16384
    $region117: #{modality_specific_encoder.1} parent=1 // pred_fallthru
      _
    // Predicated region
    $region118: #{modality_specific_encoder.1} parent=1 // pred_check
      _
    $region119: #{modality_specific_encoder.1} parent=1 // pred_check_branch
      %239 = sbr.rel (0) target = $region121
    $region120: #{modality_specific_encoder.1} parent=1 // pred_region
      %241 = dma.done [#allocation20], 32
    $region121: #{modality_specific_encoder.1} parent=1 // pred_fallthru
      _
    %v242 = vld [vmem:[#allocation2] sm:$0x3]
    %v243 = vld [vmem:[#allocation4] sm:$0xff]
    %v244 = vld [vmem:[#allocation4 + $0x8] sm:$0xff]
    %v245 = vld [vmem:[#allocation4 + $0x10] sm:$0xff]
    %v246 = vld [vmem:[#allocation4 + $0x18] sm:$0xff]
    %v247 = vld [vmem:[%s2] sm:$0x1]
    %v249 = vperm.slane %v247, 0
    %vm251 = vcmask 261120
    %v253 = vsel %vm251, %v242, 0
    %255 = vmatpush.msra.mxu0 0.0
    %256 = vmatpush.msra.mxu0 0.0
    %257 = vmatpush.msra.mxu0 0.0
    %258 = vmatpush.msra.mxu0 0.0
    %259 = vmatpush.msra.mxu0 0.0
    %260 = vmatpush.msra.mxu0 0.0
    %261 = vmatpush.msra.mxu0 0.0
    %262 = vmatpush.msra.mxu0 0.0
    %263 = vmatpush.msra.mxu0 0.0
    %264 = vmatpush.msra.mxu0 0.0
    %265 = vmatpush.msra.mxu0 0.0
    %266 = vmatpush.msra.mxu0 0.0
    %267 = vmatpush.msra.mxu0 %v246
    %268 = vmatpush.msra.mxu0 %v245
    %269 = vmatpush.msra.mxu0 %v244
    %270 = vmatpush.msra.mxu0 %v243
    %271 = vmatmul.f32.gmra.mxu0 %v253
    %v272 = vpop.f32.mrf.mxu0
    %v273 = vadd.f32 %v249, %v272
    %274 = vdwg.mxu0
    %v275 = vld [vmem:[%s3] sm:$0x1]
    %v276 = vld [vmem:[%s4] sm:$0x1]
    %vm277 = vcmask 1041408
    %v278 = vsel %vm277, %v273, 0.0
    %279 = vadd.xlane.f32.xlu0 %v278
    %v280 = vpop.xlane.xlu0 %279
    %v281 = vmul.f32 %v273, %v273
    %v282 = vsel %vm277, %v281, 0.0
    %283 = vadd.xlane.f32.xlu0 %v282
    %v284 = vpop.xlane.xlu0 %283
    %v285 = vmul.f32 %v280, 0.0078125
    %v286 = vmul.f32 %v284, 0.0078125
    %v287 = vmul.f32 %v285, %v285
    %v288 = vsub.f32 %v286, %v287
    %v289 = vsub.f32 %v273, %v285
    %v290 = vadd.f32 %v288, 1e-05
    %v291 = vrsqrt.pop %v290
    %v292 = vmul.f32 %v291, %v290
    %v293 = vmul.f32 %v292, %v291
    %v294 = vmul.f32 0.5, %v293
    %v295 = vsub.f32 1.5, %v294
    %v296 = vmul.f32 %v291, %v295
    %vm297 = vweird.f32 %v290
    %vm298 = vweird.f32 %v291
    %vm299 = vmor %vm297, %vm298
    %v300 = vsel %vm299, %v291, %v296
    %v301 = vmul.f32 %v289, %v300
    %v303 = vperm.slane %v275, 0
    %v305 = vmul.f32 %v301, %v303
    %v307 = vperm.slane %v276, 0
    %v309 = vadd.f32 %v305, %v307
    %v310 = vld [vmem:[#allocation6] sm:$0x1]
    %v312 = vperm.slane %v310, 0
    %v315 = vrot.slane %v309, 6
    %v317 = vsel %vm277, %v312, %v315
    %v318 = vld [vmem:[%s10] sm:$0x1]
    %v319 = vld [vmem:[#allocation12] sm:$0x1]
    %vm320 = vcmask 1043456
    %v321 = vsel %vm320, %v317, 0.0
    %322 = vadd.xlane.f32.xlu0 %v321
    %v323 = vpop.xlane.xlu0 %322
    %v324 = vmul.f32 %v317, %v317
    %v325 = vsel %vm320, %v324, 0.0
    %326 = vadd.xlane.f32.xlu0 %v325
    %v327 = vpop.xlane.xlu0 %326
    %v328 = vmul.f32 %v323, 0.0078125
    %v329 = vmul.f32 %v327, 0.0078125
    %v330 = vmul.f32 %v328, %v328
    %v331 = vsub.f32 %v329, %v330
    %v332 = vsub.f32 %v317, %v328
    %v333 = vadd.f32 %v331, 1e-05
    %v334 = vrsqrt.pop %v333
    %v335 = vmul.f32 %v334, %v333
    %v336 = vmul.f32 %v335, %v334
    %v337 = vmul.f32 0.5, %v336
    %v338 = vsub.f32 1.5, %v337
    %v339 = vmul.f32 %v334, %v338
    %vm340 = vweird.f32 %v333
    %vm341 = vweird.f32 %v334
    %vm342 = vmor %vm340, %vm341
    %v343 = vsel %vm342, %v334, %v339
    %v344 = vmul.f32 %v332, %v343
    %v346 = vperm.slane %v318, 0
    %v348 = vmul.f32 %v344, %v346
    %v350 = vperm.slane %v319, 0
    %v352 = vadd.f32 %v348, %v350
    %v353 = vld [vmem:[#allocation7] sm:$0xff]
    %v354 = vld [vmem:[#allocation7 + $0x8] sm:$0xff]
    %v355 = vld [vmem:[#allocation7 + $0x10] sm:$0xff]
    %v356 = vld [vmem:[#allocation7 + $0x18] sm:$0xff]
    %v357 = vld [vmem:[#allocation7 + $0x20] sm:$0xff]
    %v358 = vld [vmem:[#allocation7 + $0x28] sm:$0xff]
    %v359 = vld [vmem:[#allocation7 + $0x30] sm:$0xff]
    %v360 = vld [vmem:[#allocation7 + $0x38] sm:$0xff]
    %v361 = vld [vmem:[#allocation7 + $0x40] sm:$0xff]
    %v362 = vld [vmem:[#allocation7 + $0x48] sm:$0xff]
    %v363 = vld [vmem:[#allocation7 + $0x50] sm:$0xff]
    %v364 = vld [vmem:[#allocation7 + $0x58] sm:$0xff]
    %v365 = vld [vmem:[#allocation7 + $0x60] sm:$0xff]
    %v366 = vld [vmem:[#allocation7 + $0x68] sm:$0xff]
    %v367 = vld [vmem:[#allocation7 + $0x70] sm:$0xff]
    %v368 = vld [vmem:[#allocation7 + $0x78] sm:$0xff]
    %v369 = vld [vmem:[#allocation7 + $0x80] sm:$0xff]
    %v370 = vld [vmem:[#allocation7 + $0x88] sm:$0xff]
    %v371 = vld [vmem:[#allocation7 + $0x90] sm:$0xff]
    %v372 = vld [vmem:[#allocation7 + $0x98] sm:$0xff]
    %v373 = vld [vmem:[#allocation7 + $0xa0] sm:$0xff]
    %v374 = vld [vmem:[#allocation7 + $0xa8] sm:$0xff]
    %v375 = vld [vmem:[#allocation7 + $0xb0] sm:$0xff]
    %v376 = vld [vmem:[#allocation7 + $0xb8] sm:$0xff]
    %v377 = vld [vmem:[#allocation7 + $0xc0] sm:$0xff]
    %v378 = vld [vmem:[#allocation7 + $0xc8] sm:$0xff]
    %v379 = vld [vmem:[#allocation7 + $0xd0] sm:$0xff]
    %v380 = vld [vmem:[#allocation7 + $0xd8] sm:$0xff]
    %v381 = vld [vmem:[#allocation7 + $0xe0] sm:$0xff]
    %v382 = vld [vmem:[#allocation7 + $0xe8] sm:$0xff]
    %v383 = vld [vmem:[#allocation7 + $0xf0] sm:$0xff]
    %v384 = vld [vmem:[#allocation7 + $0xf8] sm:$0xff]
    %v385 = vld [vmem:[#allocation7 + $0x100] sm:$0xff]
    %v386 = vld [vmem:[#allocation7 + $0x108] sm:$0xff]
    %v387 = vld [vmem:[#allocation7 + $0x110] sm:$0xff]
    %v388 = vld [vmem:[#allocation7 + $0x118] sm:$0xff]
    %v389 = vld [vmem:[#allocation7 + $0x120] sm:$0xff]
    %v390 = vld [vmem:[#allocation7 + $0x128] sm:$0xff]
    %v391 = vld [vmem:[#allocation7 + $0x130] sm:$0xff]
    %v392 = vld [vmem:[#allocation7 + $0x138] sm:$0xff]
    %v393 = vld [vmem:[#allocation7 + $0x140] sm:$0xff]
    %v394 = vld [vmem:[#allocation7 + $0x148] sm:$0xff]
    %v395 = vld [vmem:[#allocation7 + $0x150] sm:$0xff]
    %v396 = vld [vmem:[#allocation7 + $0x158] sm:$0xff]
    %v397 = vld [vmem:[#allocation7 + $0x160] sm:$0xff]
    %v398 = vld [vmem:[#allocation7 + $0x168] sm:$0xff]
    %v399 = vld [vmem:[#allocation7 + $0x170] sm:$0xff]
    %v400 = vld [vmem:[#allocation7 + $0x178] sm:$0xff]
    %v401 = vld [vmem:[#allocation9] sm:$0x7]
    %v403 = vperm.slane %v401, 0
    %v404 = vperm.slane %v401, 1
    %v405 = vperm.slane %v401, 2
    %409 = vmatpush.msra.mxu0 %v398
    %410 = vmatpush.msra.mxu0 %v395
    %411 = vmatpush.msra.mxu0 %v392
    %412 = vmatpush.msra.mxu0 %v389
    %413 = vmatpush.msra.mxu0 %v386
    %414 = vmatpush.msra.mxu0 %v383
    %415 = vmatpush.msra.mxu0 %v380
    %416 = vmatpush.msra.mxu0 %v377
    %417 = vmatpush.msra.mxu0 %v374
    %418 = vmatpush.msra.mxu0 %v371
    %419 = vmatpush.msra.mxu0 %v368
    %420 = vmatpush.msra.mxu0 %v365
    %421 = vmatpush.msra.mxu0 %v362
    %422 = vmatpush.msra.mxu0 %v359
    %423 = vmatpush.msra.mxu0 %v356
    %424 = vmatpush.msra.mxu0 %v353
    %425 = vmatmul.f32.gmra.mxu0 %v352
    %v426 = vpop.f32.mrf.mxu0
    %v427 = vadd.f32 %v403, %v426
    %428 = vdwg.mxu0
    %429 = vmatpush.msra.mxu0 %v399
    %430 = vmatpush.msra.mxu0 %v396
    %431 = vmatpush.msra.mxu0 %v393
    %432 = vmatpush.msra.mxu0 %v390
    %433 = vmatpush.msra.mxu0 %v387
    %434 = vmatpush.msra.mxu0 %v384
    %435 = vmatpush.msra.mxu0 %v381
    %436 = vmatpush.msra.mxu0 %v378
    %437 = vmatpush.msra.mxu0 %v375
    %438 = vmatpush.msra.mxu0 %v372
    %439 = vmatpush.msra.mxu0 %v369
    %440 = vmatpush.msra.mxu0 %v366
    %441 = vmatpush.msra.mxu0 %v363
    %442 = vmatpush.msra.mxu0 %v360
    %443 = vmatpush.msra.mxu0 %v357
    %444 = vmatpush.msra.mxu0 %v354
    %445 = vmatmul.f32.gmra.mxu0 %v352
    %v446 = vpop.f32.mrf.mxu0
    %v447 = vadd.f32 %v404, %v446
    %448 = vdwg.mxu0
    %449 = vmatpush.msra.mxu0 %v400
    %450 = vmatpush.msra.mxu0 %v397
    %451 = vmatpush.msra.mxu0 %v394
    %452 = vmatpush.msra.mxu0 %v391
    %453 = vmatpush.msra.mxu0 %v388
    %454 = vmatpush.msra.mxu0 %v385
    %455 = vmatpush.msra.mxu0 %v382
    %456 = vmatpush.msra.mxu0 %v379
    %457 = vmatpush.msra.mxu0 %v376
    %458 = vmatpush.msra.mxu0 %v373
    %459 = vmatpush.msra.mxu0 %v370
    %460 = vmatpush.msra.mxu0 %v367
    %461 = vmatpush.msra.mxu0 %v364
    %462 = vmatpush.msra.mxu0 %v361
    %463 = vmatpush.msra.mxu0 %v358
    %464 = vmatpush.msra.mxu0 %v355
    %465 = vmatmul.f32.gmra.mxu0 %v352
    %v466 = vpop.f32.mrf.mxu0
    %v467 = vadd.f32 %v405, %v466
    %468 = vdwg.mxu0
    %v469 = vmul.f32 %v427, %v447
    %vm470 = vcmask 254976
    %v471 = vsel %vm470, %v469, 0.0
    %472 = vadd.xlane.f32.xlu0 %v471
    %v473 = vpop.xlane.xlu0 %472
    %v474 = vmul.f32 %v473, 0.17677669
    %v476 = vrot.slane %v447, 2
    %v478 = vmul.f32 %v427, %v476
    %v479 = vsel %vm470, %v478, 0.0
    %480 = vadd.xlane.f32.xlu0 %v479
    %v481 = vpop.xlane.xlu0 %480
    %v482 = vmul.f32 %v481, 0.17677669
    %v483 = vrot.slane %v447, 6
    %v485 = vmul.f32 %v427, %v483
    %vm486 = vcmask 257026
    %v487 = vsel %vm486, %v485, 0.0
    %488 = vadd.xlane.f32.xlu0 %v487
    %v489 = vpop.xlane.xlu0 %488
    %v490 = vmul.f32 %v489, 0.17677669
    %v491 = vsel %vm486, %v469, 0.0
    %492 = vadd.xlane.f32.xlu0 %v491
    %v493 = vpop.xlane.xlu0 %492
    %v494 = vmul.f32 %v493, 0.17677669
    %v495 = vsub.f32 %v474, %v482
    %v496 = vsub.f32 0.0, %v495
    %v497 = vmul.f32 %v496, 1.442695
    %v498 = vpow.pop %v497
    %v499 = vadd.f32 %v498, 1.0
    %v500 = vrcp.pop %v499
    %v501 = vmul.f32 %v499, %v500
    %v502 = vsub.f32 1.0, %v501
    %v503 = vmul.f32 %v500, %v502
    %v504 = vadd.f32 %v500, %v503
    %vm505 = vweird.f32 %v499
    %vm506 = vweird.f32 %v500
    %vm507 = vmor %vm505, %vm506
    %v508 = vsel %vm507, %v500, %v504
    %v509 = vand.u32 2147483647, %v499
    %vm510 = vcmp.eq.f32.partialorder %v509, 8.507059e+37
    %v511 = vand.u32 %v499, 2147483648
    %v512 = vor.u32 1.1754944e-38, %v511
    %v513 = vsel %vm510, %v512, %v508
    %v514 = vmul.f32 1.0, %v513
    %v515 = vsub.f32 %v490, %v494
    %v516 = vsub.f32 0.0, %v515
    %v517 = vmul.f32 %v516, 1.442695
    %v518 = vpow.pop %v517
    %v519 = vadd.f32 %v518, 1.0
    %v520 = vrcp.pop %v519
    %v521 = vmul.f32 %v519, %v520
    %v522 = vsub.f32 1.0, %v521
    %v523 = vmul.f32 %v520, %v522
    %v524 = vadd.f32 %v520, %v523
    %vm525 = vweird.f32 %v519
    %vm526 = vweird.f32 %v520
    %vm527 = vmor %vm525, %vm526
    %v528 = vsel %vm527, %v520, %v524
    %v529 = vand.u32 2147483647, %v519
    %vm530 = vcmp.eq.f32.partialorder %v529, 8.507059e+37
    %v531 = vand.u32 %v519, 2147483648
    %v532 = vor.u32 1.1754944e-38, %v531
    %v533 = vsel %vm530, %v532, %v528
    %v534 = vmul.f32 1.0, %v533
    %v535 = vmul.f32 %v514, %v467
    %v536 = vsub.f32 1.0, %v514
    %v538 = vrot.slane %v467, 2
    %v540 = vmul.f32 %v536, %v538
    %v541 = vadd.f32 %v535, %v540
    %v542 = vrot.slane %v467, 6
    %v544 = vmul.f32 %v534, %v542
    %v545 = vsub.f32 1.0, %v534
    %v546 = vmul.f32 %v545, %v467
    %v547 = vadd.f32 %v544, %v546
    %549 = vrot.lane.b32.xlu0 %v469, 96
    %v550 = vpop.permute.xlu0 %549
    %v552 = vsel %vm470, %v550, 0.0
    %553 = vadd.xlane.f32.xlu0 %v552
    %v554 = vpop.xlane.xlu0 %553
    %v555 = vmul.f32 %v554, 0.17677669
    %557 = vrot.lane.b32.xlu0 %v478, 96
    %v558 = vpop.permute.xlu0 %557
    %v560 = vsel %vm470, %v558, 0.0
    %561 = vadd.xlane.f32.xlu0 %v560
    %v562 = vpop.xlane.xlu0 %561
    %v563 = vmul.f32 %v562, 0.17677669
    %565 = vrot.lane.b32.xlu0 %v485, 96
    %v566 = vpop.permute.xlu0 %565
    %v568 = vsel %vm486, %v566, 0.0
    %569 = vadd.xlane.f32.xlu0 %v568
    %v570 = vpop.xlane.xlu0 %569
    %v571 = vmul.f32 %v570, 0.17677669
    %v572 = vsel %vm486, %v550, 0.0
    %573 = vadd.xlane.f32.xlu0 %v572
    %v574 = vpop.xlane.xlu0 %573
    %v575 = vmul.f32 %v574, 0.17677669
    %v576 = vsub.f32 %v555, %v563
    %v577 = vsub.f32 0.0, %v576
    %v578 = vmul.f32 %v577, 1.442695
    %v579 = vpow.pop %v578
    %v580 = vadd.f32 %v579, 1.0
    %v581 = vrcp.pop %v580
    %v582 = vmul.f32 %v580, %v581
    %v583 = vsub.f32 1.0, %v582
    %v584 = vmul.f32 %v581, %v583
    %v585 = vadd.f32 %v581, %v584
    %vm586 = vweird.f32 %v580
    %vm587 = vweird.f32 %v581
    %vm588 = vmor %vm586, %vm587
    %v589 = vsel %vm588, %v581, %v585
    %v590 = vand.u32 2147483647, %v580
    %vm591 = vcmp.eq.f32.partialorder %v590, 8.507059e+37
    %v592 = vand.u32 %v580, 2147483648
    %v593 = vor.u32 1.1754944e-38, %v592
    %v594 = vsel %vm591, %v593, %v589
    %v595 = vmul.f32 1.0, %v594
    %v596 = vsub.f32 %v571, %v575
    %v597 = vsub.f32 0.0, %v596
    %v598 = vmul.f32 %v597, 1.442695
    %v599 = vpow.pop %v598
    %v600 = vadd.f32 %v599, 1.0
    %v601 = vrcp.pop %v600
    %v602 = vmul.f32 %v600, %v601
    %v603 = vsub.f32 1.0, %v602
    %v604 = vmul.f32 %v601, %v603
    %v605 = vadd.f32 %v601, %v604
    %vm606 = vweird.f32 %v600
    %vm607 = vweird.f32 %v601
    %vm608 = vmor %vm606, %vm607
    %v609 = vsel %vm608, %v601, %v605
    %v610 = vand.u32 2147483647, %v600
    %vm611 = vcmp.eq.f32.partialorder %v610, 8.507059e+37
    %v612 = vand.u32 %v600, 2147483648
    %v613 = vor.u32 1.1754944e-38, %v612
    %v614 = vsel %vm611, %v613, %v609
    %v615 = vmul.f32 1.0, %v614
    %v616 = vmul.f32 %v595, %v467
    %v617 = vsub.f32 1.0, %v595
    %618 = vrot.lane.b32.xlu0 %v538, 96
    %v619 = vpop.permute.xlu0 %618
    %v621 = vmul.f32 %v617, %v619
    %623 = vrot.lane.b32.xlu0 %v621, 32
    %v624 = vpop.permute.xlu0 %623
    %v626 = vadd.f32 %v616, %v624
    %627 = vrot.lane.b32.xlu0 %v542, 96
    %v628 = vpop.permute.xlu0 %627
    %v630 = vmul.f32 %v615, %v628
    %v631 = vsub.f32 1.0, %v615
    %v632 = vmul.f32 %v631, %v467
    %634 = vrot.lane.b32.xlu0 %v632, 96
    %v635 = vpop.permute.xlu0 %634
    %v637 = vadd.f32 %v630, %v635
    %638 = vrot.lane.b32.xlu0 %v469, 64
    %v639 = vpop.permute.xlu0 %638
    %v641 = vsel %vm470, %v639, 0.0
    %642 = vadd.xlane.f32.xlu0 %v641
    %v643 = vpop.xlane.xlu0 %642
    %v644 = vmul.f32 %v643, 0.17677669
    %645 = vrot.lane.b32.xlu0 %v478, 64
    %v646 = vpop.permute.xlu0 %645
    %v648 = vsel %vm470, %v646, 0.0
    %649 = vadd.xlane.f32.xlu0 %v648
    %v650 = vpop.xlane.xlu0 %649
    %v651 = vmul.f32 %v650, 0.17677669
    %652 = vrot.lane.b32.xlu0 %v485, 64
    %v653 = vpop.permute.xlu0 %652
    %v655 = vsel %vm486, %v653, 0.0
    %656 = vadd.xlane.f32.xlu0 %v655
    %v657 = vpop.xlane.xlu0 %656
    %v658 = vmul.f32 %v657, 0.17677669
    %v659 = vsel %vm486, %v639, 0.0
    %660 = vadd.xlane.f32.xlu0 %v659
    %v661 = vpop.xlane.xlu0 %660
    %v662 = vmul.f32 %v661, 0.17677669
    %v663 = vsub.f32 %v644, %v651
    %v664 = vsub.f32 0.0, %v663
    %v665 = vmul.f32 %v664, 1.442695
    %v666 = vpow.pop %v665
    %v667 = vadd.f32 %v666, 1.0
    %v668 = vrcp.pop %v667
    %v669 = vmul.f32 %v667, %v668
    %v670 = vsub.f32 1.0, %v669
    %v671 = vmul.f32 %v668, %v670
    %v672 = vadd.f32 %v668, %v671
    %vm673 = vweird.f32 %v667
    %vm674 = vweird.f32 %v668
    %vm675 = vmor %vm673, %vm674
    %v676 = vsel %vm675, %v668, %v672
    %v677 = vand.u32 2147483647, %v667
    %vm678 = vcmp.eq.f32.partialorder %v677, 8.507059e+37
    %v679 = vand.u32 %v667, 2147483648
    %v680 = vor.u32 1.1754944e-38, %v679
    %v681 = vsel %vm678, %v680, %v676
    %v682 = vmul.f32 1.0, %v681
    %v683 = vsub.f32 %v658, %v662
    %v684 = vsub.f32 0.0, %v683
    %v685 = vmul.f32 %v684, 1.442695
    %v686 = vpow.pop %v685
    %v687 = vadd.f32 %v686, 1.0
    %v688 = vrcp.pop %v687
    %v689 = vmul.f32 %v687, %v688
    %v690 = vsub.f32 1.0, %v689
    %v691 = vmul.f32 %v688, %v690
    %v692 = vadd.f32 %v688, %v691
    %vm693 = vweird.f32 %v687
    %vm694 = vweird.f32 %v688
    %vm695 = vmor %vm693, %vm694
    %v696 = vsel %vm695, %v688, %v692
    %v697 = vand.u32 2147483647, %v687
    %vm698 = vcmp.eq.f32.partialorder %v697, 8.507059e+37
    %v699 = vand.u32 %v687, 2147483648
    %v700 = vor.u32 1.1754944e-38, %v699
    %v701 = vsel %vm698, %v700, %v696
    %v702 = vmul.f32 1.0, %v701
    %v703 = vmul.f32 %v682, %v467
    %v704 = vsub.f32 1.0, %v682
    %705 = vrot.lane.b32.xlu0 %v538, 64
    %v706 = vpop.permute.xlu0 %705
    %v708 = vmul.f32 %v704, %v706
    %710 = vrot.lane.b32.xlu0 %v708, 64
    %v711 = vpop.permute.xlu0 %710
    %v713 = vadd.f32 %v703, %v711
    %714 = vrot.lane.b32.xlu0 %v542, 64
    %v715 = vpop.permute.xlu0 %714
    %v717 = vmul.f32 %v702, %v715
    %v718 = vsub.f32 1.0, %v702
    %v719 = vmul.f32 %v718, %v467
    %721 = vrot.lane.b32.xlu0 %v719, 64
    %v722 = vpop.permute.xlu0 %721
    %v724 = vadd.f32 %v717, %v722
    %725 = vrot.lane.b32.xlu0 %v469, 32
    %v726 = vpop.permute.xlu0 %725
    %v728 = vsel %vm470, %v726, 0.0
    %729 = vadd.xlane.f32.xlu0 %v728
    %v730 = vpop.xlane.xlu0 %729
    %v731 = vmul.f32 %v730, 0.17677669
    %732 = vrot.lane.b32.xlu0 %v478, 32
    %v733 = vpop.permute.xlu0 %732
    %v735 = vsel %vm470, %v733, 0.0
    %736 = vadd.xlane.f32.xlu0 %v735
    %v737 = vpop.xlane.xlu0 %736
    %v738 = vmul.f32 %v737, 0.17677669
    %739 = vrot.lane.b32.xlu0 %v485, 32
    %v740 = vpop.permute.xlu0 %739
    %v742 = vsel %vm486, %v740, 0.0
    %743 = vadd.xlane.f32.xlu0 %v742
    %v744 = vpop.xlane.xlu0 %743
    %v745 = vmul.f32 %v744, 0.17677669
    %v746 = vsel %vm486, %v726, 0.0
    %747 = vadd.xlane.f32.xlu0 %v746
    %v748 = vpop.xlane.xlu0 %747
    %v749 = vmul.f32 %v748, 0.17677669
    %v750 = vsub.f32 %v731, %v738
    %v751 = vsub.f32 0.0, %v750
    %v752 = vmul.f32 %v751, 1.442695
    %v753 = vpow.pop %v752
    %v754 = vadd.f32 %v753, 1.0
    %v755 = vrcp.pop %v754
    %v756 = vmul.f32 %v754, %v755
    %v757 = vsub.f32 1.0, %v756
    %v758 = vmul.f32 %v755, %v757
    %v759 = vadd.f32 %v755, %v758
    %vm760 = vweird.f32 %v754
    %vm761 = vweird.f32 %v755
    %vm762 = vmor %vm760, %vm761
    %v763 = vsel %vm762, %v755, %v759
    %v764 = vand.u32 2147483647, %v754
    %vm765 = vcmp.eq.f32.partialorder %v764, 8.507059e+37
    %v766 = vand.u32 %v754, 2147483648
    %v767 = vor.u32 1.1754944e-38, %v766
    %v768 = vsel %vm765, %v767, %v763
    %v769 = vmul.f32 1.0, %v768
    %v770 = vsub.f32 %v745, %v749
    %v771 = vsub.f32 0.0, %v770
    %v772 = vmul.f32 %v771, 1.442695
    %v773 = vpow.pop %v772
    %v774 = vadd.f32 %v773, 1.0
    %v775 = vrcp.pop %v774
    %v776 = vmul.f32 %v774, %v775
    %v777 = vsub.f32 1.0, %v776
    %v778 = vmul.f32 %v775, %v777
    %v779 = vadd.f32 %v775, %v778
    %vm780 = vweird.f32 %v774
    %vm781 = vweird.f32 %v775
    %vm782 = vmor %vm780, %vm781
    %v783 = vsel %vm782, %v775, %v779
    %v784 = vand.u32 2147483647, %v774
    %vm785 = vcmp.eq.f32.partialorder %v784, 8.507059e+37
    %v786 = vand.u32 %v774, 2147483648
    %v787 = vor.u32 1.1754944e-38, %v786
    %v788 = vsel %vm785, %v787, %v783
    %v789 = vmul.f32 1.0, %v788
    %v790 = vmul.f32 %v769, %v467
    %v791 = vsub.f32 1.0, %v769
    %792 = vrot.lane.b32.xlu0 %v538, 32
    %v793 = vpop.permute.xlu0 %792
    %v795 = vmul.f32 %v791, %v793
    %797 = vrot.lane.b32.xlu0 %v795, 96
    %v798 = vpop.permute.xlu0 %797
    %v800 = vadd.f32 %v790, %v798
    %801 = vrot.lane.b32.xlu0 %v542, 32
    %v802 = vpop.permute.xlu0 %801
    %v804 = vmul.f32 %v789, %v802
    %v805 = vsub.f32 1.0, %v789
    %v806 = vmul.f32 %v805, %v467
    %808 = vrot.lane.b32.xlu0 %v806, 32
    %v809 = vpop.permute.xlu0 %808
    %v811 = vadd.f32 %v804, %v809
    %v812 = vsel %vm251, %v541, %v626
    %vm813 = vcmask 523264
    %v814 = vsel %vm813, %v812, %v713
    %vm815 = vcmask 785408
    %v816 = vsel %vm815, %v814, %v800
    %818 = vrot.lane.b32.xlu0 %v637, 32
    %v819 = vpop.permute.xlu0 %818
    %822 = vrot.lane.b32.xlu0 %v724, 64
    %v823 = vpop.permute.xlu0 %822
    %826 = vrot.lane.b32.xlu0 %v811, 96
    %v827 = vpop.permute.xlu0 %826
    %v829 = vsel %vm251, %v547, %v819
    %v830 = vsel %vm813, %v829, %v823
    %v831 = vsel %vm815, %v830, %v827
    %v832 = vsel %vm277, %v816, %v831
    %v833 = vld [vmem:[#allocation10] sm:$0xff]
    %v834 = vld [vmem:[#allocation10 + $0x8] sm:$0xff]
    %v835 = vld [vmem:[#allocation10 + $0x10] sm:$0xff]
    %v836 = vld [vmem:[#allocation10 + $0x18] sm:$0xff]
    %v837 = vld [vmem:[#allocation10 + $0x20] sm:$0xff]
    %v838 = vld [vmem:[#allocation10 + $0x28] sm:$0xff]
    %v839 = vld [vmem:[#allocation10 + $0x30] sm:$0xff]
    %v840 = vld [vmem:[#allocation10 + $0x38] sm:$0xff]
    %v841 = vld [vmem:[#allocation10 + $0x40] sm:$0xff]
    %v842 = vld [vmem:[#allocation10 + $0x48] sm:$0xff]
    %v843 = vld [vmem:[#allocation10 + $0x50] sm:$0xff]
    %v844 = vld [vmem:[#allocation10 + $0x58] sm:$0xff]
    %v845 = vld [vmem:[#allocation10 + $0x60] sm:$0xff]
    %v846 = vld [vmem:[#allocation10 + $0x68] sm:$0xff]
    %v847 = vld [vmem:[#allocation10 + $0x70] sm:$0xff]
    %v848 = vld [vmem:[#allocation10 + $0x78] sm:$0xff]
    %849 = vmatpush.msra.mxu0 %v848
    %850 = vmatpush.msra.mxu0 %v847
    %851 = vmatpush.msra.mxu0 %v846
    %852 = vmatpush.msra.mxu0 %v845
    %853 = vmatpush.msra.mxu0 %v844
    %854 = vmatpush.msra.mxu0 %v843
    %855 = vmatpush.msra.mxu0 %v842
    %856 = vmatpush.msra.mxu0 %v841
    %857 = vmatpush.msra.mxu0 %v840
    %858 = vmatpush.msra.mxu0 %v839
    %859 = vmatpush.msra.mxu0 %v838
    %860 = vmatpush.msra.mxu0 %v837
    %861 = vmatpush.msra.mxu0 %v836
    %862 = vmatpush.msra.mxu0 %v835
    %863 = vmatpush.msra.mxu0 %v834
    %864 = vmatpush.msra.mxu0 %v833
    %865 = vmatmul.f32.gmra.mxu0 %v832
    %v866 = vpop.f32.mrf.mxu0
    %v867 = vadd.f32 0.0, %v866
    %868 = vdwg.mxu0
    %v869 = vadd.f32 %v317, %v867
    %v870 = vld [vmem:[%s9] sm:$0x1]
    %v872 = vperm.slane %v870, 0
    %v874 = vadd.f32 %v869, %v872
    %v875 = vld [vmem:[%s12] sm:$0x1]
    %v876 = vld [vmem:[#allocation13] sm:$0x1]
    %v877 = vsel %vm320, %v874, 0.0
    %878 = vadd.xlane.f32.xlu0 %v877
    %v879 = vpop.xlane.xlu0 %878
    %v880 = vmul.f32 %v874, %v874
    %v881 = vsel %vm320, %v880, 0.0
    %882 = vadd.xlane.f32.xlu0 %v881
    %v883 = vpop.xlane.xlu0 %882
    %v884 = vmul.f32 %v879, 0.0078125
    %v885 = vmul.f32 %v883, 0.0078125
    %v886 = vmul.f32 %v884, %v884
    %v887 = vsub.f32 %v885, %v886
    %v888 = vsub.f32 %v874, %v884
    %v889 = vadd.f32 %v887, 1e-05
    %v890 = vrsqrt.pop %v889
    %v891 = vmul.f32 %v890, %v889
    %v892 = vmul.f32 %v891, %v890
    %v893 = vmul.f32 0.5, %v892
    %v894 = vsub.f32 1.5, %v893
    %v895 = vmul.f32 %v890, %v894
    %vm896 = vweird.f32 %v889
    %vm897 = vweird.f32 %v890
    %vm898 = vmor %vm896, %vm897
    %v899 = vsel %vm898, %v890, %v895
    %v900 = vmul.f32 %v888, %v899
    %v902 = vperm.slane %v875, 0
    %v904 = vmul.f32 %v900, %v902
    %v906 = vperm.slane %v876, 0
    %v908 = vadd.f32 %v904, %v906
    %v909 = vld [vmem:[#allocation15] sm:$0xff]
    %v910 = vld [vmem:[#allocation15 + $0x8] sm:$0xff]
    %v911 = vld [vmem:[#allocation15 + $0x10] sm:$0xff]
    %v912 = vld [vmem:[#allocation15 + $0x18] sm:$0xff]
    %v913 = vld [vmem:[#allocation15 + $0x20] sm:$0xff]
    %v914 = vld [vmem:[#allocation15 + $0x28] sm:$0xff]
    %v915 = vld [vmem:[#allocation15 + $0x30] sm:$0xff]
    %v916 = vld [vmem:[#allocation15 + $0x38] sm:$0xff]
    %v917 = vld [vmem:[#allocation15 + $0x40] sm:$0xff]
    %v918 = vld [vmem:[#allocation15 + $0x48] sm:$0xff]
    %v919 = vld [vmem:[#allocation15 + $0x50] sm:$0xff]
    %v920 = vld [vmem:[#allocation15 + $0x58] sm:$0xff]
    %v921 = vld [vmem:[#allocation15 + $0x60] sm:$0xff]
    %v922 = vld [vmem:[#allocation15 + $0x68] sm:$0xff]
    %v923 = vld [vmem:[#allocation15 + $0x70] sm:$0xff]
    %v924 = vld [vmem:[#allocation15 + $0x78] sm:$0xff]
    %v925 = vld [vmem:[#allocation15 + $0x80] sm:$0xff]
    %v926 = vld [vmem:[#allocation15 + $0x88] sm:$0xff]
    %v927 = vld [vmem:[#allocation15 + $0x90] sm:$0xff]
    %v928 = vld [vmem:[#allocation15 + $0x98] sm:$0xff]
    %v929 = vld [vmem:[#allocation15 + $0xa0] sm:$0xff]
    %v930 = vld [vmem:[#allocation15 + $0xa8] sm:$0xff]
    %v931 = vld [vmem:[#allocation15 + $0xb0] sm:$0xff]
    %v932 = vld [vmem:[#allocation15 + $0xb8] sm:$0xff]
    %v933 = vld [vmem:[#allocation15 + $0xc0] sm:$0xff]
    %v934 = vld [vmem:[#allocation15 + $0xc8] sm:$0xff]
    %v935 = vld [vmem:[#allocation15 + $0xd0] sm:$0xff]
    %v936 = vld [vmem:[#allocation15 + $0xd8] sm:$0xff]
    %v937 = vld [vmem:[#allocation15 + $0xe0] sm:$0xff]
    %v938 = vld [vmem:[#allocation15 + $0xe8] sm:$0xff]
    %v939 = vld [vmem:[#allocation15 + $0xf0] sm:$0xff]
    %v940 = vld [vmem:[#allocation15 + $0xf8] sm:$0xff]
    %v941 = vld [vmem:[#allocation15 + $0x100] sm:$0xff]
    %v942 = vld [vmem:[#allocation15 + $0x108] sm:$0xff]
    %v943 = vld [vmem:[#allocation15 + $0x110] sm:$0xff]
    %v944 = vld [vmem:[#allocation15 + $0x118] sm:$0xff]
    %v945 = vld [vmem:[#allocation15 + $0x120] sm:$0xff]
    %v946 = vld [vmem:[#allocation15 + $0x128] sm:$0xff]
    %v947 = vld [vmem:[#allocation15 + $0x130] sm:$0xff]
    %v948 = vld [vmem:[#allocation15 + $0x138] sm:$0xff]
    %v949 = vld [vmem:[#allocation15 + $0x140] sm:$0xff]
    %v950 = vld [vmem:[#allocation15 + $0x148] sm:$0xff]
    %v951 = vld [vmem:[#allocation15 + $0x150] sm:$0xff]
    %v952 = vld [vmem:[#allocation15 + $0x158] sm:$0xff]
    %v953 = vld [vmem:[#allocation15 + $0x160] sm:$0xff]
    %v954 = vld [vmem:[#allocation15 + $0x168] sm:$0xff]
    %v955 = vld [vmem:[#allocation15 + $0x170] sm:$0xff]
    %v956 = vld [vmem:[#allocation15 + $0x178] sm:$0xff]
    %v957 = vld [vmem:[#allocation15 + $0x180] sm:$0xff]
    %v958 = vld [vmem:[#allocation15 + $0x188] sm:$0xff]
    %v959 = vld [vmem:[#allocation15 + $0x190] sm:$0xff]
    %v960 = vld [vmem:[#allocation15 + $0x198] sm:$0xff]
    %v961 = vld [vmem:[#allocation15 + $0x1a0] sm:$0xff]
    %v962 = vld [vmem:[#allocation15 + $0x1a8] sm:$0xff]
    %v963 = vld [vmem:[#allocation15 + $0x1b0] sm:$0xff]
    %v964 = vld [vmem:[#allocation15 + $0x1b8] sm:$0xff]
    %v965 = vld [vmem:[#allocation15 + $0x1c0] sm:$0xff]
    %v966 = vld [vmem:[#allocation15 + $0x1c8] sm:$0xff]
    %v967 = vld [vmem:[#allocation15 + $0x1d0] sm:$0xff]
    %v968 = vld [vmem:[#allocation15 + $0x1d8] sm:$0xff]
    %v969 = vld [vmem:[#allocation15 + $0x1e0] sm:$0xff]
    %v970 = vld [vmem:[#allocation15 + $0x1e8] sm:$0xff]
    %v971 = vld [vmem:[#allocation15 + $0x1f0] sm:$0xff]
    %v972 = vld [vmem:[#allocation15 + $0x1f8] sm:$0xff]
    %v973 = vld [vmem:[#allocation16] sm:$0xf]
    %v975 = vperm.slane %v973, 0
    %v976 = vperm.slane %v973, 1
    %v977 = vperm.slane %v973, 2
    %v978 = vperm.slane %v973, 3
    %983 = vmatpush.msra.mxu0 %v969
    %984 = vmatpush.msra.mxu0 %v965
    %985 = vmatpush.msra.mxu0 %v961
    %986 = vmatpush.msra.mxu0 %v957
    %987 = vmatpush.msra.mxu0 %v953
    %988 = vmatpush.msra.mxu0 %v949
    %989 = vmatpush.msra.mxu0 %v945
    %990 = vmatpush.msra.mxu0 %v941
    %991 = vmatpush.msra.mxu0 %v937
    %992 = vmatpush.msra.mxu0 %v933
    %993 = vmatpush.msra.mxu0 %v929
    %994 = vmatpush.msra.mxu0 %v925
    %995 = vmatpush.msra.mxu0 %v921
    %996 = vmatpush.msra.mxu0 %v917
    %997 = vmatpush.msra.mxu0 %v913
    %998 = vmatpush.msra.mxu0 %v909
    %999 = vmatmul.f32.gmra.mxu0 %v908
    %v1000 = vpop.f32.mrf.mxu0
    %v1001 = vadd.f32 %v975, %v1000
    %1002 = vdwg.mxu0
    %1003 = vmatpush.msra.mxu0 %v970
    %1004 = vmatpush.msra.mxu0 %v966
    %1005 = vmatpush.msra.mxu0 %v962
    %1006 = vmatpush.msra.mxu0 %v958
    %1007 = vmatpush.msra.mxu0 %v954
    %1008 = vmatpush.msra.mxu0 %v950
    %1009 = vmatpush.msra.mxu0 %v946
    %1010 = vmatpush.msra.mxu0 %v942
    %1011 = vmatpush.msra.mxu0 %v938
    %1012 = vmatpush.msra.mxu0 %v934
    %1013 = vmatpush.msra.mxu0 %v930
    %1014 = vmatpush.msra.mxu0 %v926
    %1015 = vmatpush.msra.mxu0 %v922
    %1016 = vmatpush.msra.mxu0 %v918
    %1017 = vmatpush.msra.mxu0 %v914
    %1018 = vmatpush.msra.mxu0 %v910
    %1019 = vmatmul.f32.gmra.mxu0 %v908
    %v1020 = vpop.f32.mrf.mxu0
    %v1021 = vadd.f32 %v976, %v1020
    %1022 = vdwg.mxu0
    %1023 = vmatpush.msra.mxu0 %v971
    %1024 = vmatpush.msra.mxu0 %v967
    %1025 = vmatpush.msra.mxu0 %v963
    %1026 = vmatpush.msra.mxu0 %v959
    %1027 = vmatpush.msra.mxu0 %v955
    %1028 = vmatpush.msra.mxu0 %v951
    %1029 = vmatpush.msra.mxu0 %v947
    %1030 = vmatpush.msra.mxu0 %v943
    %1031 = vmatpush.msra.mxu0 %v939
    %1032 = vmatpush.msra.mxu0 %v935
    %1033 = vmatpush.msra.mxu0 %v931
    %1034 = vmatpush.msra.mxu0 %v927
    %1035 = vmatpush.msra.mxu0 %v923
    %1036 = vmatpush.msra.mxu0 %v919
    %1037 = vmatpush.msra.mxu0 %v915
    %1038 = vmatpush.msra.mxu0 %v911
    %1039 = vmatmul.f32.gmra.mxu0 %v908
    %v1040 = vpop.f32.mrf.mxu0
    %v1041 = vadd.f32 %v977, %v1040
    %1042 = vdwg.mxu0
    %1043 = vmatpush.msra.mxu0 %v972
    %1044 = vmatpush.msra.mxu0 %v968
    %1045 = vmatpush.msra.mxu0 %v964
    %1046 = vmatpush.msra.mxu0 %v960
    %1047 = vmatpush.msra.mxu0 %v956
    %1048 = vmatpush.msra.mxu0 %v952
    %1049 = vmatpush.msra.mxu0 %v948
    %1050 = vmatpush.msra.mxu0 %v944
    %1051 = vmatpush.msra.mxu0 %v940
    %1052 = vmatpush.msra.mxu0 %v936
    %1053 = vmatpush.msra.mxu0 %v932
    %1054 = vmatpush.msra.mxu0 %v928
    %1055 = vmatpush.msra.mxu0 %v924
    %1056 = vmatpush.msra.mxu0 %v920
    %1057 = vmatpush.msra.mxu0 %v916
    %1058 = vmatpush.msra.mxu0 %v912
    %1059 = vmatmul.f32.gmra.mxu0 %v908
    %v1060 = vpop.f32.mrf.mxu0
    %v1061 = vadd.f32 %v978, %v1060
    %1062 = vdwg.mxu0
    %v1063 = vmul.f32 %v1001, 0.5
    %v1064 = vmul.f32 %v1021, 0.5
    %v1065 = vmul.f32 %v1041, 0.5
    %v1066 = vmul.f32 %v1061, 0.5
    %v1067 = vmul.f32 %v1001, 0.70710677
    %v1068 = vmul.f32 %v1021, 0.70710677
    %v1069 = vmul.f32 %v1041, 0.70710677
    %v1070 = vmul.f32 %v1061, 0.70710677
    %vm1071 = vcmp.ge.f32.partialorder %v1067, 0.0
    %vm1072 = vcmp.ge.f32.partialorder %v1068, 0.0
    %vm1073 = vcmp.ge.f32.partialorder %v1069, 0.0
    %vm1074 = vcmp.ge.f32.partialorder %v1070, 0.0
    %v1075 = vsel %vm1071, 1.0, -1.0
    %v1076 = vsel %vm1072, 1.0, -1.0
    %v1077 = vsel %vm1073, 1.0, -1.0
    %v1078 = vsel %vm1074, 1.0, -1.0
    %v1079 = vand.u32 2147483647, %v1067
    %v1080 = vand.u32 2147483647, %v1068
    %v1081 = vand.u32 2147483647, %v1069
    %v1082 = vand.u32 2147483647, %v1070
    %v1083 = vmul.f32 %v1079, 0.3275911
    %v1084 = vmul.f32 %v1080, 0.3275911
    %v1085 = vmul.f32 %v1081, 0.3275911
    %v1086 = vmul.f32 %v1082, 0.3275911
    %v1087 = vadd.f32 %v1083, 1.0
    %v1088 = vadd.f32 %v1084, 1.0
    %v1089 = vadd.f32 %v1085, 1.0
    %v1090 = vadd.f32 %v1086, 1.0
    %v1091 = vrcp.pop %v1087
    %v1092 = vmul.f32 %v1087, %v1091
    %v1093 = vsub.f32 1.0, %v1092
    %v1094 = vmul.f32 %v1091, %v1093
    %v1095 = vadd.f32 %v1091, %v1094
    %vm1096 = vweird.f32 %v1087
    %vm1097 = vweird.f32 %v1091
    %vm1098 = vmor %vm1096, %vm1097
    %v1099 = vsel %vm1098, %v1091, %v1095
    %v1100 = vand.u32 2147483647, %v1087
    %vm1101 = vcmp.eq.f32.partialorder %v1100, 8.507059e+37
    %v1102 = vand.u32 %v1087, 2147483648
    %v1103 = vor.u32 1.1754944e-38, %v1102
    %v1104 = vsel %vm1101, %v1103, %v1099
    %v1105 = vmul.f32 1.0, %v1104
    %v1106 = vrcp.pop %v1088
    %v1107 = vmul.f32 %v1088, %v1106
    %v1108 = vsub.f32 1.0, %v1107
    %v1109 = vmul.f32 %v1106, %v1108
    %v1110 = vadd.f32 %v1106, %v1109
    %vm1111 = vweird.f32 %v1088
    %vm1112 = vweird.f32 %v1106
    %vm1113 = vmor %vm1111, %vm1112
    %v1114 = vsel %vm1113, %v1106, %v1110
    %v1115 = vand.u32 2147483647, %v1088
    %vm1116 = vcmp.eq.f32.partialorder %v1115, 8.507059e+37
    %v1117 = vand.u32 %v1088, 2147483648
    %v1118 = vor.u32 1.1754944e-38, %v1117
    %v1119 = vsel %vm1116, %v1118, %v1114
    %v1120 = vmul.f32 1.0, %v1119
    %v1121 = vrcp.pop %v1089
    %v1122 = vmul.f32 %v1089, %v1121
    %v1123 = vsub.f32 1.0, %v1122
    %v1124 = vmul.f32 %v1121, %v1123
    %v1125 = vadd.f32 %v1121, %v1124
    %vm1126 = vweird.f32 %v1089
    %vm1127 = vweird.f32 %v1121
    %vm1128 = vmor %vm1126, %vm1127
    %v1129 = vsel %vm1128, %v1121, %v1125
    %v1130 = vand.u32 2147483647, %v1089
    %vm1131 = vcmp.eq.f32.partialorder %v1130, 8.507059e+37
    %v1132 = vand.u32 %v1089, 2147483648
    %v1133 = vor.u32 1.1754944e-38, %v1132
    %v1134 = vsel %vm1131, %v1133, %v1129
    %v1135 = vmul.f32 1.0, %v1134
    %v1136 = vrcp.pop %v1090
    %v1137 = vmul.f32 %v1090, %v1136
    %v1138 = vsub.f32 1.0, %v1137
    %v1139 = vmul.f32 %v1136, %v1138
    %v1140 = vadd.f32 %v1136, %v1139
    %vm1141 = vweird.f32 %v1090
    %vm1142 = vweird.f32 %v1136
    %vm1143 = vmor %vm1141, %vm1142
    %v1144 = vsel %vm1143, %v1136, %v1140
    %v1145 = vand.u32 2147483647, %v1090
    %vm1146 = vcmp.eq.f32.partialorder %v1145, 8.507059e+37
    %v1147 = vand.u32 %v1090, 2147483648
    %v1148 = vor.u32 1.1754944e-38, %v1147
    %v1149 = vsel %vm1146, %v1148, %v1144
    %v1150 = vmul.f32 1.0, %v1149
    %v1151 = vmul.f32 %v1105, 1.0614054
    %v1152 = vmul.f32 %v1120, 1.0614054
    %v1153 = vmul.f32 %v1135, 1.0614054
    %v1154 = vmul.f32 %v1150, 1.0614054
    %v1155 = vadd.f32 %v1151, -1.4531521
    %v1156 = vadd.f32 %v1152, -1.4531521
    %v1157 = vadd.f32 %v1153, -1.4531521
    %v1158 = vadd.f32 %v1154, -1.4531521
    %v1159 = vmul.f32 %v1155, %v1105
    %v1160 = vmul.f32 %v1156, %v1120
    %v1161 = vmul.f32 %v1157, %v1135
    %v1162 = vmul.f32 %v1158, %v1150
    %v1163 = vadd.f32 %v1159, 1.4214138
    %v1164 = vadd.f32 %v1160, 1.4214138
    %v1165 = vadd.f32 %v1161, 1.4214138
    %v1166 = vadd.f32 %v1162, 1.4214138
    %v1167 = vmul.f32 %v1163, %v1105
    %v1168 = vmul.f32 %v1164, %v1120
    %v1169 = vmul.f32 %v1165, %v1135
    %v1170 = vmul.f32 %v1166, %v1150
    %v1171 = vadd.f32 %v1167, -0.28449672
    %v1172 = vadd.f32 %v1168, -0.28449672
    %v1173 = vadd.f32 %v1169, -0.28449672
    %v1174 = vadd.f32 %v1170, -0.28449672
    %v1175 = vmul.f32 %v1171, %v1105
    %v1176 = vmul.f32 %v1172, %v1120
    %v1177 = vmul.f32 %v1173, %v1135
    %v1178 = vmul.f32 %v1174, %v1150
    %v1179 = vadd.f32 %v1175, 0.2548296
    %v1180 = vadd.f32 %v1176, 0.2548296
    %v1181 = vadd.f32 %v1177, 0.2548296
    %v1182 = vadd.f32 %v1178, 0.2548296
    %v1183 = vmul.f32 %v1179, %v1105
    %v1184 = vmul.f32 %v1180, %v1120
    %v1185 = vmul.f32 %v1181, %v1135
    %v1186 = vmul.f32 %v1182, %v1150
    %v1187 = vsub.f32 0.0, %v1079
    %v1188 = vsub.f32 0.0, %v1080
    %v1189 = vsub.f32 0.0, %v1081
    %v1190 = vsub.f32 0.0, %v1082
    %v1191 = vmul.f32 %v1187, %v1079
    %v1192 = vmul.f32 %v1188, %v1080
    %v1193 = vmul.f32 %v1189, %v1081
    %v1194 = vmul.f32 %v1190, %v1082
    %v1195 = vmul.f32 %v1191, 1.442695
    %v1196 = vpow.pop %v1195
    %v1197 = vmul.f32 %v1192, 1.442695
    %v1198 = vpow.pop %v1197
    %v1199 = vmul.f32 %v1193, 1.442695
    %v1200 = vpow.pop %v1199
    %v1201 = vmul.f32 %v1194, 1.442695
    %v1202 = vpow.pop %v1201
    %v1203 = vmul.f32 %v1183, %v1196
    %v1204 = vmul.f32 %v1184, %v1198
    %v1205 = vmul.f32 %v1185, %v1200
    %v1206 = vmul.f32 %v1186, %v1202
    %v1207 = vsub.f32 1.0, %v1203
    %v1208 = vsub.f32 1.0, %v1204
    %v1209 = vsub.f32 1.0, %v1205
    %v1210 = vsub.f32 1.0, %v1206
    %v1211 = vmul.f32 %v1075, %v1207
    %v1212 = vmul.f32 %v1076, %v1208
    %v1213 = vmul.f32 %v1077, %v1209
    %v1214 = vmul.f32 %v1078, %v1210
    %v1215 = vadd.f32 %v1211, 1.0
    %v1216 = vadd.f32 %v1212, 1.0
    %v1217 = vadd.f32 %v1213, 1.0
    %v1218 = vadd.f32 %v1214, 1.0
    %v1219 = vmul.f32 %v1063, %v1215
    %v1220 = vmul.f32 %v1064, %v1216
    %v1221 = vmul.f32 %v1065, %v1217
    %v1222 = vmul.f32 %v1066, %v1218
    %v1223 = vld [vmem:[#allocation18] sm:$0xff]
    %v1224 = vld [vmem:[#allocation18 + $0x8] sm:$0xff]
    %v1225 = vld [vmem:[#allocation18 + $0x10] sm:$0xff]
    %v1226 = vld [vmem:[#allocation18 + $0x18] sm:$0xff]
    %v1227 = vld [vmem:[#allocation18 + $0x20] sm:$0xff]
    %v1228 = vld [vmem:[#allocation18 + $0x28] sm:$0xff]
    %v1229 = vld [vmem:[#allocation18 + $0x30] sm:$0xff]
    %v1230 = vld [vmem:[#allocation18 + $0x38] sm:$0xff]
    %v1231 = vld [vmem:[#allocation18 + $0x40] sm:$0xff]
    %v1232 = vld [vmem:[#allocation18 + $0x48] sm:$0xff]
    %v1233 = vld [vmem:[#allocation18 + $0x50] sm:$0xff]
    %v1234 = vld [vmem:[#allocation18 + $0x58] sm:$0xff]
    %v1235 = vld [vmem:[#allocation18 + $0x60] sm:$0xff]
    %v1236 = vld [vmem:[#allocation18 + $0x68] sm:$0xff]
    %v1237 = vld [vmem:[#allocation18 + $0x70] sm:$0xff]
    %v1238 = vld [vmem:[#allocation18 + $0x78] sm:$0xff]
    %v1239 = vld [vmem:[#allocation18 + $0x80] sm:$0xff]
    %v1240 = vld [vmem:[#allocation18 + $0x88] sm:$0xff]
    %v1241 = vld [vmem:[#allocation18 + $0x90] sm:$0xff]
    %v1242 = vld [vmem:[#allocation18 + $0x98] sm:$0xff]
    %v1243 = vld [vmem:[#allocation18 + $0xa0] sm:$0xff]
    %v1244 = vld [vmem:[#allocation18 + $0xa8] sm:$0xff]
    %v1245 = vld [vmem:[#allocation18 + $0xb0] sm:$0xff]
    %v1246 = vld [vmem:[#allocation18 + $0xb8] sm:$0xff]
    %v1247 = vld [vmem:[#allocation18 + $0xc0] sm:$0xff]
    %v1248 = vld [vmem:[#allocation18 + $0xc8] sm:$0xff]
    %v1249 = vld [vmem:[#allocation18 + $0xd0] sm:$0xff]
    %v1250 = vld [vmem:[#allocation18 + $0xd8] sm:$0xff]
    %v1251 = vld [vmem:[#allocation18 + $0xe0] sm:$0xff]
    %v1252 = vld [vmem:[#allocation18 + $0xe8] sm:$0xff]
    %v1253 = vld [vmem:[#allocation18 + $0xf0] sm:$0xff]
    %v1254 = vld [vmem:[#allocation18 + $0xf8] sm:$0xff]
    %v1255 = vld [vmem:[#allocation18 + $0x100] sm:$0xff]
    %v1256 = vld [vmem:[#allocation18 + $0x108] sm:$0xff]
    %v1257 = vld [vmem:[#allocation18 + $0x110] sm:$0xff]
    %v1258 = vld [vmem:[#allocation18 + $0x118] sm:$0xff]
    %v1259 = vld [vmem:[#allocation18 + $0x120] sm:$0xff]
    %v1260 = vld [vmem:[#allocation18 + $0x128] sm:$0xff]
    %v1261 = vld [vmem:[#allocation18 + $0x130] sm:$0xff]
    %v1262 = vld [vmem:[#allocation18 + $0x138] sm:$0xff]
    %v1263 = vld [vmem:[#allocation18 + $0x140] sm:$0xff]
    %v1264 = vld [vmem:[#allocation18 + $0x148] sm:$0xff]
    %v1265 = vld [vmem:[#allocation18 + $0x150] sm:$0xff]
    %v1266 = vld [vmem:[#allocation18 + $0x158] sm:$0xff]
    %v1267 = vld [vmem:[#allocation18 + $0x160] sm:$0xff]
    %v1268 = vld [vmem:[#allocation18 + $0x168] sm:$0xff]
    %v1269 = vld [vmem:[#allocation18 + $0x170] sm:$0xff]
    %v1270 = vld [vmem:[#allocation18 + $0x178] sm:$0xff]
    %v1271 = vld [vmem:[#allocation18 + $0x180] sm:$0xff]
    %v1272 = vld [vmem:[#allocation18 + $0x188] sm:$0xff]
    %v1273 = vld [vmem:[#allocation18 + $0x190] sm:$0xff]
    %v1274 = vld [vmem:[#allocation18 + $0x198] sm:$0xff]
    %v1275 = vld [vmem:[#allocation18 + $0x1a0] sm:$0xff]
    %v1276 = vld [vmem:[#allocation18 + $0x1a8] sm:$0xff]
    %v1277 = vld [vmem:[#allocation18 + $0x1b0] sm:$0xff]
    %v1278 = vld [vmem:[#allocation18 + $0x1b8] sm:$0xff]
    %v1279 = vld [vmem:[#allocation18 + $0x1c0] sm:$0xff]
    %v1280 = vld [vmem:[#allocation18 + $0x1c8] sm:$0xff]
    %v1281 = vld [vmem:[#allocation18 + $0x1d0] sm:$0xff]
    %v1282 = vld [vmem:[#allocation18 + $0x1d8] sm:$0xff]
    %v1283 = vld [vmem:[#allocation18 + $0x1e0] sm:$0xff]
    %v1284 = vld [vmem:[#allocation18 + $0x1e8] sm:$0xff]
    %v1285 = vld [vmem:[#allocation18 + $0x1f0] sm:$0xff]
    %v1286 = vld [vmem:[#allocation18 + $0x1f8] sm:$0xff]
    %1287 = vmatpush.msra.mxu0 %v1238
    %1288 = vmatpush.msra.mxu0 %v1237
    %1289 = vmatpush.msra.mxu0 %v1236
    %1290 = vmatpush.msra.mxu0 %v1235
    %1291 = vmatpush.msra.mxu0 %v1234
    %1292 = vmatpush.msra.mxu0 %v1233
    %1293 = vmatpush.msra.mxu0 %v1232
    %1294 = vmatpush.msra.mxu0 %v1231
    %1295 = vmatpush.msra.mxu0 %v1230
    %1296 = vmatpush.msra.mxu0 %v1229
    %1297 = vmatpush.msra.mxu0 %v1228
    %1298 = vmatpush.msra.mxu0 %v1227
    %1299 = vmatpush.msra.mxu0 %v1226
    %1300 = vmatpush.msra.mxu0 %v1225
    %1301 = vmatpush.msra.mxu0 %v1224
    %1302 = vmatpush.msra.mxu0 %v1223
    %1303 = vmatmul.f32.gmra.mxu0 %v1219
    %v1304 = vpop.f32.mrf.mxu0
    %v1305 = vadd.f32 0.0, %v1304
    %1306 = vdwg.mxu0
    %1307 = vmatpush.msra.mxu0 %v1254
    %1308 = vmatpush.msra.mxu0 %v1253
    %1309 = vmatpush.msra.mxu0 %v1252
    %1310 = vmatpush.msra.mxu0 %v1251
    %1311 = vmatpush.msra.mxu0 %v1250
    %1312 = vmatpush.msra.mxu0 %v1249
    %1313 = vmatpush.msra.mxu0 %v1248
    %1314 = vmatpush.msra.mxu0 %v1247
    %1315 = vmatpush.msra.mxu0 %v1246
    %1316 = vmatpush.msra.mxu0 %v1245
    %1317 = vmatpush.msra.mxu0 %v1244
    %1318 = vmatpush.msra.mxu0 %v1243
    %1319 = vmatpush.msra.mxu0 %v1242
    %1320 = vmatpush.msra.mxu0 %v1241
    %1321 = vmatpush.msra.mxu0 %v1240
    %1322 = vmatpush.msra.mxu0 %v1239
    %1323 = vmatmul.f32.gmra.mxu0 %v1220
    %v1324 = vpop.f32.mrf.mxu0
    %v1325 = vadd.f32 %v1305, %v1324
    %1326 = vdwg.mxu0
    %1327 = vmatpush.msra.mxu0 %v1270
    %1328 = vmatpush.msra.mxu0 %v1269
    %1329 = vmatpush.msra.mxu0 %v1268
    %1330 = vmatpush.msra.mxu0 %v1267
    %1331 = vmatpush.msra.mxu0 %v1266
    %1332 = vmatpush.msra.mxu0 %v1265
    %1333 = vmatpush.msra.mxu0 %v1264
    %1334 = vmatpush.msra.mxu0 %v1263
    %1335 = vmatpush.msra.mxu0 %v1262
    %1336 = vmatpush.msra.mxu0 %v1261
    %1337 = vmatpush.msra.mxu0 %v1260
    %1338 = vmatpush.msra.mxu0 %v1259
    %1339 = vmatpush.msra.mxu0 %v1258
    %1340 = vmatpush.msra.mxu0 %v1257
    %1341 = vmatpush.msra.mxu0 %v1256
    %1342 = vmatpush.msra.mxu0 %v1255
    %1343 = vmatmul.f32.gmra.mxu0 %v1221
    %v1344 = vpop.f32.mrf.mxu0
    %v1345 = vadd.f32 %v1325, %v1344
    %1346 = vdwg.mxu0
    %1347 = vmatpush.msra.mxu0 %v1286
    %1348 = vmatpush.msra.mxu0 %v1285
    %1349 = vmatpush.msra.mxu0 %v1284
    %1350 = vmatpush.msra.mxu0 %v1283
    %1351 = vmatpush.msra.mxu0 %v1282
    %1352 = vmatpush.msra.mxu0 %v1281
    %1353 = vmatpush.msra.mxu0 %v1280
    %1354 = vmatpush.msra.mxu0 %v1279
    %1355 = vmatpush.msra.mxu0 %v1278
    %1356 = vmatpush.msra.mxu0 %v1277
    %1357 = vmatpush.msra.mxu0 %v1276
    %1358 = vmatpush.msra.mxu0 %v1275
    %1359 = vmatpush.msra.mxu0 %v1274
    %1360 = vmatpush.msra.mxu0 %v1273
    %1361 = vmatpush.msra.mxu0 %v1272
    %1362 = vmatpush.msra.mxu0 %v1271
    %1363 = vmatmul.f32.gmra.mxu0 %v1222
    %v1364 = vpop.f32.mrf.mxu0
    %v1365 = vadd.f32 %v1345, %v1364
    %1366 = vdwg.mxu0
    %v1367 = vadd.f32 %v874, %v1365
    %v1368 = vld [vmem:[#allocation19] sm:$0x1]
    %v1370 = vperm.slane %v1368, 0
    %v1372 = vadd.f32 %v1367, %v1370
    %s1373 = scalar_lea.vmem %s10, 1
    %v1374 = vld [vmem:[%s1373] sm:$0x1]
    %s1375 = scalar_lea.vmem [#allocation12], 1
    %v1376 = vld [vmem:[%s1375] sm:$0x1]
    %v1377 = vsel %vm320, %v1372, 0.0
    %1378 = vadd.xlane.f32.xlu0 %v1377
    %v1379 = vpop.xlane.xlu0 %1378
    %v1380 = vmul.f32 %v1372, %v1372
    %v1381 = vsel %vm320, %v1380, 0.0
    %1382 = vadd.xlane.f32.xlu0 %v1381
    %v1383 = vpop.xlane.xlu0 %1382
    %v1384 = vmul.f32 %v1379, 0.0078125
    %v1385 = vmul.f32 %v1383, 0.0078125
    %v1386 = vmul.f32 %v1384, %v1384
    %v1387 = vsub.f32 %v1385, %v1386
    %v1388 = vsub.f32 %v1372, %v1384
    %v1389 = vadd.f32 %v1387, 1e-05
    %v1390 = vrsqrt.pop %v1389
    %v1391 = vmul.f32 %v1390, %v1389
    %v1392 = vmul.f32 %v1391, %v1390
    %v1393 = vmul.f32 0.5, %v1392
    %v1394 = vsub.f32 1.5, %v1393
    %v1395 = vmul.f32 %v1390, %v1394
    %vm1396 = vweird.f32 %v1389
    %vm1397 = vweird.f32 %v1390
    %vm1398 = vmor %vm1396, %vm1397
    %v1399 = vsel %vm1398, %v1390, %v1395
    %v1400 = vmul.f32 %v1388, %v1399
    %v1402 = vperm.slane %v1374, 0
    %v1404 = vmul.f32 %v1400, %v1402
    %v1406 = vperm.slane %v1376, 0
    %v1408 = vadd.f32 %v1404, %v1406
    %s1409 = scalar_lea.vmem [#allocation7], 384
    %v1410 = vld [vmem:[%s1409] sm:$0xff]
    %v1411 = vld [vmem:[%s1409 + $0x8] sm:$0xff]
    %v1412 = vld [vmem:[%s1409 + $0x10] sm:$0xff]
    %v1413 = vld [vmem:[%s1409 + $0x18] sm:$0xff]
    %v1414 = vld [vmem:[%s1409 + $0x20] sm:$0xff]
    %v1415 = vld [vmem:[%s1409 + $0x28] sm:$0xff]
    %v1416 = vld [vmem:[%s1409 + $0x30] sm:$0xff]
    %v1417 = vld [vmem:[%s1409 + $0x38] sm:$0xff]
    %v1418 = vld [vmem:[%s1409 + $0x40] sm:$0xff]
    %v1419 = vld [vmem:[%s1409 + $0x48] sm:$0xff]
    %v1420 = vld [vmem:[%s1409 + $0x50] sm:$0xff]
    %v1421 = vld [vmem:[%s1409 + $0x58] sm:$0xff]
    %v1422 = vld [vmem:[%s1409 + $0x60] sm:$0xff]
    %v1423 = vld [vmem:[%s1409 + $0x68] sm:$0xff]
    %v1424 = vld [vmem:[%s1409 + $0x70] sm:$0xff]
    %v1425 = vld [vmem:[%s1409 + $0x78] sm:$0xff]
    %v1426 = vld [vmem:[%s1409 + $0x80] sm:$0xff]
    %v1427 = vld [vmem:[%s1409 + $0x88] sm:$0xff]
    %v1428 = vld [vmem:[%s1409 + $0x90] sm:$0xff]
    %v1429 = vld [vmem:[%s1409 + $0x98] sm:$0xff]
    %v1430 = vld [vmem:[%s1409 + $0xa0] sm:$0xff]
    %v1431 = vld [vmem:[%s1409 + $0xa8] sm:$0xff]
    %v1432 = vld [vmem:[%s1409 + $0xb0] sm:$0xff]
    %v1433 = vld [vmem:[%s1409 + $0xb8] sm:$0xff]
    %v1434 = vld [vmem:[%s1409 + $0xc0] sm:$0xff]
    %v1435 = vld [vmem:[%s1409 + $0xc8] sm:$0xff]
    %v1436 = vld [vmem:[%s1409 + $0xd0] sm:$0xff]
    %v1437 = vld [vmem:[%s1409 + $0xd8] sm:$0xff]
    %v1438 = vld [vmem:[%s1409 + $0xe0] sm:$0xff]
    %v1439 = vld [vmem:[%s1409 + $0xe8] sm:$0xff]
    %v1440 = vld [vmem:[%s1409 + $0xf0] sm:$0xff]
    %v1441 = vld [vmem:[%s1409 + $0xf8] sm:$0xff]
    %v1442 = vld [vmem:[%s1409 + $0x100] sm:$0xff]
    %v1443 = vld [vmem:[%s1409 + $0x108] sm:$0xff]
    %v1444 = vld [vmem:[%s1409 + $0x110] sm:$0xff]
    %v1445 = vld [vmem:[%s1409 + $0x118] sm:$0xff]
    %v1446 = vld [vmem:[%s1409 + $0x120] sm:$0xff]
    %v1447 = vld [vmem:[%s1409 + $0x128] sm:$0xff]
    %v1448 = vld [vmem:[%s1409 + $0x130] sm:$0xff]
    %v1449 = vld [vmem:[%s1409 + $0x138] sm:$0xff]
    %v1450 = vld [vmem:[%s1409 + $0x140] sm:$0xff]
    %v1451 = vld [vmem:[%s1409 + $0x148] sm:$0xff]
    %v1452 = vld [vmem:[%s1409 + $0x150] sm:$0xff]
    %v1453 = vld [vmem:[%s1409 + $0x158] sm:$0xff]
    %v1454 = vld [vmem:[%s1409 + $0x160] sm:$0xff]
    %v1455 = vld [vmem:[%s1409 + $0x168] sm:$0xff]
    %v1456 = vld [vmem:[%s1409 + $0x170] sm:$0xff]
    %v1457 = vld [vmem:[%s1409 + $0x178] sm:$0xff]
    %s1458 = scalar_lea.vmem [#allocation9], 3
    %v1459 = vld [vmem:[%s1458] sm:$0x7]
    %v1461 = vperm.slane %v1459, 0
    %v1462 = vperm.slane %v1459, 1
    %v1463 = vperm.slane %v1459, 2
    %1467 = vmatpush.msra.mxu0 %v1455
    %1468 = vmatpush.msra.mxu0 %v1452
    %1469 = vmatpush.msra.mxu0 %v1449
    %1470 = vmatpush.msra.mxu0 %v1446
    %1471 = vmatpush.msra.mxu0 %v1443
    %1472 = vmatpush.msra.mxu0 %v1440
    %1473 = vmatpush.msra.mxu0 %v1437
    %1474 = vmatpush.msra.mxu0 %v1434
    %1475 = vmatpush.msra.mxu0 %v1431
    %1476 = vmatpush.msra.mxu0 %v1428
    %1477 = vmatpush.msra.mxu0 %v1425
    %1478 = vmatpush.msra.mxu0 %v1422
    %1479 = vmatpush.msra.mxu0 %v1419
    %1480 = vmatpush.msra.mxu0 %v1416
    %1481 = vmatpush.msra.mxu0 %v1413
    %1482 = vmatpush.msra.mxu0 %v1410
    %1483 = vmatmul.f32.gmra.mxu0 %v1408
    %v1484 = vpop.f32.mrf.mxu0
    %v1485 = vadd.f32 %v1461, %v1484
    %1486 = vdwg.mxu0
    %1487 = vmatpush.msra.mxu0 %v1456
    %1488 = vmatpush.msra.mxu0 %v1453
    %1489 = vmatpush.msra.mxu0 %v1450
    %1490 = vmatpush.msra.mxu0 %v1447
    %1491 = vmatpush.msra.mxu0 %v1444
    %1492 = vmatpush.msra.mxu0 %v1441
    %1493 = vmatpush.msra.mxu0 %v1438
    %1494 = vmatpush.msra.mxu0 %v1435
    %1495 = vmatpush.msra.mxu0 %v1432
    %1496 = vmatpush.msra.mxu0 %v1429
    %1497 = vmatpush.msra.mxu0 %v1426
    %1498 = vmatpush.msra.mxu0 %v1423
    %1499 = vmatpush.msra.mxu0 %v1420
    %1500 = vmatpush.msra.mxu0 %v1417
    %1501 = vmatpush.msra.mxu0 %v1414
    %1502 = vmatpush.msra.mxu0 %v1411
    %1503 = vmatmul.f32.gmra.mxu0 %v1408
    %v1504 = vpop.f32.mrf.mxu0
    %v1505 = vadd.f32 %v1462, %v1504
    %1506 = vdwg.mxu0
    %1507 = vmatpush.msra.mxu0 %v1457
    %1508 = vmatpush.msra.mxu0 %v1454
    %1509 = vmatpush.msra.mxu0 %v1451
    %1510 = vmatpush.msra.mxu0 %v1448
    %1511 = vmatpush.msra.mxu0 %v1445
    %1512 = vmatpush.msra.mxu0 %v1442
    %1513 = vmatpush.msra.mxu0 %v1439
    %1514 = vmatpush.msra.mxu0 %v1436
    %1515 = vmatpush.msra.mxu0 %v1433
    %1516 = vmatpush.msra.mxu0 %v1430
    %1517 = vmatpush.msra.mxu0 %v1427
    %1518 = vmatpush.msra.mxu0 %v1424
    %1519 = vmatpush.msra.mxu0 %v1421
    %1520 = vmatpush.msra.mxu0 %v1418
    %1521 = vmatpush.msra.mxu0 %v1415
    %1522 = vmatpush.msra.mxu0 %v1412
    %1523 = vmatmul.f32.gmra.mxu0 %v1408
    %v1524 = vpop.f32.mrf.mxu0
    %v1525 = vadd.f32 %v1463, %v1524
    %1526 = vdwg.mxu0
    %v1527 = vmul.f32 %v1485, %v1505
    %v1528 = vsel %vm470, %v1527, 0.0
    %1529 = vadd.xlane.f32.xlu0 %v1528
    %v1530 = vpop.xlane.xlu0 %1529
    %v1531 = vmul.f32 %v1530, 0.17677669
    %v1533 = vrot.slane %v1505, 2
    %v1535 = vmul.f32 %v1485, %v1533
    %v1536 = vsel %vm470, %v1535, 0.0
    %1537 = vadd.xlane.f32.xlu0 %v1536
    %v1538 = vpop.xlane.xlu0 %1537
    %v1539 = vmul.f32 %v1538, 0.17677669
    %v1540 = vrot.slane %v1505, 6
    %v1542 = vmul.f32 %v1485, %v1540
    %v1543 = vsel %vm486, %v1542, 0.0
    %1544 = vadd.xlane.f32.xlu0 %v1543
    %v1545 = vpop.xlane.xlu0 %1544
    %v1546 = vmul.f32 %v1545, 0.17677669
    %v1547 = vsel %vm486, %v1527, 0.0
    %1548 = vadd.xlane.f32.xlu0 %v1547
    %v1549 = vpop.xlane.xlu0 %1548
    %v1550 = vmul.f32 %v1549, 0.17677669
    %v1551 = vsub.f32 %v1531, %v1539
    %v1552 = vsub.f32 0.0, %v1551
    %v1553 = vmul.f32 %v1552, 1.442695
    %v1554 = vpow.pop %v1553
    %v1555 = vadd.f32 %v1554, 1.0
    %v1556 = vrcp.pop %v1555
    %v1557 = vmul.f32 %v1555, %v1556
    %v1558 = vsub.f32 1.0, %v1557
    %v1559 = vmul.f32 %v1556, %v1558
    %v1560 = vadd.f32 %v1556, %v1559
    %vm1561 = vweird.f32 %v1555
    %vm1562 = vweird.f32 %v1556
    %vm1563 = vmor %vm1561, %vm1562
    %v1564 = vsel %vm1563, %v1556, %v1560
    %v1565 = vand.u32 2147483647, %v1555
    %vm1566 = vcmp.eq.f32.partialorder %v1565, 8.507059e+37
    %v1567 = vand.u32 %v1555, 2147483648
    %v1568 = vor.u32 1.1754944e-38, %v1567
    %v1569 = vsel %vm1566, %v1568, %v1564
    %v1570 = vmul.f32 1.0, %v1569
    %v1571 = vsub.f32 %v1546, %v1550
    %v1572 = vsub.f32 0.0, %v1571
    %v1573 = vmul.f32 %v1572, 1.442695
    %v1574 = vpow.pop %v1573
    %v1575 = vadd.f32 %v1574, 1.0
    %v1576 = vrcp.pop %v1575
    %v1577 = vmul.f32 %v1575, %v1576
    %v1578 = vsub.f32 1.0, %v1577
    %v1579 = vmul.f32 %v1576, %v1578
    %v1580 = vadd.f32 %v1576, %v1579
    %vm1581 = vweird.f32 %v1575
    %vm1582 = vweird.f32 %v1576
    %vm1583 = vmor %vm1581, %vm1582
    %v1584 = vsel %vm1583, %v1576, %v1580
    %v1585 = vand.u32 2147483647, %v1575
    %vm1586 = vcmp.eq.f32.partialorder %v1585, 8.507059e+37
    %v1587 = vand.u32 %v1575, 2147483648
    %v1588 = vor.u32 1.1754944e-38, %v1587
    %v1589 = vsel %vm1586, %v1588, %v1584
    %v1590 = vmul.f32 1.0, %v1589
    %v1591 = vmul.f32 %v1570, %v1525
    %v1592 = vsub.f32 1.0, %v1570
    %v1594 = vrot.slane %v1525, 2
    %v1596 = vmul.f32 %v1592, %v1594
    %v1597 = vadd.f32 %v1591, %v1596
    %v1598 = vrot.slane %v1525, 6
    %v1600 = vmul.f32 %v1590, %v1598
    %v1601 = vsub.f32 1.0, %v1590
    %v1602 = vmul.f32 %v1601, %v1525
    %v1603 = vadd.f32 %v1600, %v1602
    %1605 = vrot.lane.b32.xlu0 %v1527, 96
    %v1606 = vpop.permute.xlu0 %1605
    %v1608 = vsel %vm470, %v1606, 0.0
    %1609 = vadd.xlane.f32.xlu0 %v1608
    %v1610 = vpop.xlane.xlu0 %1609
    %v1611 = vmul.f32 %v1610, 0.17677669
    %1613 = vrot.lane.b32.xlu0 %v1535, 96
    %v1614 = vpop.permute.xlu0 %1613
    %v1616 = vsel %vm470, %v1614, 0.0
    %1617 = vadd.xlane.f32.xlu0 %v1616
    %v1618 = vpop.xlane.xlu0 %1617
    %v1619 = vmul.f32 %v1618, 0.17677669
    %1621 = vrot.lane.b32.xlu0 %v1542, 96
    %v1622 = vpop.permute.xlu0 %1621
    %v1624 = vsel %vm486, %v1622, 0.0
    %1625 = vadd.xlane.f32.xlu0 %v1624
    %v1626 = vpop.xlane.xlu0 %1625
    %v1627 = vmul.f32 %v1626, 0.17677669
    %v1628 = vsel %vm486, %v1606, 0.0
    %1629 = vadd.xlane.f32.xlu0 %v1628
    %v1630 = vpop.xlane.xlu0 %1629
    %v1631 = vmul.f32 %v1630, 0.17677669
    %v1632 = vsub.f32 %v1611, %v1619
    %v1633 = vsub.f32 0.0, %v1632
    %v1634 = vmul.f32 %v1633, 1.442695
    %v1635 = vpow.pop %v1634
    %v1636 = vadd.f32 %v1635, 1.0
    %v1637 = vrcp.pop %v1636
    %v1638 = vmul.f32 %v1636, %v1637
    %v1639 = vsub.f32 1.0, %v1638
    %v1640 = vmul.f32 %v1637, %v1639
    %v1641 = vadd.f32 %v1637, %v1640
    %vm1642 = vweird.f32 %v1636
    %vm1643 = vweird.f32 %v1637
    %vm1644 = vmor %vm1642, %vm1643
    %v1645 = vsel %vm1644, %v1637, %v1641
    %v1646 = vand.u32 2147483647, %v1636
    %vm1647 = vcmp.eq.f32.partialorder %v1646, 8.507059e+37
    %v1648 = vand.u32 %v1636, 2147483648
    %v1649 = vor.u32 1.1754944e-38, %v1648
    %v1650 = vsel %vm1647, %v1649, %v1645
    %v1651 = vmul.f32 1.0, %v1650
    %v1652 = vsub.f32 %v1627, %v1631
    %v1653 = vsub.f32 0.0, %v1652
    %v1654 = vmul.f32 %v1653, 1.442695
    %v1655 = vpow.pop %v1654
    %v1656 = vadd.f32 %v1655, 1.0
    %v1657 = vrcp.pop %v1656
    %v1658 = vmul.f32 %v1656, %v1657
    %v1659 = vsub.f32 1.0, %v1658
    %v1660 = vmul.f32 %v1657, %v1659
    %v1661 = vadd.f32 %v1657, %v1660
    %vm1662 = vweird.f32 %v1656
    %vm1663 = vweird.f32 %v1657
    %vm1664 = vmor %vm1662, %vm1663
    %v1665 = vsel %vm1664, %v1657, %v1661
    %v1666 = vand.u32 2147483647, %v1656
    %vm1667 = vcmp.eq.f32.partialorder %v1666, 8.507059e+37
    %v1668 = vand.u32 %v1656, 2147483648
    %v1669 = vor.u32 1.1754944e-38, %v1668
    %v1670 = vsel %vm1667, %v1669, %v1665
    %v1671 = vmul.f32 1.0, %v1670
    %v1672 = vmul.f32 %v1651, %v1525
    %v1673 = vsub.f32 1.0, %v1651
    %1674 = vrot.lane.b32.xlu0 %v1594, 96
    %v1675 = vpop.permute.xlu0 %1674
    %v1677 = vmul.f32 %v1673, %v1675
    %1679 = vrot.lane.b32.xlu0 %v1677, 32
    %v1680 = vpop.permute.xlu0 %1679
    %v1682 = vadd.f32 %v1672, %v1680
    %1683 = vrot.lane.b32.xlu0 %v1598, 96
    %v1684 = vpop.permute.xlu0 %1683
    %v1686 = vmul.f32 %v1671, %v1684
    %v1687 = vsub.f32 1.0, %v1671
    %v1688 = vmul.f32 %v1687, %v1525
    %1690 = vrot.lane.b32.xlu0 %v1688, 96
    %v1691 = vpop.permute.xlu0 %1690
    %v1693 = vadd.f32 %v1686, %v1691
    %1694 = vrot.lane.b32.xlu0 %v1527, 64
    %v1695 = vpop.permute.xlu0 %1694
    %v1697 = vsel %vm470, %v1695, 0.0
    %1698 = vadd.xlane.f32.xlu0 %v1697
    %v1699 = vpop.xlane.xlu0 %1698
    %v1700 = vmul.f32 %v1699, 0.17677669
    %1701 = vrot.lane.b32.xlu0 %v1535, 64
    %v1702 = vpop.permute.xlu0 %1701
    %v1704 = vsel %vm470, %v1702, 0.0
    %1705 = vadd.xlane.f32.xlu0 %v1704
    %v1706 = vpop.xlane.xlu0 %1705
    %v1707 = vmul.f32 %v1706, 0.17677669
    %1708 = vrot.lane.b32.xlu0 %v1542, 64
    %v1709 = vpop.permute.xlu0 %1708
    %v1711 = vsel %vm486, %v1709, 0.0
    %1712 = vadd.xlane.f32.xlu0 %v1711
    %v1713 = vpop.xlane.xlu0 %1712
    %v1714 = vmul.f32 %v1713, 0.17677669
    %v1715 = vsel %vm486, %v1695, 0.0
    %1716 = vadd.xlane.f32.xlu0 %v1715
    %v1717 = vpop.xlane.xlu0 %1716
    %v1718 = vmul.f32 %v1717, 0.17677669
    %v1719 = vsub.f32 %v1700, %v1707
    %v1720 = vsub.f32 0.0, %v1719
    %v1721 = vmul.f32 %v1720, 1.442695
    %v1722 = vpow.pop %v1721
    %v1723 = vadd.f32 %v1722, 1.0
    %v1724 = vrcp.pop %v1723
    %v1725 = vmul.f32 %v1723, %v1724
    %v1726 = vsub.f32 1.0, %v1725
    %v1727 = vmul.f32 %v1724, %v1726
    %v1728 = vadd.f32 %v1724, %v1727
    %vm1729 = vweird.f32 %v1723
    %vm1730 = vweird.f32 %v1724
    %vm1731 = vmor %vm1729, %vm1730
    %v1732 = vsel %vm1731, %v1724, %v1728
    %v1733 = vand.u32 2147483647, %v1723
    %vm1734 = vcmp.eq.f32.partialorder %v1733, 8.507059e+37
    %v1735 = vand.u32 %v1723, 2147483648
    %v1736 = vor.u32 1.1754944e-38, %v1735
    %v1737 = vsel %vm1734, %v1736, %v1732
    %v1738 = vmul.f32 1.0, %v1737
    %v1739 = vsub.f32 %v1714, %v1718
    %v1740 = vsub.f32 0.0, %v1739
    %v1741 = vmul.f32 %v1740, 1.442695
    %v1742 = vpow.pop %v1741
    %v1743 = vadd.f32 %v1742, 1.0
    %v1744 = vrcp.pop %v1743
    %v1745 = vmul.f32 %v1743, %v1744
    %v1746 = vsub.f32 1.0, %v1745
    %v1747 = vmul.f32 %v1744, %v1746
    %v1748 = vadd.f32 %v1744, %v1747
    %vm1749 = vweird.f32 %v1743
    %vm1750 = vweird.f32 %v1744
    %vm1751 = vmor %vm1749, %vm1750
    %v1752 = vsel %vm1751, %v1744, %v1748
    %v1753 = vand.u32 2147483647, %v1743
    %vm1754 = vcmp.eq.f32.partialorder %v1753, 8.507059e+37
    %v1755 = vand.u32 %v1743, 2147483648
    %v1756 = vor.u32 1.1754944e-38, %v1755
    %v1757 = vsel %vm1754, %v1756, %v1752
    %v1758 = vmul.f32 1.0, %v1757
    %v1759 = vmul.f32 %v1738, %v1525
    %v1760 = vsub.f32 1.0, %v1738
    %1761 = vrot.lane.b32.xlu0 %v1594, 64
    %v1762 = vpop.permute.xlu0 %1761
    %v1764 = vmul.f32 %v1760, %v1762
    %1766 = vrot.lane.b32.xlu0 %v1764, 64
    %v1767 = vpop.permute.xlu0 %1766
    %v1769 = vadd.f32 %v1759, %v1767
    %1770 = vrot.lane.b32.xlu0 %v1598, 64
    %v1771 = vpop.permute.xlu0 %1770
    %v1773 = vmul.f32 %v1758, %v1771
    %v1774 = vsub.f32 1.0, %v1758
    %v1775 = vmul.f32 %v1774, %v1525
    %1777 = vrot.lane.b32.xlu0 %v1775, 64
    %v1778 = vpop.permute.xlu0 %1777
    %v1780 = vadd.f32 %v1773, %v1778
    %1781 = vrot.lane.b32.xlu0 %v1527, 32
    %v1782 = vpop.permute.xlu0 %1781
    %v1784 = vsel %vm470, %v1782, 0.0
    %1785 = vadd.xlane.f32.xlu0 %v1784
    %v1786 = vpop.xlane.xlu0 %1785
    %v1787 = vmul.f32 %v1786, 0.17677669
    %1788 = vrot.lane.b32.xlu0 %v1535, 32
    %v1789 = vpop.permute.xlu0 %1788
    %v1791 = vsel %vm470, %v1789, 0.0
    %1792 = vadd.xlane.f32.xlu0 %v1791
    %v1793 = vpop.xlane.xlu0 %1792
    %v1794 = vmul.f32 %v1793, 0.17677669
    %1795 = vrot.lane.b32.xlu0 %v1542, 32
    %v1796 = vpop.permute.xlu0 %1795
    %v1798 = vsel %vm486, %v1796, 0.0
    %1799 = vadd.xlane.f32.xlu0 %v1798
    %v1800 = vpop.xlane.xlu0 %1799
    %v1801 = vmul.f32 %v1800, 0.17677669
    %v1802 = vsel %vm486, %v1782, 0.0
    %1803 = vadd.xlane.f32.xlu0 %v1802
    %v1804 = vpop.xlane.xlu0 %1803
    %v1805 = vmul.f32 %v1804, 0.17677669
    %v1806 = vsub.f32 %v1787, %v1794
    %v1807 = vsub.f32 0.0, %v1806
    %v1808 = vmul.f32 %v1807, 1.442695
    %v1809 = vpow.pop %v1808
    %v1810 = vadd.f32 %v1809, 1.0
    %v1811 = vrcp.pop %v1810
    %v1812 = vmul.f32 %v1810, %v1811
    %v1813 = vsub.f32 1.0, %v1812
    %v1814 = vmul.f32 %v1811, %v1813
    %v1815 = vadd.f32 %v1811, %v1814
    %vm1816 = vweird.f32 %v1810
    %vm1817 = vweird.f32 %v1811
    %vm1818 = vmor %vm1816, %vm1817
    %v1819 = vsel %vm1818, %v1811, %v1815
    %v1820 = vand.u32 2147483647, %v1810
    %vm1821 = vcmp.eq.f32.partialorder %v1820, 8.507059e+37
    %v1822 = vand.u32 %v1810, 2147483648
    %v1823 = vor.u32 1.1754944e-38, %v1822
    %v1824 = vsel %vm1821, %v1823, %v1819
    %v1825 = vmul.f32 1.0, %v1824
    %v1826 = vsub.f32 %v1801, %v1805
    %v1827 = vsub.f32 0.0, %v1826
    %v1828 = vmul.f32 %v1827, 1.442695
    %v1829 = vpow.pop %v1828
    %v1830 = vadd.f32 %v1829, 1.0
    %v1831 = vrcp.pop %v1830
    %v1832 = vmul.f32 %v1830, %v1831
    %v1833 = vsub.f32 1.0, %v1832
    %v1834 = vmul.f32 %v1831, %v1833
    %v1835 = vadd.f32 %v1831, %v1834
    %vm1836 = vweird.f32 %v1830
    %vm1837 = vweird.f32 %v1831
    %vm1838 = vmor %vm1836, %vm1837
    %v1839 = vsel %vm1838, %v1831, %v1835
    %v1840 = vand.u32 2147483647, %v1830
    %vm1841 = vcmp.eq.f32.partialorder %v1840, 8.507059e+37
    %v1842 = vand.u32 %v1830, 2147483648
    %v1843 = vor.u32 1.1754944e-38, %v1842
    %v1844 = vsel %vm1841, %v1843, %v1839
    %v1845 = vmul.f32 1.0, %v1844
    %v1846 = vmul.f32 %v1825, %v1525
    %v1847 = vsub.f32 1.0, %v1825
    %1848 = vrot.lane.b32.xlu0 %v1594, 32
    %v1849 = vpop.permute.xlu0 %1848
    %v1851 = vmul.f32 %v1847, %v1849
    %1853 = vrot.lane.b32.xlu0 %v1851, 96
    %v1854 = vpop.permute.xlu0 %1853
    %v1856 = vadd.f32 %v1846, %v1854
    %1857 = vrot.lane.b32.xlu0 %v1598, 32
    %v1858 = vpop.permute.xlu0 %1857
    %v1860 = vmul.f32 %v1845, %v1858
    %v1861 = vsub.f32 1.0, %v1845
    %v1862 = vmul.f32 %v1861, %v1525
    %1864 = vrot.lane.b32.xlu0 %v1862, 32
    %v1865 = vpop.permute.xlu0 %1864
    %v1867 = vadd.f32 %v1860, %v1865
    %v1868 = vsel %vm251, %v1597, %v1682
    %v1869 = vsel %vm813, %v1868, %v1769
    %v1870 = vsel %vm815, %v1869, %v1856
    %1872 = vrot.lane.b32.xlu0 %v1693, 32
    %v1873 = vpop.permute.xlu0 %1872
    %1876 = vrot.lane.b32.xlu0 %v1780, 64
    %v1877 = vpop.permute.xlu0 %1876
    %1880 = vrot.lane.b32.xlu0 %v1867, 96
    %v1881 = vpop.permute.xlu0 %1880
    %v1883 = vsel %vm251, %v1603, %v1873
    %v1884 = vsel %vm813, %v1883, %v1877
    %v1885 = vsel %vm815, %v1884, %v1881
    %v1886 = vsel %vm277, %v1870, %v1885
    %s1887 = scalar_lea.vmem [#allocation10], 128
    %v1888 = vld [vmem:[%s1887] sm:$0xff]
    %v1889 = vld [vmem:[%s1887 + $0x8] sm:$0xff]
    %v1890 = vld [vmem:[%s1887 + $0x10] sm:$0xff]
    %v1891 = vld [vmem:[%s1887 + $0x18] sm:$0xff]
    %v1892 = vld [vmem:[%s1887 + $0x20] sm:$0xff]
    %v1893 = vld [vmem:[%s1887 + $0x28] sm:$0xff]
    %v1894 = vld [vmem:[%s1887 + $0x30] sm:$0xff]
    %v1895 = vld [vmem:[%s1887 + $0x38] sm:$0xff]
    %v1896 = vld [vmem:[%s1887 + $0x40] sm:$0xff]
    %v1897 = vld [vmem:[%s1887 + $0x48] sm:$0xff]
    %v1898 = vld [vmem:[%s1887 + $0x50] sm:$0xff]
    %v1899 = vld [vmem:[%s1887 + $0x58] sm:$0xff]
    %v1900 = vld [vmem:[%s1887 + $0x60] sm:$0xff]
    %v1901 = vld [vmem:[%s1887 + $0x68] sm:$0xff]
    %v1902 = vld [vmem:[%s1887 + $0x70] sm:$0xff]
    %v1903 = vld [vmem:[%s1887 + $0x78] sm:$0xff]
    %1904 = vmatpush.msra.mxu0 %v1903
    %1905 = vmatpush.msra.mxu0 %v1902
    %1906 = vmatpush.msra.mxu0 %v1901
    %1907 = vmatpush.msra.mxu0 %v1900
    %1908 = vmatpush.msra.mxu0 %v1899
    %1909 = vmatpush.msra.mxu0 %v1898
    %1910 = vmatpush.msra.mxu0 %v1897
    %1911 = vmatpush.msra.mxu0 %v1896
    %1912 = vmatpush.msra.mxu0 %v1895
    %1913 = vmatpush.msra.mxu0 %v1894
    %1914 = vmatpush.msra.mxu0 %v1893
    %1915 = vmatpush.msra.mxu0 %v1892
    %1916 = vmatpush.msra.mxu0 %v1891
    %1917 = vmatpush.msra.mxu0 %v1890
    %1918 = vmatpush.msra.mxu0 %v1889
    %1919 = vmatpush.msra.mxu0 %v1888
    %1920 = vmatmul.f32.gmra.mxu0 %v1886
    %v1921 = vpop.f32.mrf.mxu0
    %v1922 = vadd.f32 0.0, %v1921
    %1923 = vdwg.mxu0
    %v1924 = vadd.f32 %v1372, %v1922
    %s1925 = scalar_lea.vmem %s9, 1
    %v1926 = vld [vmem:[%s1925] sm:$0x1]
    %v1928 = vperm.slane %v1926, 0
    %v1930 = vadd.f32 %v1924, %v1928
    %s1931 = scalar_lea.vmem %s12, 1
    %v1932 = vld [vmem:[%s1931] sm:$0x1]
    %s1933 = scalar_lea.vmem [#allocation13], 1
    %v1934 = vld [vmem:[%s1933] sm:$0x1]
    %v1935 = vsel %vm320, %v1930, 0.0
    %1936 = vadd.xlane.f32.xlu0 %v1935
    %v1937 = vpop.xlane.xlu0 %1936
    %v1938 = vmul.f32 %v1930, %v1930
    %v1939 = vsel %vm320, %v1938, 0.0
    %1940 = vadd.xlane.f32.xlu0 %v1939
    %v1941 = vpop.xlane.xlu0 %1940
    %v1942 = vmul.f32 %v1937, 0.0078125
    %v1943 = vmul.f32 %v1941, 0.0078125
    %v1944 = vmul.f32 %v1942, %v1942
    %v1945 = vsub.f32 %v1943, %v1944
    %v1946 = vsub.f32 %v1930, %v1942
    %v1947 = vadd.f32 %v1945, 1e-05
    %v1948 = vrsqrt.pop %v1947
    %v1949 = vmul.f32 %v1948, %v1947
    %v1950 = vmul.f32 %v1949, %v1948
    %v1951 = vmul.f32 0.5, %v1950
    %v1952 = vsub.f32 1.5, %v1951
    %v1953 = vmul.f32 %v1948, %v1952
    %vm1954 = vweird.f32 %v1947
    %vm1955 = vweird.f32 %v1948
    %vm1956 = vmor %vm1954, %vm1955
    %v1957 = vsel %vm1956, %v1948, %v1953
    %v1958 = vmul.f32 %v1946, %v1957
    %v1960 = vperm.slane %v1932, 0
    %v1962 = vmul.f32 %v1958, %v1960
    %v1964 = vperm.slane %v1934, 0
    %v1966 = vadd.f32 %v1962, %v1964
    %s1967 = scalar_lea.vmem [#allocation15], 512
    %v1968 = vld [vmem:[%s1967] sm:$0xff]
    %v1969 = vld [vmem:[%s1967 + $0x8] sm:$0xff]
    %v1970 = vld [vmem:[%s1967 + $0x10] sm:$0xff]
    %v1971 = vld [vmem:[%s1967 + $0x18] sm:$0xff]
    %v1972 = vld [vmem:[%s1967 + $0x20] sm:$0xff]
    %v1973 = vld [vmem:[%s1967 + $0x28] sm:$0xff]
    %v1974 = vld [vmem:[%s1967 + $0x30] sm:$0xff]
    %v1975 = vld [vmem:[%s1967 + $0x38] sm:$0xff]
    %v1976 = vld [vmem:[%s1967 + $0x40] sm:$0xff]
    %v1977 = vld [vmem:[%s1967 + $0x48] sm:$0xff]
    %v1978 = vld [vmem:[%s1967 + $0x50] sm:$0xff]
    %v1979 = vld [vmem:[%s1967 + $0x58] sm:$0xff]
    %v1980 = vld [vmem:[%s1967 + $0x60] sm:$0xff]
    %v1981 = vld [vmem:[%s1967 + $0x68] sm:$0xff]
    %v1982 = vld [vmem:[%s1967 + $0x70] sm:$0xff]
    %v1983 = vld [vmem:[%s1967 + $0x78] sm:$0xff]
    %v1984 = vld [vmem:[%s1967 + $0x80] sm:$0xff]
    %v1985 = vld [vmem:[%s1967 + $0x88] sm:$0xff]
    %v1986 = vld [vmem:[%s1967 + $0x90] sm:$0xff]
    %v1987 = vld [vmem:[%s1967 + $0x98] sm:$0xff]
    %v1988 = vld [vmem:[%s1967 + $0xa0] sm:$0xff]
    %v1989 = vld [vmem:[%s1967 + $0xa8] sm:$0xff]
    %v1990 = vld [vmem:[%s1967 + $0xb0] sm:$0xff]
    %v1991 = vld [vmem:[%s1967 + $0xb8] sm:$0xff]
    %v1992 = vld [vmem:[%s1967 + $0xc0] sm:$0xff]
    %v1993 = vld [vmem:[%s1967 + $0xc8] sm:$0xff]
    %v1994 = vld [vmem:[%s1967 + $0xd0] sm:$0xff]
    %v1995 = vld [vmem:[%s1967 + $0xd8] sm:$0xff]
    %v1996 = vld [vmem:[%s1967 + $0xe0] sm:$0xff]
    %v1997 = vld [vmem:[%s1967 + $0xe8] sm:$0xff]
    %v1998 = vld [vmem:[%s1967 + $0xf0] sm:$0xff]
    %v1999 = vld [vmem:[%s1967 + $0xf8] sm:$0xff]
    %v2000 = vld [vmem:[%s1967 + $0x100] sm:$0xff]
    %v2001 = vld [vmem:[%s1967 + $0x108] sm:$0xff]
    %v2002 = vld [vmem:[%s1967 + $0x110] sm:$0xff]
    %v2003 = vld [vmem:[%s1967 + $0x118] sm:$0xff]
    %v2004 = vld [vmem:[%s1967 + $0x120] sm:$0xff]
    %v2005 = vld [vmem:[%s1967 + $0x128] sm:$0xff]
    %v2006 = vld [vmem:[%s1967 + $0x130] sm:$0xff]
    %v2007 = vld [vmem:[%s1967 + $0x138] sm:$0xff]
    %v2008 = vld [vmem:[%s1967 + $0x140] sm:$0xff]
    %v2009 = vld [vmem:[%s1967 + $0x148] sm:$0xff]
    %v2010 = vld [vmem:[%s1967 + $0x150] sm:$0xff]
    %v2011 = vld [vmem:[%s1967 + $0x158] sm:$0xff]
    %v2012 = vld [vmem:[%s1967 + $0x160] sm:$0xff]
    %v2013 = vld [vmem:[%s1967 + $0x168] sm:$0xff]
    %v2014 = vld [vmem:[%s1967 + $0x170] sm:$0xff]
    %v2015 = vld [vmem:[%s1967 + $0x178] sm:$0xff]
    %v2016 = vld [vmem:[%s1967 + $0x180] sm:$0xff]
    %v2017 = vld [vmem:[%s1967 + $0x188] sm:$0xff]
    %v2018 = vld [vmem:[%s1967 + $0x190] sm:$0xff]
    %v2019 = vld [vmem:[%s1967 + $0x198] sm:$0xff]
    %v2020 = vld [vmem:[%s1967 + $0x1a0] sm:$0xff]
    %v2021 = vld [vmem:[%s1967 + $0x1a8] sm:$0xff]
    %v2022 = vld [vmem:[%s1967 + $0x1b0] sm:$0xff]
    %v2023 = vld [vmem:[%s1967 + $0x1b8] sm:$0xff]
    %v2024 = vld [vmem:[%s1967 + $0x1c0] sm:$0xff]
    %v2025 = vld [vmem:[%s1967 + $0x1c8] sm:$0xff]
    %v2026 = vld [vmem:[%s1967 + $0x1d0] sm:$0xff]
    %v2027 = vld [vmem:[%s1967 + $0x1d8] sm:$0xff]
    %v2028 = vld [vmem:[%s1967 + $0x1e0] sm:$0xff]
    %v2029 = vld [vmem:[%s1967 + $0x1e8] sm:$0xff]
    %v2030 = vld [vmem:[%s1967 + $0x1f0] sm:$0xff]
    %v2031 = vld [vmem:[%s1967 + $0x1f8] sm:$0xff]
    %s2032 = scalar_lea.vmem [#allocation16], 4
    %v2033 = vld [vmem:[%s2032] sm:$0xf]
    %v2035 = vperm.slane %v2033, 0
    %v2036 = vperm.slane %v2033, 1
    %v2037 = vperm.slane %v2033, 2
    %v2038 = vperm.slane %v2033, 3
    %2043 = vmatpush.msra.mxu0 %v2028
    %2044 = vmatpush.msra.mxu0 %v2024
    %2045 = vmatpush.msra.mxu0 %v2020
    %2046 = vmatpush.msra.mxu0 %v2016
    %2047 = vmatpush.msra.mxu0 %v2012
    %2048 = vmatpush.msra.mxu0 %v2008
    %2049 = vmatpush.msra.mxu0 %v2004
    %2050 = vmatpush.msra.mxu0 %v2000
    %2051 = vmatpush.msra.mxu0 %v1996
    %2052 = vmatpush.msra.mxu0 %v1992
    %2053 = vmatpush.msra.mxu0 %v1988
    %2054 = vmatpush.msra.mxu0 %v1984
    %2055 = vmatpush.msra.mxu0 %v1980
    %2056 = vmatpush.msra.mxu0 %v1976
    %2057 = vmatpush.msra.mxu0 %v1972
    %2058 = vmatpush.msra.mxu0 %v1968
    %2059 = vmatmul.f32.gmra.mxu0 %v1966
    %v2060 = vpop.f32.mrf.mxu0
    %v2061 = vadd.f32 %v2035, %v2060
    %2062 = vdwg.mxu0
    %2063 = vmatpush.msra.mxu0 %v2029
    %2064 = vmatpush.msra.mxu0 %v2025
    %2065 = vmatpush.msra.mxu0 %v2021
    %2066 = vmatpush.msra.mxu0 %v2017
    %2067 = vmatpush.msra.mxu0 %v2013
    %2068 = vmatpush.msra.mxu0 %v2009
    %2069 = vmatpush.msra.mxu0 %v2005
    %2070 = vmatpush.msra.mxu0 %v2001
    %2071 = vmatpush.msra.mxu0 %v1997
    %2072 = vmatpush.msra.mxu0 %v1993
    %2073 = vmatpush.msra.mxu0 %v1989
    %2074 = vmatpush.msra.mxu0 %v1985
    %2075 = vmatpush.msra.mxu0 %v1981
    %2076 = vmatpush.msra.mxu0 %v1977
    %2077 = vmatpush.msra.mxu0 %v1973
    %2078 = vmatpush.msra.mxu0 %v1969
    %2079 = vmatmul.f32.gmra.mxu0 %v1966
    %v2080 = vpop.f32.mrf.mxu0
    %v2081 = vadd.f32 %v2036, %v2080
    %2082 = vdwg.mxu0
    %2083 = vmatpush.msra.mxu0 %v2030
    %2084 = vmatpush.msra.mxu0 %v2026
    %2085 = vmatpush.msra.mxu0 %v2022
    %2086 = vmatpush.msra.mxu0 %v2018
    %2087 = vmatpush.msra.mxu0 %v2014
    %2088 = vmatpush.msra.mxu0 %v2010
    %2089 = vmatpush.msra.mxu0 %v2006
    %2090 = vmatpush.msra.mxu0 %v2002
    %2091 = vmatpush.msra.mxu0 %v1998
    %2092 = vmatpush.msra.mxu0 %v1994
    %2093 = vmatpush.msra.mxu0 %v1990
    %2094 = vmatpush.msra.mxu0 %v1986
    %2095 = vmatpush.msra.mxu0 %v1982
    %2096 = vmatpush.msra.mxu0 %v1978
    %2097 = vmatpush.msra.mxu0 %v1974
    %2098 = vmatpush.msra.mxu0 %v1970
    %2099 = vmatmul.f32.gmra.mxu0 %v1966
    %v2100 = vpop.f32.mrf.mxu0
    %v2101 = vadd.f32 %v2037, %v2100
    %2102 = vdwg.mxu0
    %2103 = vmatpush.msra.mxu0 %v2031
    %2104 = vmatpush.msra.mxu0 %v2027
    %2105 = vmatpush.msra.mxu0 %v2023
    %2106 = vmatpush.msra.mxu0 %v2019
    %2107 = vmatpush.msra.mxu0 %v2015
    %2108 = vmatpush.msra.mxu0 %v2011
    %2109 = vmatpush.msra.mxu0 %v2007
    %2110 = vmatpush.msra.mxu0 %v2003
    %2111 = vmatpush.msra.mxu0 %v1999
    %2112 = vmatpush.msra.mxu0 %v1995
    %2113 = vmatpush.msra.mxu0 %v1991
    %2114 = vmatpush.msra.mxu0 %v1987
    %2115 = vmatpush.msra.mxu0 %v1983
    %2116 = vmatpush.msra.mxu0 %v1979
    %2117 = vmatpush.msra.mxu0 %v1975
    %2118 = vmatpush.msra.mxu0 %v1971
    %2119 = vmatmul.f32.gmra.mxu0 %v1966
    %v2120 = vpop.f32.mrf.mxu0
    %v2121 = vadd.f32 %v2038, %v2120
    %2122 = vdwg.mxu0
    %v2123 = vmul.f32 %v2061, 0.5
    %v2124 = vmul.f32 %v2081, 0.5
    %v2125 = vmul.f32 %v2101, 0.5
    %v2126 = vmul.f32 %v2121, 0.5
    %v2127 = vmul.f32 %v2061, 0.70710677
    %v2128 = vmul.f32 %v2081, 0.70710677
    %v2129 = vmul.f32 %v2101, 0.70710677
    %v2130 = vmul.f32 %v2121, 0.70710677
    %vm2131 = vcmp.ge.f32.partialorder %v2127, 0.0
    %vm2132 = vcmp.ge.f32.partialorder %v2128, 0.0
    %vm2133 = vcmp.ge.f32.partialorder %v2129, 0.0
    %vm2134 = vcmp.ge.f32.partialorder %v2130, 0.0
    %v2135 = vsel %vm2131, 1.0, -1.0
    %v2136 = vsel %vm2132, 1.0, -1.0
    %v2137 = vsel %vm2133, 1.0, -1.0
    %v2138 = vsel %vm2134, 1.0, -1.0
    %v2139 = vand.u32 2147483647, %v2127
    %v2140 = vand.u32 2147483647, %v2128
    %v2141 = vand.u32 2147483647, %v2129
    %v2142 = vand.u32 2147483647, %v2130
    %v2143 = vmul.f32 %v2139, 0.3275911
    %v2144 = vmul.f32 %v2140, 0.3275911
    %v2145 = vmul.f32 %v2141, 0.3275911
    %v2146 = vmul.f32 %v2142, 0.3275911
    %v2147 = vadd.f32 %v2143, 1.0
    %v2148 = vadd.f32 %v2144, 1.0
    %v2149 = vadd.f32 %v2145, 1.0
    %v2150 = vadd.f32 %v2146, 1.0
    %v2151 = vrcp.pop %v2147
    %v2152 = vmul.f32 %v2147, %v2151
    %v2153 = vsub.f32 1.0, %v2152
    %v2154 = vmul.f32 %v2151, %v2153
    %v2155 = vadd.f32 %v2151, %v2154
    %vm2156 = vweird.f32 %v2147
    %vm2157 = vweird.f32 %v2151
    %vm2158 = vmor %vm2156, %vm2157
    %v2159 = vsel %vm2158, %v2151, %v2155
    %v2160 = vand.u32 2147483647, %v2147
    %vm2161 = vcmp.eq.f32.partialorder %v2160, 8.507059e+37
    %v2162 = vand.u32 %v2147, 2147483648
    %v2163 = vor.u32 1.1754944e-38, %v2162
    %v2164 = vsel %vm2161, %v2163, %v2159
    %v2165 = vmul.f32 1.0, %v2164
    %v2166 = vrcp.pop %v2148
    %v2167 = vmul.f32 %v2148, %v2166
    %v2168 = vsub.f32 1.0, %v2167
    %v2169 = vmul.f32 %v2166, %v2168
    %v2170 = vadd.f32 %v2166, %v2169
    %vm2171 = vweird.f32 %v2148
    %vm2172 = vweird.f32 %v2166
    %vm2173 = vmor %vm2171, %vm2172
    %v2174 = vsel %vm2173, %v2166, %v2170
    %v2175 = vand.u32 2147483647, %v2148
    %vm2176 = vcmp.eq.f32.partialorder %v2175, 8.507059e+37
    %v2177 = vand.u32 %v2148, 2147483648
    %v2178 = vor.u32 1.1754944e-38, %v2177
    %v2179 = vsel %vm2176, %v2178, %v2174
    %v2180 = vmul.f32 1.0, %v2179
    %v2181 = vrcp.pop %v2149
    %v2182 = vmul.f32 %v2149, %v2181
    %v2183 = vsub.f32 1.0, %v2182
    %v2184 = vmul.f32 %v2181, %v2183
    %v2185 = vadd.f32 %v2181, %v2184
    %vm2186 = vweird.f32 %v2149
    %vm2187 = vweird.f32 %v2181
    %vm2188 = vmor %vm2186, %vm2187
    %v2189 = vsel %vm2188, %v2181, %v2185
    %v2190 = vand.u32 2147483647, %v2149
    %vm2191 = vcmp.eq.f32.partialorder %v2190, 8.507059e+37
    %v2192 = vand.u32 %v2149, 2147483648
    %v2193 = vor.u32 1.1754944e-38, %v2192
    %v2194 = vsel %vm2191, %v2193, %v2189
    %v2195 = vmul.f32 1.0, %v2194
    %v2196 = vrcp.pop %v2150
    %v2197 = vmul.f32 %v2150, %v2196
    %v2198 = vsub.f32 1.0, %v2197
    %v2199 = vmul.f32 %v2196, %v2198
    %v2200 = vadd.f32 %v2196, %v2199
    %vm2201 = vweird.f32 %v2150
    %vm2202 = vweird.f32 %v2196
    %vm2203 = vmor %vm2201, %vm2202
    %v2204 = vsel %vm2203, %v2196, %v2200
    %v2205 = vand.u32 2147483647, %v2150
    %vm2206 = vcmp.eq.f32.partialorder %v2205, 8.507059e+37
    %v2207 = vand.u32 %v2150, 2147483648
    %v2208 = vor.u32 1.1754944e-38, %v2207
    %v2209 = vsel %vm2206, %v2208, %v2204
    %v2210 = vmul.f32 1.0, %v2209
    %v2211 = vmul.f32 %v2165, 1.0614054
    %v2212 = vmul.f32 %v2180, 1.0614054
    %v2213 = vmul.f32 %v2195, 1.0614054
    %v2214 = vmul.f32 %v2210, 1.0614054
    %v2215 = vadd.f32 %v2211, -1.4531521
    %v2216 = vadd.f32 %v2212, -1.4531521
    %v2217 = vadd.f32 %v2213, -1.4531521
    %v2218 = vadd.f32 %v2214, -1.4531521
    %v2219 = vmul.f32 %v2215, %v2165
    %v2220 = vmul.f32 %v2216, %v2180
    %v2221 = vmul.f32 %v2217, %v2195
    %v2222 = vmul.f32 %v2218, %v2210
    %v2223 = vadd.f32 %v2219, 1.4214138
    %v2224 = vadd.f32 %v2220, 1.4214138
    %v2225 = vadd.f32 %v2221, 1.4214138
    %v2226 = vadd.f32 %v2222, 1.4214138
    %v2227 = vmul.f32 %v2223, %v2165
    %v2228 = vmul.f32 %v2224, %v2180
    %v2229 = vmul.f32 %v2225, %v2195
    %v2230 = vmul.f32 %v2226, %v2210
    %v2231 = vadd.f32 %v2227, -0.28449672
    %v2232 = vadd.f32 %v2228, -0.28449672
    %v2233 = vadd.f32 %v2229, -0.28449672
    %v2234 = vadd.f32 %v2230, -0.28449672
    %v2235 = vmul.f32 %v2231, %v2165
    %v2236 = vmul.f32 %v2232, %v2180
    %v2237 = vmul.f32 %v2233, %v2195
    %v2238 = vmul.f32 %v2234, %v2210
    %v2239 = vadd.f32 %v2235, 0.2548296
    %v2240 = vadd.f32 %v2236, 0.2548296
    %v2241 = vadd.f32 %v2237, 0.2548296
    %v2242 = vadd.f32 %v2238, 0.2548296
    %v2243 = vmul.f32 %v2239, %v2165
    %v2244 = vmul.f32 %v2240, %v2180
    %v2245 = vmul.f32 %v2241, %v2195
    %v2246 = vmul.f32 %v2242, %v2210
    %v2247 = vsub.f32 0.0, %v2139
    %v2248 = vsub.f32 0.0, %v2140
    %v2249 = vsub.f32 0.0, %v2141
    %v2250 = vsub.f32 0.0, %v2142
    %v2251 = vmul.f32 %v2247, %v2139
    %v2252 = vmul.f32 %v2248, %v2140
    %v2253 = vmul.f32 %v2249, %v2141
    %v2254 = vmul.f32 %v2250, %v2142
    %v2255 = vmul.f32 %v2251, 1.442695
    %v2256 = vpow.pop %v2255
    %v2257 = vmul.f32 %v2252, 1.442695
    %v2258 = vpow.pop %v2257
    %v2259 = vmul.f32 %v2253, 1.442695
    %v2260 = vpow.pop %v2259
    %v2261 = vmul.f32 %v2254, 1.442695
    %v2262 = vpow.pop %v2261
    %v2263 = vmul.f32 %v2243, %v2256
    %v2264 = vmul.f32 %v2244, %v2258
    %v2265 = vmul.f32 %v2245, %v2260
    %v2266 = vmul.f32 %v2246, %v2262
    %v2267 = vsub.f32 1.0, %v2263
    %v2268 = vsub.f32 1.0, %v2264
    %v2269 = vsub.f32 1.0, %v2265
    %v2270 = vsub.f32 1.0, %v2266
    %v2271 = vmul.f32 %v2135, %v2267
    %v2272 = vmul.f32 %v2136, %v2268
    %v2273 = vmul.f32 %v2137, %v2269
    %v2274 = vmul.f32 %v2138, %v2270
    %v2275 = vadd.f32 %v2271, 1.0
    %v2276 = vadd.f32 %v2272, 1.0
    %v2277 = vadd.f32 %v2273, 1.0
    %v2278 = vadd.f32 %v2274, 1.0
    %v2279 = vmul.f32 %v2123, %v2275
    %v2280 = vmul.f32 %v2124, %v2276
    %v2281 = vmul.f32 %v2125, %v2277
    %v2282 = vmul.f32 %v2126, %v2278
    %s2283 = scalar_lea.vmem [#allocation18], 512
    %v2284 = vld [vmem:[%s2283] sm:$0xff]
    %v2285 = vld [vmem:[%s2283 + $0x8] sm:$0xff]
    %v2286 = vld [vmem:[%s2283 + $0x10] sm:$0xff]
    %v2287 = vld [vmem:[%s2283 + $0x18] sm:$0xff]
    %v2288 = vld [vmem:[%s2283 + $0x20] sm:$0xff]
    %v2289 = vld [vmem:[%s2283 + $0x28] sm:$0xff]
    %v2290 = vld [vmem:[%s2283 + $0x30] sm:$0xff]
    %v2291 = vld [vmem:[%s2283 + $0x38] sm:$0xff]
    %v2292 = vld [vmem:[%s2283 + $0x40] sm:$0xff]
    %v2293 = vld [vmem:[%s2283 + $0x48] sm:$0xff]
    %v2294 = vld [vmem:[%s2283 + $0x50] sm:$0xff]
    %v2295 = vld [vmem:[%s2283 + $0x58] sm:$0xff]
    %v2296 = vld [vmem:[%s2283 + $0x60] sm:$0xff]
    %v2297 = vld [vmem:[%s2283 + $0x68] sm:$0xff]
    %v2298 = vld [vmem:[%s2283 + $0x70] sm:$0xff]
    %v2299 = vld [vmem:[%s2283 + $0x78] sm:$0xff]
    %v2300 = vld [vmem:[%s2283 + $0x80] sm:$0xff]
    %v2301 = vld [vmem:[%s2283 + $0x88] sm:$0xff]
    %v2302 = vld [vmem:[%s2283 + $0x90] sm:$0xff]
    %v2303 = vld [vmem:[%s2283 + $0x98] sm:$0xff]
    %v2304 = vld [vmem:[%s2283 + $0xa0] sm:$0xff]
    %v2305 = vld [vmem:[%s2283 + $0xa8] sm:$0xff]
    %v2306 = vld [vmem:[%s2283 + $0xb0] sm:$0xff]
    %v2307 = vld [vmem:[%s2283 + $0xb8] sm:$0xff]
    %v2308 = vld [vmem:[%s2283 + $0xc0] sm:$0xff]
    %v2309 = vld [vmem:[%s2283 + $0xc8] sm:$0xff]
    %v2310 = vld [vmem:[%s2283 + $0xd0] sm:$0xff]
    %v2311 = vld [vmem:[%s2283 + $0xd8] sm:$0xff]
    %v2312 = vld [vmem:[%s2283 + $0xe0] sm:$0xff]
    %v2313 = vld [vmem:[%s2283 + $0xe8] sm:$0xff]
    %v2314 = vld [vmem:[%s2283 + $0xf0] sm:$0xff]
    %v2315 = vld [vmem:[%s2283 + $0xf8] sm:$0xff]
    %v2316 = vld [vmem:[%s2283 + $0x100] sm:$0xff]
    %v2317 = vld [vmem:[%s2283 + $0x108] sm:$0xff]
    %v2318 = vld [vmem:[%s2283 + $0x110] sm:$0xff]
    %v2319 = vld [vmem:[%s2283 + $0x118] sm:$0xff]
    %v2320 = vld [vmem:[%s2283 + $0x120] sm:$0xff]
    %v2321 = vld [vmem:[%s2283 + $0x128] sm:$0xff]
    %v2322 = vld [vmem:[%s2283 + $0x130] sm:$0xff]
    %v2323 = vld [vmem:[%s2283 + $0x138] sm:$0xff]
    %v2324 = vld [vmem:[%s2283 + $0x140] sm:$0xff]
    %v2325 = vld [vmem:[%s2283 + $0x148] sm:$0xff]
    %v2326 = vld [vmem:[%s2283 + $0x150] sm:$0xff]
    %v2327 = vld [vmem:[%s2283 + $0x158] sm:$0xff]
    %v2328 = vld [vmem:[%s2283 + $0x160] sm:$0xff]
    %v2329 = vld [vmem:[%s2283 + $0x168] sm:$0xff]
    %v2330 = vld [vmem:[%s2283 + $0x170] sm:$0xff]
    %v2331 = vld [vmem:[%s2283 + $0x178] sm:$0xff]
    %v2332 = vld [vmem:[%s2283 + $0x180] sm:$0xff]
    %v2333 = vld [vmem:[%s2283 + $0x188] sm:$0xff]
    %v2334 = vld [vmem:[%s2283 + $0x190] sm:$0xff]
    %v2335 = vld [vmem:[%s2283 + $0x198] sm:$0xff]
    %v2336 = vld [vmem:[%s2283 + $0x1a0] sm:$0xff]
    %v2337 = vld [vmem:[%s2283 + $0x1a8] sm:$0xff]
    %v2338 = vld [vmem:[%s2283 + $0x1b0] sm:$0xff]
    %v2339 = vld [vmem:[%s2283 + $0x1b8] sm:$0xff]
    %v2340 = vld [vmem:[%s2283 + $0x1c0] sm:$0xff]
    %v2341 = vld [vmem:[%s2283 + $0x1c8] sm:$0xff]
    %v2342 = vld [vmem:[%s2283 + $0x1d0] sm:$0xff]
    %v2343 = vld [vmem:[%s2283 + $0x1d8] sm:$0xff]
    %v2344 = vld [vmem:[%s2283 + $0x1e0] sm:$0xff]
    %v2345 = vld [vmem:[%s2283 + $0x1e8] sm:$0xff]
    %v2346 = vld [vmem:[%s2283 + $0x1f0] sm:$0xff]
    %v2347 = vld [vmem:[%s2283 + $0x1f8] sm:$0xff]
    %2348 = vmatpush.msra.mxu0 %v2299
    %2349 = vmatpush.msra.mxu0 %v2298
    %2350 = vmatpush.msra.mxu0 %v2297
    %2351 = vmatpush.msra.mxu0 %v2296
    %2352 = vmatpush.msra.mxu0 %v2295
    %2353 = vmatpush.msra.mxu0 %v2294
    %2354 = vmatpush.msra.mxu0 %v2293
    %2355 = vmatpush.msra.mxu0 %v2292
    %2356 = vmatpush.msra.mxu0 %v2291
    %2357 = vmatpush.msra.mxu0 %v2290
    %2358 = vmatpush.msra.mxu0 %v2289
    %2359 = vmatpush.msra.mxu0 %v2288
    %2360 = vmatpush.msra.mxu0 %v2287
    %2361 = vmatpush.msra.mxu0 %v2286
    %2362 = vmatpush.msra.mxu0 %v2285
    %2363 = vmatpush.msra.mxu0 %v2284
    %2364 = vmatmul.f32.gmra.mxu0 %v2279
    %v2365 = vpop.f32.mrf.mxu0
    %v2366 = vadd.f32 0.0, %v2365
    %2367 = vdwg.mxu0
    %2368 = vmatpush.msra.mxu0 %v2315
    %2369 = vmatpush.msra.mxu0 %v2314
    %2370 = vmatpush.msra.mxu0 %v2313
    %2371 = vmatpush.msra.mxu0 %v2312
    %2372 = vmatpush.msra.mxu0 %v2311
    %2373 = vmatpush.msra.mxu0 %v2310
    %2374 = vmatpush.msra.mxu0 %v2309
    %2375 = vmatpush.msra.mxu0 %v2308
    %2376 = vmatpush.msra.mxu0 %v2307
    %2377 = vmatpush.msra.mxu0 %v2306
    %2378 = vmatpush.msra.mxu0 %v2305
    %2379 = vmatpush.msra.mxu0 %v2304
    %2380 = vmatpush.msra.mxu0 %v2303
    %2381 = vmatpush.msra.mxu0 %v2302
    %2382 = vmatpush.msra.mxu0 %v2301
    %2383 = vmatpush.msra.mxu0 %v2300
    %2384 = vmatmul.f32.gmra.mxu0 %v2280
    %v2385 = vpop.f32.mrf.mxu0
    %v2386 = vadd.f32 %v2366, %v2385
    %2387 = vdwg.mxu0
    %2388 = vmatpush.msra.mxu0 %v2331
    %2389 = vmatpush.msra.mxu0 %v2330
    %2390 = vmatpush.msra.mxu0 %v2329
    %2391 = vmatpush.msra.mxu0 %v2328
    %2392 = vmatpush.msra.mxu0 %v2327
    %2393 = vmatpush.msra.mxu0 %v2326
    %2394 = vmatpush.msra.mxu0 %v2325
    %2395 = vmatpush.msra.mxu0 %v2324
    %2396 = vmatpush.msra.mxu0 %v2323
    %2397 = vmatpush.msra.mxu0 %v2322
    %2398 = vmatpush.msra.mxu0 %v2321
    %2399 = vmatpush.msra.mxu0 %v2320
    %2400 = vmatpush.msra.mxu0 %v2319
    %2401 = vmatpush.msra.mxu0 %v2318
    %2402 = vmatpush.msra.mxu0 %v2317
    %2403 = vmatpush.msra.mxu0 %v2316
    %2404 = vmatmul.f32.gmra.mxu0 %v2281
    %v2405 = vpop.f32.mrf.mxu0
    %v2406 = vadd.f32 %v2386, %v2405
    %2407 = vdwg.mxu0
    %2408 = vmatpush.msra.mxu0 %v2347
    %2409 = vmatpush.msra.mxu0 %v2346
    %2410 = vmatpush.msra.mxu0 %v2345
    %2411 = vmatpush.msra.mxu0 %v2344
    %2412 = vmatpush.msra.mxu0 %v2343
    %2413 = vmatpush.msra.mxu0 %v2342
    %2414 = vmatpush.msra.mxu0 %v2341
    %2415 = vmatpush.msra.mxu0 %v2340
    %2416 = vmatpush.msra.mxu0 %v2339
    %2417 = vmatpush.msra.mxu0 %v2338
    %2418 = vmatpush.msra.mxu0 %v2337
    %2419 = vmatpush.msra.mxu0 %v2336
    %2420 = vmatpush.msra.mxu0 %v2335
    %2421 = vmatpush.msra.mxu0 %v2334
    %2422 = vmatpush.msra.mxu0 %v2333
    %2423 = vmatpush.msra.mxu0 %v2332
    %2424 = vmatmul.f32.gmra.mxu0 %v2282
    %v2425 = vpop.f32.mrf.mxu0
    %v2426 = vadd.f32 %v2406, %v2425
    %2427 = vdwg.mxu0
    %v2428 = vadd.f32 %v1930, %v2426
    %s2429 = scalar_lea.vmem [#allocation19], 1
    %v2430 = vld [vmem:[%s2429] sm:$0x1]
    %v2432 = vperm.slane %v2430, 0
    %v2434 = vadd.f32 %v2428, %v2432
    %2435 = vst [vmem:[%s18] sm:$0xf] %v2434
    // Predicated region
    $region122: #{modality_specific_encoder.1} parent=1 // pred_check
      _
    $region123: #{modality_specific_encoder.1} parent=1 // pred_check_branch
      %2437 = sbr.rel (0) target = $region125
    $region124: #{modality_specific_encoder.1} parent=1 // pred_region
      _
    $region125: #{modality_specific_encoder.1} parent=1 // pred_fallthru
      _
    // Predicated region
    $region126: #{modality_specific_encoder.1} parent=1 // pred_check
      _
    $region127: #{modality_specific_encoder.1} parent=1 // pred_check_branch
      %2439 = sbr.rel (0) target = $region129
    $region128: #{modality_specific_encoder.1} parent=1 // pred_region
      _
    $region129: #{modality_specific_encoder.1} parent=1 // pred_fallthru
      _
    %2440 = vsyncpa [#allocation3], 1
    %2441 = vsyncpa [#allocation5], 1
    %2442 = vsyncpa [#allocation8], 1
    %2443 = vsyncpa [#allocation11], 1
    %2444 = vsyncpa [#allocation14], 1
    %2445 = vsyncpa [#allocation17], 1
    %2446 = vsyncpa [#allocation20], 1

</llo_original>
